<compile_context>
chip_gen: v7x
topology: tpu7x:2x2x1
jax: 0.10.0
libtpu: 0.0.40
codegen_flags: <defaults>
</compile_context>

<pallas_src>
import math
from functools import partial

import jax
import jax.numpy as jnp
from jax.experimental import pallas as pl
from jax.experimental.pallas import tpu as pltpu


# ----------------------------- helpers ------------------------------------

def _layernorm(x, w, b, eps):
    mu = jnp.mean(x, axis=-1, keepdims=True)
    var = jnp.mean(jnp.square(x - mu), axis=-1, keepdims=True)
    return (x - mu) * jax.lax.rsqrt(var + eps) * w + b


def make_pe(d_model, max_len):
    # matches the PyTorch PositionalEncoding buffer construction
    position = jnp.arange(max_len, dtype=jnp.float32)[:, None]
    div_term = jnp.exp(jnp.arange(0, d_model, 2, dtype=jnp.float32)
                       * (-math.log(10000.0) / d_model))
    pe = jnp.zeros((max_len, 1, d_model), jnp.float32)
    pe = pe.at[:, 0, 0::2].set(jnp.sin(position * div_term))
    pe = pe.at[:, 0, 1::2].set(jnp.cos(position * div_term))
    return pe


# --------------------------- fused Pallas kernel ----------------------------

def fused_bbt_kernel(x_ref, cw_ref, cb_ref, cls_ref, pe_ref,
                     wqkv_ref, bqkv_ref, wo_ref, bo_ref,
                     ln1w_ref, ln1b_ref, ln2w_ref, ln2b_ref,
                     w1_ref, b1_ref, w2_ref, b2_ref,
                     nw_ref, nb_ref, hw_ref, hb_ref,
                     out_ref, seq_ref,
                     *, batch_block, n_boxes, n_head, head_dim, ln_eps):
    BB, N, H, hd = batch_block, n_boxes, n_head, head_dim
    S = N + 1
    D = H * hd
    l = pl.program_id(1)                      # layer index (grid axis 1)

    # --- first layer step: embed boxes, prepend cls, add positional bias ----
    @pl.when(l == 0)
    def _embed():
        for b in range(BB):                   # static; only runs at l == 0
            # Conv2d(kernel=img, stride=img) over an img x img box == one dot
            # over the flattened (C,H,W) axis.
            emb_b = (jnp.dot(x_ref[b], cw_ref[...],
                             preferred_element_type=jnp.float32)
                     + cb_ref[...])                               # [N, D]
            pe_b = pe_ref[b]                                      # [1, D]
            # PyTorch quirk preserved: pe[:batch] broadcasts over the sequence,
            # i.e. every token of image b gets the encoding of *batch index* b.
            seq_ref[b * S:b * S + 1, :] = cls_ref[0] + pe_b
            seq_ref[b * S + 1:(b + 1) * S, :] = emb_b + pe_b

    # --- encoder layer `l` (post-norm, ReLU FFN), all rows batched ----------
    x = seq_ref[...]                                              # [BB*S, D] f32
    qkv = (jnp.dot(x.astype(jnp.bfloat16), wqkv_ref[0],
                   preferred_element_type=jnp.float32)
           + bqkv_ref[0])                                         # [BB*S, 3D] f32

    scale = 1.0 / math.sqrt(hd)
    head_ctx = []
    for h in range(H):          # static unroll; each contraction batched over BB
        qh = qkv[:, h * hd:(h + 1) * hd].reshape(BB, S, hd)
        kh = qkv[:, D + h * hd:D + (h + 1) * hd].reshape(BB, S, hd)
        vh = qkv[:, 2 * D + h * hd:2 * D + (h + 1) * hd].reshape(BB, S, hd)
        s = jnp.einsum('bqd,bkd->bqk', qh, kh,
                       preferred_element_type=jnp.float32) * scale
        s = s - jnp.max(s, axis=-1, keepdims=True)
        p = jnp.exp(s)
        p = p * pl.reciprocal(jnp.sum(p, axis=-1, keepdims=True), approx=True)
        ctx = jnp.einsum('bqk,bkd->bqd', p, vh,
                         preferred_element_type=jnp.float32)
        head_ctx.append(ctx.reshape(BB * S, hd))
    attn = jnp.concatenate(head_ctx, axis=-1).astype(jnp.bfloat16)  # [BB*S, D]

    attn = (jnp.dot(attn, wo_ref[0], preferred_element_type=jnp.float32)
            + bo_ref[0])

    x = _layernorm(x + attn, ln1w_ref[0], ln1b_ref[0], ln_eps)

    h1 = jnp.maximum(jnp.dot(x.astype(jnp.bfloat16), w1_ref[0],
                             preferred_element_type=jnp.float32) + b1_ref[0], 0.0)
    h2 = jnp.dot(h1.astype(jnp.bfloat16), w2_ref[0],
                 preferred_element_type=jnp.float32) + b2_ref[0]

    x = _layernorm(x + h2, ln2w_ref[0], ln2b_ref[0], ln_eps)
    seq_ref[...] = x

    # --- last layer step: final LayerNorm(1e-6) + classifier on cls tokens --
    @pl.when(l == pl.num_programs(1) - 1)
    def _head():
        for b in range(BB):                   # static; one cls row per image
            cls_b = x[b * S:b * S + 1, :]                         # [1, D]
            y = _layernorm(cls_b, nw_ref[...], nb_ref[...], 1e-6)
            out_ref[b] = (jnp.dot(y.astype(jnp.bfloat16), hw_ref[...],
                                  preferred_element_type=jnp.float32)
                          + hb_ref[...]).astype(out_ref.dtype)    # [1, Cp] lane-dense


# ------------------------- params & full forward ----------------------------

def init_params(key, img_size, d_embed, n_head, n_layers, n_classes, dim_ff=2048):
    # Deterministic synthetic init. Matmul weights are created directly in the
    # layout the kernel consumes (transposed relative to PyTorch storage).
    del n_head
    keys = jax.random.split(key, 4 + n_layers)
    s = 0.02
    params = {
        'conv_w': s * jax.random.normal(keys[0], (d_embed, 3, img_size, img_size), jnp.float32),
        'conv_b': s * jax.random.normal(keys[1], (d_embed,), jnp.float32),
        'cls_token': jnp.zeros((1, 1, d_embed), jnp.float32),   # nn.Parameter(zeros)
        'norm_w': jnp.ones((d_embed,), jnp.float32),
        'norm_b': jnp.zeros((d_embed,), jnp.float32),
        'head_w': s * jax.random.normal(keys[2], (d_embed, n_classes), jnp.float32),
        'head_b': s * jax.random.normal(keys[3], (n_classes,), jnp.float32),
        'layers': [],
    }
    for l in range(n_layers):
        k = jax.random.split(keys[4 + l], 8)
        params['layers'].append(dict(
            wqkv=s * jax.random.normal(k[0], (d_embed, 3 * d_embed), jnp.float32),
            bqkv=s * jax.random.normal(k[1], (1, 3 * d_embed), jnp.float32),
            wo=s * jax.random.normal(k[2], (d_embed, d_embed), jnp.float32),
            bo=s * jax.random.normal(k[3], (1, d_embed), jnp.float32),
            ln1w=jnp.ones((1, d_embed), jnp.float32),
            ln1b=jnp.zeros((1, d_embed), jnp.float32),
            ln2w=jnp.ones((1, d_embed), jnp.float32),
            ln2b=jnp.zeros((1, d_embed), jnp.float32),
            w1=s * jax.random.normal(k[4], (d_embed, dim_ff), jnp.float32),
            b1=s * jax.random.normal(k[5], (1, dim_ff), jnp.float32),
            w2=s * jax.random.normal(k[6], (dim_ff, d_embed), jnp.float32),
            b2=s * jax.random.normal(k[7], (1, d_embed), jnp.float32),
        ))
    return params


def bb_transformer_forward(params, x, n_head, *, n_batch_blocks=None):
    # x: [B, N, 3, H, W]
    B, N, C, Hh, Ww = x.shape
    D = params['conv_w'].shape[0]
    S = N + 1
    L = len(params['layers'])
    n_classes = params['head_w'].shape[1]
    head_dim = D // n_head
    assert head_dim * n_head == D
    assert B <= D, "PositionalEncoding(max_len=d_embed) requires batch <= d_embed"

    if n_batch_blocks is None:
        # >=2 batch blocks feed both v7x TensorCores; harmless on v5e/v6e.
        n_batch_blocks = 2 if (B % 2 == 0) else 1
    assert B % n_batch_blocks == 0
    BB = B // n_batch_blocks

    chw = C * Hh * Ww
    x3 = x.reshape(B, N, chw).astype(jnp.bfloat16)
    cw = params['conv_w'].reshape(D, chw).T.astype(jnp.bfloat16)       # [CHW, D]
    cb = params['conv_b'].reshape(1, D).astype(jnp.float32)
    cls = params['cls_token'].reshape(1, 1, D).astype(jnp.float32)

    # PositionalEncoding exactly as the reference: pe[:B] (shape [B,1,D]) is
    # added, broadcasting over the sequence dim (per-batch-index encoding).
    pe = make_pe(D, max_len=D)[:B].astype(jnp.float32)                 # [B, 1, D]

    def stack(name, dtype):
        return jnp.stack([lp[name] for lp in params['layers']]).astype(dtype)

    wqkv = stack('wqkv', jnp.bfloat16); bqkv = stack('bqkv', jnp.float32)
    wo = stack('wo', jnp.bfloat16);     bo = stack('bo', jnp.float32)
    ln1w = stack('ln1w', jnp.float32);  ln1b = stack('ln1b', jnp.float32)
    ln2w = stack('ln2w', jnp.float32);  ln2b = stack('ln2b', jnp.float32)
    w1 = stack('w1', jnp.bfloat16);     b1 = stack('b1', jnp.float32)
    w2 = stack('w2', jnp.bfloat16);     b2 = stack('b2', jnp.float32)

    nw = params['norm_w'].reshape(1, D).astype(jnp.float32)
    nb = params['norm_b'].reshape(1, D).astype(jnp.float32)

    # Lane-dense classifier: pad the output width to a multiple of 128 lanes.
    Cp = max(128, ((n_classes + 127) // 128) * 128)
    hw = (jnp.zeros((D, Cp), jnp.float32)
          .at[:, :n_classes].set(params['head_w']).astype(jnp.bfloat16))
    hb = jnp.zeros((1, Cp), jnp.float32).at[:, :n_classes].set(
        params['head_b'].reshape(1, n_classes))

    kernel = partial(fused_bbt_kernel, batch_block=BB, n_boxes=N,
                     n_head=n_head, head_dim=head_dim, ln_eps=1e-5)

    def per_layer(a):
        return pl.BlockSpec((1,) + a.shape[1:],
                            lambda bb, l: (l,) + (0,) * (a.ndim - 1))

    def const(a):
        return pl.BlockSpec(a.shape, lambda bb, l: (0,) * a.ndim)

    in_specs = [
        pl.BlockSpec((BB, N, chw), lambda bb, l: (bb, 0, 0)),          # boxes
        const(cw), const(cb), const(cls),
        pl.BlockSpec((BB, 1, D), lambda bb, l: (bb, 0, 0)),            # pos. bias
        per_layer(wqkv), per_layer(bqkv), per_layer(wo), per_layer(bo),
        per_layer(ln1w), per_layer(ln1b), per_layer(ln2w), per_layer(ln2b),
        per_layer(w1), per_layer(b1), per_layer(w2), per_layer(b2),
        const(nw), const(nb), const(hw), const(hb),
    ]

    out = pl.pallas_call(
        kernel,
        grid=(n_batch_blocks, L),
        in_specs=in_specs,
        out_specs=pl.BlockSpec((BB, 1, Cp), lambda bb, l: (bb, 0, 0)),
        out_shape=jax.ShapeDtypeStruct((B, 1, Cp), jnp.float32),
        scratch_shapes=[pltpu.VMEM((BB * S, D), jnp.float32)],
        compiler_params=pltpu.CompilerParams(
            dimension_semantics=("parallel", "arbitrary"),
            vmem_limit_bytes=32 * 1024 * 1024),
    )(x3, cw, cb, cls, pe,
      wqkv, bqkv, wo, bo, ln1w, ln1b, ln2w, ln2b, w1, b1, w2, b2,
      nw, nb, hw, hb)

    return out[:, 0, :n_classes]                                        # [B, n_classes]


if __name__ == "__main__":
    img_size, d_embed, n_head, n_layers, n_classes = 8, 32, 4, 2, 5
    B, N = 2, 7                                      # 2 images, 7 boxes each (S = 8)

    key = jax.random.PRNGKey(0)
    kx, kp = jax.random.split(key)
    x = jax.random.normal(kx, (B, N, 3, img_size, img_size), jnp.float32)
    params = init_params(kp, img_size, d_embed, n_head, n_layers, n_classes)

    fwd = jax.jit(partial(bb_transformer_forward, n_head=n_head))
    out = fwd(params, x)
    out = jax.block_until_ready(out)
    assert out.shape == (B, n_classes) and out.dtype == jnp.float32
    print("KERNEL_OK")
</pallas_src>

<mosaic_0001>
module attributes {stable_mosaic.version = 11 : i64} {
  func.func @fused_bbt_kernel(%arg0: i32, %arg1: i32, %arg2: memref<1x7x192xbf16, #tpu.memory_space<vmem>>, %arg3: memref<192x32xbf16, #tpu.memory_space<vmem>>, %arg4: memref<1x32xf32, #tpu.memory_space<vmem>>, %arg5: memref<1x1x32xf32, #tpu.memory_space<vmem>>, %arg6: memref<1x1x32xf32, #tpu.memory_space<vmem>>, %arg7: memref<1x32x96xbf16, #tpu.memory_space<vmem>>, %arg8: memref<1x1x96xf32, #tpu.memory_space<vmem>>, %arg9: memref<1x32x32xbf16, #tpu.memory_space<vmem>>, %arg10: memref<1x1x32xf32, #tpu.memory_space<vmem>>, %arg11: memref<1x1x32xf32, #tpu.memory_space<vmem>>, %arg12: memref<1x1x32xf32, #tpu.memory_space<vmem>>, %arg13: memref<1x1x32xf32, #tpu.memory_space<vmem>>, %arg14: memref<1x1x32xf32, #tpu.memory_space<vmem>>, %arg15: memref<1x32x2048xbf16, #tpu.memory_space<vmem>>, %arg16: memref<1x1x2048xf32, #tpu.memory_space<vmem>>, %arg17: memref<1x2048x32xbf16, #tpu.memory_space<vmem>>, %arg18: memref<1x1x32xf32, #tpu.memory_space<vmem>>, %arg19: memref<1x32xf32, #tpu.memory_space<vmem>>, %arg20: memref<1x32xf32, #tpu.memory_space<vmem>>, %arg21: memref<32x128xbf16, #tpu.memory_space<vmem>>, %arg22: memref<1x128xf32, #tpu.memory_space<vmem>>, %arg23: memref<1x1x128xf32, #tpu.memory_space<vmem>>, %arg24: memref<8x32xf32, #tpu.memory_space<vmem>>) attributes {dimension_semantics = [#tpu.dimension_semantics<parallel>, #tpu.dimension_semantics<arbitrary>], iteration_bounds = array<i64: 2, 2>, scalar_prefetch = 0 : i64, scratch_operands = 1 : i64, tpu.core_type = #tpu.core_type<tc>, window_params = [{transform_indices = @transform_0, window_bounds = array<i64: 1, 7, 192>}, {pipeline_mode = #tpu.pipeline_mode<synchronous>, transform_indices = @transform_1, window_bounds = array<i64: 192, 32>}, {pipeline_mode = #tpu.pipeline_mode<synchronous>, transform_indices = @transform_2, window_bounds = array<i64: 1, 32>}, {pipeline_mode = #tpu.pipeline_mode<synchronous>, transform_indices = @transform_3, window_bounds = array<i64: 1, 1, 32>}, {transform_indices = @transform_4, window_bounds = array<i64: 1, 1, 32>}, {transform_indices = @transform_5, window_bounds = array<i64: 1, 32, 96>}, {transform_indices = @transform_6, window_bounds = array<i64: 1, 1, 96>}, {transform_indices = @transform_7, window_bounds = array<i64: 1, 32, 32>}, {transform_indices = @transform_8, window_bounds = array<i64: 1, 1, 32>}, {transform_indices = @transform_9, window_bounds = array<i64: 1, 1, 32>}, {transform_indices = @transform_10, window_bounds = array<i64: 1, 1, 32>}, {transform_indices = @transform_11, window_bounds = array<i64: 1, 1, 32>}, {transform_indices = @transform_12, window_bounds = array<i64: 1, 1, 32>}, {transform_indices = @transform_13, window_bounds = array<i64: 1, 32, 2048>}, {transform_indices = @transform_14, window_bounds = array<i64: 1, 1, 2048>}, {transform_indices = @transform_15, window_bounds = array<i64: 1, 2048, 32>}, {transform_indices = @transform_16, window_bounds = array<i64: 1, 1, 32>}, {pipeline_mode = #tpu.pipeline_mode<synchronous>, transform_indices = @transform_17, window_bounds = array<i64: 1, 32>}, {pipeline_mode = #tpu.pipeline_mode<synchronous>, transform_indices = @transform_18, window_bounds = array<i64: 1, 32>}, {pipeline_mode = #tpu.pipeline_mode<synchronous>, transform_indices = @transform_19, window_bounds = array<i64: 32, 128>}, {pipeline_mode = #tpu.pipeline_mode<synchronous>, transform_indices = @transform_20, window_bounds = array<i64: 1, 128>}, {transform_indices = @transform_21, window_bounds = array<i64: 1, 1, 128>}]} {
    %c0_i32 = arith.constant 0 : i32
    %0 = arith.cmpi eq, %arg1, %c0_i32 : i32
    %1 = arith.extui %0 : i1 to i32
    %c0_i32_0 = arith.constant 0 : i32
    %2 = arith.cmpi ne, %1, %c0_i32_0 : i32
    scf.if %2 {
      %c0_75 = arith.constant 0 : index
      %c0_76 = arith.constant 0 : index
      %c0_77 = arith.constant 0 : index
      %181 = vector.load %arg2[%c0_75, %c0_76, %c0_77] : memref<1x7x192xbf16, #tpu.memory_space<vmem>>, vector<1x7x192xbf16>
      %182 = vector.shape_cast %181 : vector<1x7x192xbf16> to vector<7x192xbf16>
      %c0_78 = arith.constant 0 : index
      %c0_79 = arith.constant 0 : index
      %183 = vector.load %arg3[%c0_78, %c0_79] : memref<192x32xbf16, #tpu.memory_space<vmem>>, vector<192x32xbf16>
      %cst_80 = arith.constant dense<0.000000e+00> : vector<7x32xf32>
      %184 = tpu.matmul %182, %183, %cst_80 {dimension_numbers = #tpu.dot_dimension_numbers<[1], [0], [0], [1], [0, 0, 1, 1], [], []>} : vector<7x192xbf16>, vector<192x32xbf16>, vector<7x32xf32> -> vector<7x32xf32>
      %c0_81 = arith.constant 0 : index
      %c0_82 = arith.constant 0 : index
      %185 = vector.load %arg4[%c0_81, %c0_82] : memref<1x32xf32, #tpu.memory_space<vmem>>, vector<1x32xf32>
      %186 = vector.broadcast %185 : vector<1x32xf32> to vector<7x32xf32>
      %187 = arith.addf %184, %186 : vector<7x32xf32>
      %c0_83 = arith.constant 0 : index
      %c0_84 = arith.constant 0 : index
      %c0_85 = arith.constant 0 : index
      %188 = vector.load %arg6[%c0_83, %c0_84, %c0_85] : memref<1x1x32xf32, #tpu.memory_space<vmem>>, vector<1x1x32xf32>
      %189 = vector.shape_cast %188 : vector<1x1x32xf32> to vector<1x32xf32>
      %c0_86 = arith.constant 0 : index
      %c0_87 = arith.constant 0 : index
      %c0_88 = arith.constant 0 : index
      %190 = vector.load %arg5[%c0_86, %c0_87, %c0_88] : memref<1x1x32xf32, #tpu.memory_space<vmem>>, vector<1x1x32xf32>
      %191 = vector.shape_cast %190 : vector<1x1x32xf32> to vector<1x32xf32>
      %192 = arith.addf %191, %189 : vector<1x32xf32>
      %c0_89 = arith.constant 0 : index
      %c0_90 = arith.constant 0 : index
      %193 = vector.load %arg24[%c0_89, %c0_90] : memref<8x32xf32, #tpu.memory_space<vmem>>, vector<1x32xf32>
      tpu.vector_store %arg24[%c0_89, %c0_90], %192 {strides = array<i32>} : memref<8x32xf32, #tpu.memory_space<vmem>>, vector<1x32xf32>,
      %194 = vector.broadcast %189 : vector<1x32xf32> to vector<7x32xf32>
      %195 = arith.addf %187, %194 : vector<7x32xf32>
      %c1 = arith.constant 1 : index
      %c0_91 = arith.constant 0 : index
      %196 = vector.load %arg24[%c1, %c0_91] : memref<8x32xf32, #tpu.memory_space<vmem>>, vector<7x32xf32>
      tpu.vector_store %arg24[%c1, %c0_91], %195 {strides = array<i32>} : memref<8x32xf32, #tpu.memory_space<vmem>>, vector<7x32xf32>,
    } else {
    }
    %c0 = arith.constant 0 : index
    %c0_1 = arith.constant 0 : index
    %3 = vector.load %arg24[%c0, %c0_1] : memref<8x32xf32, #tpu.memory_space<vmem>>, vector<8x32xf32>
    %4 = arith.truncf %3 : vector<8x32xf32> to vector<8x32xbf16>
    %c0_2 = arith.constant 0 : index
    %c0_3 = arith.constant 0 : index
    %c0_4 = arith.constant 0 : index
    %5 = vector.load %arg7[%c0_2, %c0_3, %c0_4] : memref<1x32x96xbf16, #tpu.memory_space<vmem>>, vector<1x32x96xbf16>
    %6 = vector.shape_cast %5 : vector<1x32x96xbf16> to vector<32x96xbf16>
    %cst = arith.constant dense<0.000000e+00> : vector<8x96xf32>
    %7 = tpu.matmul %4, %6, %cst {dimension_numbers = #tpu.dot_dimension_numbers<[1], [0], [0], [1], [0, 0, 1, 1], [], []>} : vector<8x32xbf16>, vector<32x96xbf16>, vector<8x96xf32> -> vector<8x96xf32>
    %c0_5 = arith.constant 0 : index
    %c0_6 = arith.constant 0 : index
    %c0_7 = arith.constant 0 : index
    %8 = vector.load %arg8[%c0_5, %c0_6, %c0_7] : memref<1x1x96xf32, #tpu.memory_space<vmem>>, vector<1x1x96xf32>
    %9 = vector.shape_cast %8 : vector<1x1x96xf32> to vector<1x96xf32>
    %10 = vector.broadcast %9 : vector<1x96xf32> to vector<8x96xf32>
    %11 = arith.addf %7, %10 : vector<8x96xf32>
    %12 = vector.extract_strided_slice %11 {offsets = [0, 0], sizes = [8, 8], strides = [1, 1]} : vector<8x96xf32> to vector<8x8xf32>
    %13 = vector.shape_cast %12 : vector<8x8xf32> to vector<1x8x8xf32>
    %14 = vector.extract_strided_slice %11 {offsets = [0, 32], sizes = [8, 8], strides = [1, 1]} : vector<8x96xf32> to vector<8x8xf32>
    %15 = vector.shape_cast %14 : vector<8x8xf32> to vector<1x8x8xf32>
    %16 = vector.extract_strided_slice %11 {offsets = [0, 64], sizes = [8, 8], strides = [1, 1]} : vector<8x96xf32> to vector<8x8xf32>
    %17 = vector.shape_cast %16 : vector<8x8xf32> to vector<1x8x8xf32>
    "tpu.trace_start"() <{level = 10 : i32, message = "bqd,bkd->bqk"}> : () -> ()
    %cst_8 = arith.constant dense<0.000000e+00> : vector<1x8x8xf32>
    %18 = tpu.matmul %13, %15, %cst_8 {dimension_numbers = #tpu.dot_dimension_numbers<[2], [2], [1], [1], [0, 0, 0, 1, 1, 1], [0], [0]>} : vector<1x8x8xf32>, vector<1x8x8xf32>, vector<1x8x8xf32> -> vector<1x8x8xf32>
    "tpu.trace_stop"() : () -> ()
    %cst_9 = arith.constant 0.353553385 : f32
    %19 = vector.broadcast %cst_9 : f32 to vector<1x8x8xf32>
    %20 = arith.mulf %18, %19 : vector<1x8x8xf32>
    %cst_10 = arith.constant dense<0xFF800000> : vector<1x8xf32>
    %21 = vector.multi_reduction <maximumf>, %20, %cst_10 [2] : vector<1x8x8xf32> to vector<1x8xf32>
    %22 = vector.shape_cast %21 : vector<1x8xf32> to vector<1x8x1xf32>
    %23 = vector.broadcast %22 : vector<1x8x1xf32> to vector<1x8x8xf32>
    %24 = arith.subf %20, %23 : vector<1x8x8xf32>
    %25 = math.exp %24 : vector<1x8x8xf32>
    %cst_11 = arith.constant dense<0.000000e+00> : vector<1x8xf32>
    %26 = vector.multi_reduction <add>, %25, %cst_11 [2] : vector<1x8x8xf32> to vector<1x8xf32>
    %27 = vector.shape_cast %26 : vector<1x8xf32> to vector<1x8x1xf32>
    %28 = tpu.reciprocal %27 {approx = true} : vector<1x8x1xf32> -> vector<1x8x1xf32>
    %29 = vector.broadcast %28 : vector<1x8x1xf32> to vector<1x8x8xf32>
    %30 = arith.mulf %25, %29 : vector<1x8x8xf32>
    "tpu.trace_start"() <{level = 10 : i32, message = "bqk,bkd->bqd"}> : () -> ()
    %cst_12 = arith.constant dense<0.000000e+00> : vector<1x8x8xf32>
    %31 = tpu.matmul %30, %17, %cst_12 {dimension_numbers = #tpu.dot_dimension_numbers<[2], [1], [1], [2], [0, 0, 0, 1, 1, 2], [0], [0]>} : vector<1x8x8xf32>, vector<1x8x8xf32>, vector<1x8x8xf32> -> vector<1x8x8xf32>
    "tpu.trace_stop"() : () -> ()
    %32 = vector.shape_cast %31 : vector<1x8x8xf32> to vector<8x8xf32>
    %33 = vector.extract_strided_slice %11 {offsets = [0, 8], sizes = [8, 8], strides = [1, 1]} : vector<8x96xf32> to vector<8x8xf32>
    %34 = vector.shape_cast %33 : vector<8x8xf32> to vector<1x8x8xf32>
    %35 = vector.extract_strided_slice %11 {offsets = [0, 40], sizes = [8, 8], strides = [1, 1]} : vector<8x96xf32> to vector<8x8xf32>
    %36 = vector.shape_cast %35 : vector<8x8xf32> to vector<1x8x8xf32>
    %37 = vector.extract_strided_slice %11 {offsets = [0, 72], sizes = [8, 8], strides = [1, 1]} : vector<8x96xf32> to vector<8x8xf32>
    %38 = vector.shape_cast %37 : vector<8x8xf32> to vector<1x8x8xf32>
    "tpu.trace_start"() <{level = 10 : i32, message = "bqd,bkd->bqk"}> : () -> ()
    %cst_13 = arith.constant dense<0.000000e+00> : vector<1x8x8xf32>
    %39 = tpu.matmul %34, %36, %cst_13 {dimension_numbers = #tpu.dot_dimension_numbers<[2], [2], [1], [1], [0, 0, 0, 1, 1, 1], [0], [0]>} : vector<1x8x8xf32>, vector<1x8x8xf32>, vector<1x8x8xf32> -> vector<1x8x8xf32>
    "tpu.trace_stop"() : () -> ()
    %cst_14 = arith.constant 0.353553385 : f32
    %40 = vector.broadcast %cst_14 : f32 to vector<1x8x8xf32>
    %41 = arith.mulf %39, %40 : vector<1x8x8xf32>
    %cst_15 = arith.constant dense<0xFF800000> : vector<1x8xf32>
    %42 = vector.multi_reduction <maximumf>, %41, %cst_15 [2] : vector<1x8x8xf32> to vector<1x8xf32>
    %43 = vector.shape_cast %42 : vector<1x8xf32> to vector<1x8x1xf32>
    %44 = vector.broadcast %43 : vector<1x8x1xf32> to vector<1x8x8xf32>
    %45 = arith.subf %41, %44 : vector<1x8x8xf32>
    %46 = math.exp %45 : vector<1x8x8xf32>
    %cst_16 = arith.constant dense<0.000000e+00> : vector<1x8xf32>
    %47 = vector.multi_reduction <add>, %46, %cst_16 [2] : vector<1x8x8xf32> to vector<1x8xf32>
    %48 = vector.shape_cast %47 : vector<1x8xf32> to vector<1x8x1xf32>
    %49 = tpu.reciprocal %48 {approx = true} : vector<1x8x1xf32> -> vector<1x8x1xf32>
    %50 = vector.broadcast %49 : vector<1x8x1xf32> to vector<1x8x8xf32>
    %51 = arith.mulf %46, %50 : vector<1x8x8xf32>
    "tpu.trace_start"() <{level = 10 : i32, message = "bqk,bkd->bqd"}> : () -> ()
    %cst_17 = arith.constant dense<0.000000e+00> : vector<1x8x8xf32>
    %52 = tpu.matmul %51, %38, %cst_17 {dimension_numbers = #tpu.dot_dimension_numbers<[2], [1], [1], [2], [0, 0, 0, 1, 1, 2], [0], [0]>} : vector<1x8x8xf32>, vector<1x8x8xf32>, vector<1x8x8xf32> -> vector<1x8x8xf32>
    "tpu.trace_stop"() : () -> ()
    %53 = vector.shape_cast %52 : vector<1x8x8xf32> to vector<8x8xf32>
    %54 = vector.extract_strided_slice %11 {offsets = [0, 16], sizes = [8, 8], strides = [1, 1]} : vector<8x96xf32> to vector<8x8xf32>
    %55 = vector.shape_cast %54 : vector<8x8xf32> to vector<1x8x8xf32>
    %56 = vector.extract_strided_slice %11 {offsets = [0, 48], sizes = [8, 8], strides = [1, 1]} : vector<8x96xf32> to vector<8x8xf32>
    %57 = vector.shape_cast %56 : vector<8x8xf32> to vector<1x8x8xf32>
    %58 = vector.extract_strided_slice %11 {offsets = [0, 80], sizes = [8, 8], strides = [1, 1]} : vector<8x96xf32> to vector<8x8xf32>
    %59 = vector.shape_cast %58 : vector<8x8xf32> to vector<1x8x8xf32>
    "tpu.trace_start"() <{level = 10 : i32, message = "bqd,bkd->bqk"}> : () -> ()
    %cst_18 = arith.constant dense<0.000000e+00> : vector<1x8x8xf32>
    %60 = tpu.matmul %55, %57, %cst_18 {dimension_numbers = #tpu.dot_dimension_numbers<[2], [2], [1], [1], [0, 0, 0, 1, 1, 1], [0], [0]>} : vector<1x8x8xf32>, vector<1x8x8xf32>, vector<1x8x8xf32> -> vector<1x8x8xf32>
    "tpu.trace_stop"() : () -> ()
    %cst_19 = arith.constant 0.353553385 : f32
    %61 = vector.broadcast %cst_19 : f32 to vector<1x8x8xf32>
    %62 = arith.mulf %60, %61 : vector<1x8x8xf32>
    %cst_20 = arith.constant dense<0xFF800000> : vector<1x8xf32>
    %63 = vector.multi_reduction <maximumf>, %62, %cst_20 [2] : vector<1x8x8xf32> to vector<1x8xf32>
    %64 = vector.shape_cast %63 : vector<1x8xf32> to vector<1x8x1xf32>
    %65 = vector.broadcast %64 : vector<1x8x1xf32> to vector<1x8x8xf32>
    %66 = arith.subf %62, %65 : vector<1x8x8xf32>
    %67 = math.exp %66 : vector<1x8x8xf32>
    %cst_21 = arith.constant dense<0.000000e+00> : vector<1x8xf32>
    %68 = vector.multi_reduction <add>, %67, %cst_21 [2] : vector<1x8x8xf32> to vector<1x8xf32>
    %69 = vector.shape_cast %68 : vector<1x8xf32> to vector<1x8x1xf32>
    %70 = tpu.reciprocal %69 {approx = true} : vector<1x8x1xf32> -> vector<1x8x1xf32>
    %71 = vector.broadcast %70 : vector<1x8x1xf32> to vector<1x8x8xf32>
    %72 = arith.mulf %67, %71 : vector<1x8x8xf32>
    "tpu.trace_start"() <{level = 10 : i32, message = "bqk,bkd->bqd"}> : () -> ()
    %cst_22 = arith.constant dense<0.000000e+00> : vector<1x8x8xf32>
    %73 = tpu.matmul %72, %59, %cst_22 {dimension_numbers = #tpu.dot_dimension_numbers<[2], [1], [1], [2], [0, 0, 0, 1, 1, 2], [0], [0]>} : vector<1x8x8xf32>, vector<1x8x8xf32>, vector<1x8x8xf32> -> vector<1x8x8xf32>
    "tpu.trace_stop"() : () -> ()
    %74 = vector.shape_cast %73 : vector<1x8x8xf32> to vector<8x8xf32>
    %75 = vector.extract_strided_slice %11 {offsets = [0, 24], sizes = [8, 8], strides = [1, 1]} : vector<8x96xf32> to vector<8x8xf32>
    %76 = vector.shape_cast %75 : vector<8x8xf32> to vector<1x8x8xf32>
    %77 = vector.extract_strided_slice %11 {offsets = [0, 56], sizes = [8, 8], strides = [1, 1]} : vector<8x96xf32> to vector<8x8xf32>
    %78 = vector.shape_cast %77 : vector<8x8xf32> to vector<1x8x8xf32>
    %79 = vector.extract_strided_slice %11 {offsets = [0, 88], sizes = [8, 8], strides = [1, 1]} : vector<8x96xf32> to vector<8x8xf32>
    %80 = vector.shape_cast %79 : vector<8x8xf32> to vector<1x8x8xf32>
    "tpu.trace_start"() <{level = 10 : i32, message = "bqd,bkd->bqk"}> : () -> ()
    %cst_23 = arith.constant dense<0.000000e+00> : vector<1x8x8xf32>
    %81 = tpu.matmul %76, %78, %cst_23 {dimension_numbers = #tpu.dot_dimension_numbers<[2], [2], [1], [1], [0, 0, 0, 1, 1, 1], [0], [0]>} : vector<1x8x8xf32>, vector<1x8x8xf32>, vector<1x8x8xf32> -> vector<1x8x8xf32>
    "tpu.trace_stop"() : () -> ()
    %cst_24 = arith.constant 0.353553385 : f32
    %82 = vector.broadcast %cst_24 : f32 to vector<1x8x8xf32>
    %83 = arith.mulf %81, %82 : vector<1x8x8xf32>
    %cst_25 = arith.constant dense<0xFF800000> : vector<1x8xf32>
    %84 = vector.multi_reduction <maximumf>, %83, %cst_25 [2] : vector<1x8x8xf32> to vector<1x8xf32>
    %85 = vector.shape_cast %84 : vector<1x8xf32> to vector<1x8x1xf32>
    %86 = vector.broadcast %85 : vector<1x8x1xf32> to vector<1x8x8xf32>
    %87 = arith.subf %83, %86 : vector<1x8x8xf32>
    %88 = math.exp %87 : vector<1x8x8xf32>
    %cst_26 = arith.constant dense<0.000000e+00> : vector<1x8xf32>
    %89 = vector.multi_reduction <add>, %88, %cst_26 [2] : vector<1x8x8xf32> to vector<1x8xf32>
    %90 = vector.shape_cast %89 : vector<1x8xf32> to vector<1x8x1xf32>
    %91 = tpu.reciprocal %90 {approx = true} : vector<1x8x1xf32> -> vector<1x8x1xf32>
    %92 = vector.broadcast %91 : vector<1x8x1xf32> to vector<1x8x8xf32>
    %93 = arith.mulf %88, %92 : vector<1x8x8xf32>
    "tpu.trace_start"() <{level = 10 : i32, message = "bqk,bkd->bqd"}> : () -> ()
    %cst_27 = arith.constant dense<0.000000e+00> : vector<1x8x8xf32>
    %94 = tpu.matmul %93, %80, %cst_27 {dimension_numbers = #tpu.dot_dimension_numbers<[2], [1], [1], [2], [0, 0, 0, 1, 1, 2], [0], [0]>} : vector<1x8x8xf32>, vector<1x8x8xf32>, vector<1x8x8xf32> -> vector<1x8x8xf32>
    "tpu.trace_stop"() : () -> ()
    %95 = vector.shape_cast %94 : vector<1x8x8xf32> to vector<8x8xf32>
    %96 = tpu.concatenate %32, %53, %74, %95 in 1 : vector<8x8xf32>, vector<8x8xf32>, vector<8x8xf32>, vector<8x8xf32> -> vector<8x32xf32>
    %97 = arith.truncf %96 : vector<8x32xf32> to vector<8x32xbf16>
    %c0_28 = arith.constant 0 : index
    %c0_29 = arith.constant 0 : index
    %c0_30 = arith.constant 0 : index
    %98 = vector.load %arg9[%c0_28, %c0_29, %c0_30] : memref<1x32x32xbf16, #tpu.memory_space<vmem>>, vector<1x32x32xbf16>
    %99 = vector.shape_cast %98 : vector<1x32x32xbf16> to vector<32x32xbf16>
    %cst_31 = arith.constant dense<0.000000e+00> : vector<8x32xf32>
    %100 = tpu.matmul %97, %99, %cst_31 {dimension_numbers = #tpu.dot_dimension_numbers<[1], [0], [0], [1], [0, 0, 1, 1], [], []>} : vector<8x32xbf16>, vector<32x32xbf16>, vector<8x32xf32> -> vector<8x32xf32>
    %c0_32 = arith.constant 0 : index
    %c0_33 = arith.constant 0 : index
    %c0_34 = arith.constant 0 : index
    %101 = vector.load %arg10[%c0_32, %c0_33, %c0_34] : memref<1x1x32xf32, #tpu.memory_space<vmem>>, vector<1x1x32xf32>
    %102 = vector.shape_cast %101 : vector<1x1x32xf32> to vector<1x32xf32>
    %103 = vector.broadcast %102 : vector<1x32xf32> to vector<8x32xf32>
    %104 = arith.addf %100, %103 : vector<8x32xf32>
    %105 = arith.addf %3, %104 : vector<8x32xf32>
    %c0_35 = arith.constant 0 : index
    %c0_36 = arith.constant 0 : index
    %c0_37 = arith.constant 0 : index
    %106 = vector.load %arg11[%c0_35, %c0_36, %c0_37] : memref<1x1x32xf32, #tpu.memory_space<vmem>>, vector<1x1x32xf32>
    %107 = vector.shape_cast %106 : vector<1x1x32xf32> to vector<1x32xf32>
    %c0_38 = arith.constant 0 : index
    %c0_39 = arith.constant 0 : index
    %c0_40 = arith.constant 0 : index
    %108 = vector.load %arg12[%c0_38, %c0_39, %c0_40] : memref<1x1x32xf32, #tpu.memory_space<vmem>>, vector<1x1x32xf32>
    %109 = vector.shape_cast %108 : vector<1x1x32xf32> to vector<1x32xf32>
    %cst_41 = arith.constant dense<0.000000e+00> : vector<8xf32>
    %110 = vector.multi_reduction <add>, %105, %cst_41 [1] : vector<8x32xf32> to vector<8xf32>
    %111 = vector.shape_cast %110 : vector<8xf32> to vector<8x1xf32>
    %cst_42 = arith.constant 3.200000e+01 : f32
    %112 = vector.broadcast %cst_42 : f32 to vector<8x1xf32>
    %113 = arith.divf %111, %112 : vector<8x1xf32>
    %114 = vector.broadcast %113 : vector<8x1xf32> to vector<8x32xf32>
    %115 = arith.subf %105, %114 : vector<8x32xf32>
    %116 = arith.mulf %115, %115 : vector<8x32xf32>
    %cst_43 = arith.constant dense<0.000000e+00> : vector<8xf32>
    %117 = vector.multi_reduction <add>, %116, %cst_43 [1] : vector<8x32xf32> to vector<8xf32>
    %118 = vector.shape_cast %117 : vector<8xf32> to vector<8x1xf32>
    %cst_44 = arith.constant 3.200000e+01 : f32
    %119 = vector.broadcast %cst_44 : f32 to vector<8x1xf32>
    %120 = arith.divf %118, %119 : vector<8x1xf32>
    %121 = vector.broadcast %113 : vector<8x1xf32> to vector<8x32xf32>
    %122 = arith.subf %105, %121 : vector<8x32xf32>
    %cst_45 = arith.constant 9.99999974E-6 : f32
    %123 = vector.broadcast %cst_45 : f32 to vector<8x1xf32>
    %124 = arith.addf %120, %123 : vector<8x1xf32>
    %125 = math.rsqrt %124 : vector<8x1xf32>
    %126 = vector.broadcast %125 : vector<8x1xf32> to vector<8x32xf32>
    %127 = arith.mulf %122, %126 : vector<8x32xf32>
    %128 = vector.broadcast %107 : vector<1x32xf32> to vector<8x32xf32>
    %129 = arith.mulf %127, %128 : vector<8x32xf32>
    %130 = vector.broadcast %109 : vector<1x32xf32> to vector<8x32xf32>
    %131 = arith.addf %129, %130 : vector<8x32xf32>
    %132 = arith.truncf %131 : vector<8x32xf32> to vector<8x32xbf16>
    %c0_46 = arith.constant 0 : index
    %c0_47 = arith.constant 0 : index
    %c0_48 = arith.constant 0 : index
    %133 = vector.load %arg15[%c0_46, %c0_47, %c0_48] : memref<1x32x2048xbf16, #tpu.memory_space<vmem>>, vector<1x32x2048xbf16>
    %134 = vector.shape_cast %133 : vector<1x32x2048xbf16> to vector<32x2048xbf16>
    %cst_49 = arith.constant dense<0.000000e+00> : vector<8x2048xf32>
    %135 = tpu.matmul %132, %134, %cst_49 {dimension_numbers = #tpu.dot_dimension_numbers<[1], [0], [0], [1], [0, 0, 1, 1], [], []>} : vector<8x32xbf16>, vector<32x2048xbf16>, vector<8x2048xf32> -> vector<8x2048xf32>
    %c0_50 = arith.constant 0 : index
    %c0_51 = arith.constant 0 : index
    %c0_52 = arith.constant 0 : index
    %136 = vector.load %arg16[%c0_50, %c0_51, %c0_52] : memref<1x1x2048xf32, #tpu.memory_space<vmem>>, vector<1x1x2048xf32>
    %137 = vector.shape_cast %136 : vector<1x1x2048xf32> to vector<1x2048xf32>
    %138 = vector.broadcast %137 : vector<1x2048xf32> to vector<8x2048xf32>
    %139 = arith.addf %135, %138 : vector<8x2048xf32>
    %cst_53 = arith.constant 0.000000e+00 : f32
    %140 = vector.broadcast %cst_53 : f32 to vector<8x2048xf32>
    %141 = arith.maximumf %139, %140 : vector<8x2048xf32>
    %142 = arith.truncf %141 : vector<8x2048xf32> to vector<8x2048xbf16>
    %c0_54 = arith.constant 0 : index
    %c0_55 = arith.constant 0 : index
    %c0_56 = arith.constant 0 : index
    %143 = vector.load %arg17[%c0_54, %c0_55, %c0_56] : memref<1x2048x32xbf16, #tpu.memory_space<vmem>>, vector<1x2048x32xbf16>
    %144 = vector.shape_cast %143 : vector<1x2048x32xbf16> to vector<2048x32xbf16>
    %cst_57 = arith.constant dense<0.000000e+00> : vector<8x32xf32>
    %145 = tpu.matmul %142, %144, %cst_57 {dimension_numbers = #tpu.dot_dimension_numbers<[1], [0], [0], [1], [0, 0, 1, 1], [], []>} : vector<8x2048xbf16>, vector<2048x32xbf16>, vector<8x32xf32> -> vector<8x32xf32>
    %c0_58 = arith.constant 0 : index
    %c0_59 = arith.constant 0 : index
    %c0_60 = arith.constant 0 : index
    %146 = vector.load %arg18[%c0_58, %c0_59, %c0_60] : memref<1x1x32xf32, #tpu.memory_space<vmem>>, vector<1x1x32xf32>
    %147 = vector.shape_cast %146 : vector<1x1x32xf32> to vector<1x32xf32>
    %148 = vector.broadcast %147 : vector<1x32xf32> to vector<8x32xf32>
    %149 = arith.addf %145, %148 : vector<8x32xf32>
    %150 = arith.addf %131, %149 : vector<8x32xf32>
    %c0_61 = arith.constant 0 : index
    %c0_62 = arith.constant 0 : index
    %c0_63 = arith.constant 0 : index
    %151 = vector.load %arg13[%c0_61, %c0_62, %c0_63] : memref<1x1x32xf32, #tpu.memory_space<vmem>>, vector<1x1x32xf32>
    %152 = vector.shape_cast %151 : vector<1x1x32xf32> to vector<1x32xf32>
    %c0_64 = arith.constant 0 : index
    %c0_65 = arith.constant 0 : index
    %c0_66 = arith.constant 0 : index
    %153 = vector.load %arg14[%c0_64, %c0_65, %c0_66] : memref<1x1x32xf32, #tpu.memory_space<vmem>>, vector<1x1x32xf32>
    %154 = vector.shape_cast %153 : vector<1x1x32xf32> to vector<1x32xf32>
    %cst_67 = arith.constant dense<0.000000e+00> : vector<8xf32>
    %155 = vector.multi_reduction <add>, %150, %cst_67 [1] : vector<8x32xf32> to vector<8xf32>
    %156 = vector.shape_cast %155 : vector<8xf32> to vector<8x1xf32>
    %cst_68 = arith.constant 3.200000e+01 : f32
    %157 = vector.broadcast %cst_68 : f32 to vector<8x1xf32>
    %158 = arith.divf %156, %157 : vector<8x1xf32>
    %159 = vector.broadcast %158 : vector<8x1xf32> to vector<8x32xf32>
    %160 = arith.subf %150, %159 : vector<8x32xf32>
    %161 = arith.mulf %160, %160 : vector<8x32xf32>
    %cst_69 = arith.constant dense<0.000000e+00> : vector<8xf32>
    %162 = vector.multi_reduction <add>, %161, %cst_69 [1] : vector<8x32xf32> to vector<8xf32>
    %163 = vector.shape_cast %162 : vector<8xf32> to vector<8x1xf32>
    %cst_70 = arith.constant 3.200000e+01 : f32
    %164 = vector.broadcast %cst_70 : f32 to vector<8x1xf32>
    %165 = arith.divf %163, %164 : vector<8x1xf32>
    %166 = vector.broadcast %158 : vector<8x1xf32> to vector<8x32xf32>
    %167 = arith.subf %150, %166 : vector<8x32xf32>
    %cst_71 = arith.constant 9.99999974E-6 : f32
    %168 = vector.broadcast %cst_71 : f32 to vector<8x1xf32>
    %169 = arith.addf %165, %168 : vector<8x1xf32>
    %170 = math.rsqrt %169 : vector<8x1xf32>
    %171 = vector.broadcast %170 : vector<8x1xf32> to vector<8x32xf32>
    %172 = arith.mulf %167, %171 : vector<8x32xf32>
    %173 = vector.broadcast %152 : vector<1x32xf32> to vector<8x32xf32>
    %174 = arith.mulf %172, %173 : vector<8x32xf32>
    %175 = vector.broadcast %154 : vector<1x32xf32> to vector<8x32xf32>
    %176 = arith.addf %174, %175 : vector<8x32xf32>
    %c0_72 = arith.constant 0 : index
    %c0_73 = arith.constant 0 : index
    %177 = vector.load %arg24[%c0_72, %c0_73] : memref<8x32xf32, #tpu.memory_space<vmem>>, vector<8x32xf32>
    tpu.vector_store %arg24[%c0_72, %c0_73], %176 {strides = array<i32>} : memref<8x32xf32, #tpu.memory_space<vmem>>, vector<8x32xf32>,
    %c1_i32 = arith.constant 1 : i32
    %178 = arith.cmpi eq, %arg1, %c1_i32 : i32
    %179 = arith.extui %178 : i1 to i32
    %c0_i32_74 = arith.constant 0 : i32
    %180 = arith.cmpi ne, %179, %c0_i32_74 : i32
    scf.if %180 {
      %181 = vector.extract_strided_slice %176 {offsets = [0, 0], sizes = [1, 32], strides = [1, 1]} : vector<8x32xf32> to vector<1x32xf32>
      %c0_75 = arith.constant 0 : index
      %c0_76 = arith.constant 0 : index
      %182 = vector.load %arg19[%c0_75, %c0_76] : memref<1x32xf32, #tpu.memory_space<vmem>>, vector<1x32xf32>
      %c0_77 = arith.constant 0 : index
      %c0_78 = arith.constant 0 : index
      %183 = vector.load %arg20[%c0_77, %c0_78] : memref<1x32xf32, #tpu.memory_space<vmem>>, vector<1x32xf32>
      %cst_79 = arith.constant dense<0.000000e+00> : vector<1xf32>
      %184 = vector.multi_reduction <add>, %181, %cst_79 [1] : vector<1x32xf32> to vector<1xf32>
      %185 = vector.shape_cast %184 : vector<1xf32> to vector<1x1xf32>
      %cst_80 = arith.constant 3.200000e+01 : f32
      %186 = vector.broadcast %cst_80 : f32 to vector<1x1xf32>
      %187 = arith.divf %185, %186 : vector<1x1xf32>
      %188 = vector.broadcast %187 : vector<1x1xf32> to vector<1x32xf32>
      %189 = arith.subf %181, %188 : vector<1x32xf32>
      %190 = arith.mulf %189, %189 : vector<1x32xf32>
      %cst_81 = arith.constant dense<0.000000e+00> : vector<1xf32>
      %191 = vector.multi_reduction <add>, %190, %cst_81 [1] : vector<1x32xf32> to vector<1xf32>
      %192 = vector.shape_cast %191 : vector<1xf32> to vector<1x1xf32>
      %cst_82 = arith.constant 3.200000e+01 : f32
      %193 = vector.broadcast %cst_82 : f32 to vector<1x1xf32>
      %194 = arith.divf %192, %193 : vector<1x1xf32>
      %195 = vector.broadcast %187 : vector<1x1xf32> to vector<1x32xf32>
      %196 = arith.subf %181, %195 : vector<1x32xf32>
      %cst_83 = arith.constant 9.99999997E-7 : f32
      %197 = vector.broadcast %cst_83 : f32 to vector<1x1xf32>
      %198 = arith.addf %194, %197 : vector<1x1xf32>
      %199 = math.rsqrt %198 : vector<1x1xf32>
      %200 = vector.broadcast %199 : vector<1x1xf32> to vector<1x32xf32>
      %201 = arith.mulf %196, %200 : vector<1x32xf32>
      %202 = arith.mulf %201, %182 : vector<1x32xf32>
      %203 = arith.addf %202, %183 : vector<1x32xf32>
      %204 = arith.truncf %203 : vector<1x32xf32> to vector<1x32xbf16>
      %c0_84 = arith.constant 0 : index
      %c0_85 = arith.constant 0 : index
      %205 = vector.load %arg21[%c0_84, %c0_85] : memref<32x128xbf16, #tpu.memory_space<vmem>>, vector<32x128xbf16>
      %cst_86 = arith.constant dense<0.000000e+00> : vector<1x128xf32>
      %206 = tpu.matmul %204, %205, %cst_86 {dimension_numbers = #tpu.dot_dimension_numbers<[1], [0], [0], [1], [0, 0, 1, 1], [], []>} : vector<1x32xbf16>, vector<32x128xbf16>, vector<1x128xf32> -> vector<1x128xf32>
      %c0_87 = arith.constant 0 : index
      %c0_88 = arith.constant 0 : index
      %207 = vector.load %arg22[%c0_87, %c0_88] : memref<1x128xf32, #tpu.memory_space<vmem>>, vector<1x128xf32>
      %208 = arith.addf %206, %207 : vector<1x128xf32>
      %c0_89 = arith.constant 0 : index
      %c0_90 = arith.constant 0 : index
      %c0_91 = arith.constant 0 : index
      %209 = vector.load %arg23[%c0_89, %c0_90, %c0_91] : memref<1x1x128xf32, #tpu.memory_space<vmem>>, vector<1x1x128xf32>
      %210 = vector.shape_cast %209 : vector<1x1x128xf32> to vector<1x128xf32>
      %211 = vector.shape_cast %208 : vector<1x128xf32> to vector<1x1x128xf32>
      tpu.vector_store %arg23[%c0_89, %c0_90, %c0_91], %211 {strides = array<i32>} : memref<1x1x128xf32, #tpu.memory_space<vmem>>, vector<1x1x128xf32>,
    } else {
    }
    return
  }
  func.func @transform_0(%arg0: i32, %arg1: i32) -> (i32, i32, i32) {
    %c0_i32 = arith.constant 0 : i32
    %c0_i32_0 = arith.constant 0 : i32
    %c0_i32_1 = arith.constant 0 : i32
    return %arg0, %c0_i32, %c0_i32_0 : i32, i32, i32
  }
  func.func @transform_1(%arg0: i32, %arg1: i32) -> (i32, i32) {
    %c0_i32 = arith.constant 0 : i32
    %c0_i32_0 = arith.constant 0 : i32
    %c0_i32_1 = arith.constant 0 : i32
    return %c0_i32, %c0_i32_0 : i32, i32
  }
  func.func @transform_2(%arg0: i32, %arg1: i32) -> (i32, i32) {
    %c0_i32 = arith.constant 0 : i32
    %c0_i32_0 = arith.constant 0 : i32
    %c0_i32_1 = arith.constant 0 : i32
    return %c0_i32, %c0_i32_0 : i32, i32
  }
  func.func @transform_3(%arg0: i32, %arg1: i32) -> (i32, i32, i32) {
    %c0_i32 = arith.constant 0 : i32
    %c0_i32_0 = arith.constant 0 : i32
    %c0_i32_1 = arith.constant 0 : i32
    %c0_i32_2 = arith.constant 0 : i32
    return %c0_i32, %c0_i32_0, %c0_i32_1 : i32, i32, i32
  }
  func.func @transform_4(%arg0: i32, %arg1: i32) -> (i32, i32, i32) {
    %c0_i32 = arith.constant 0 : i32
    %c0_i32_0 = arith.constant 0 : i32
    %c0_i32_1 = arith.constant 0 : i32
    return %arg0, %c0_i32, %c0_i32_0 : i32, i32, i32
  }
  func.func @transform_5(%arg0: i32, %arg1: i32) -> (i32, i32, i32) {
    %c0_i32 = arith.constant 0 : i32
    %c0_i32_0 = arith.constant 0 : i32
    %c0_i32_1 = arith.constant 0 : i32
    return %arg1, %c0_i32, %c0_i32_0 : i32, i32, i32
  }
  func.func @transform_6(%arg0: i32, %arg1: i32) -> (i32, i32, i32) {
    %c0_i32 = arith.constant 0 : i32
    %c0_i32_0 = arith.constant 0 : i32
    %c0_i32_1 = arith.constant 0 : i32
    return %arg1, %c0_i32, %c0_i32_0 : i32, i32, i32
  }
  func.func @transform_7(%arg0: i32, %arg1: i32) -> (i32, i32, i32) {
    %c0_i32 = arith.constant 0 : i32
    %c0_i32_0 = arith.constant 0 : i32
    %c0_i32_1 = arith.constant 0 : i32
    return %arg1, %c0_i32, %c0_i32_0 : i32, i32, i32
  }
  func.func @transform_8(%arg0: i32, %arg1: i32) -> (i32, i32, i32) {
    %c0_i32 = arith.constant 0 : i32
    %c0_i32_0 = arith.constant 0 : i32
    %c0_i32_1 = arith.constant 0 : i32
    return %arg1, %c0_i32, %c0_i32_0 : i32, i32, i32
  }
  func.func @transform_9(%arg0: i32, %arg1: i32) -> (i32, i32, i32) {
    %c0_i32 = arith.constant 0 : i32
    %c0_i32_0 = arith.constant 0 : i32
    %c0_i32_1 = arith.constant 0 : i32
    return %arg1, %c0_i32, %c0_i32_0 : i32, i32, i32
  }
  func.func @transform_10(%arg0: i32, %arg1: i32) -> (i32, i32, i32) {
    %c0_i32 = arith.constant 0 : i32
    %c0_i32_0 = arith.constant 0 : i32
    %c0_i32_1 = arith.constant 0 : i32
    return %arg1, %c0_i32, %c0_i32_0 : i32, i32, i32
  }
  func.func @transform_11(%arg0: i32, %arg1: i32) -> (i32, i32, i32) {
    %c0_i32 = arith.constant 0 : i32
    %c0_i32_0 = arith.constant 0 : i32
    %c0_i32_1 = arith.constant 0 : i32
    return %arg1, %c0_i32, %c0_i32_0 : i32, i32, i32
  }
  func.func @transform_12(%arg0: i32, %arg1: i32) -> (i32, i32, i32) {
    %c0_i32 = arith.constant 0 : i32
    %c0_i32_0 = arith.constant 0 : i32
    %c0_i32_1 = arith.constant 0 : i32
    return %arg1, %c0_i32, %c0_i32_0 : i32, i32, i32
  }
  func.func @transform_13(%arg0: i32, %arg1: i32) -> (i32, i32, i32) {
    %c0_i32 = arith.constant 0 : i32
    %c0_i32_0 = arith.constant 0 : i32
    %c0_i32_1 = arith.constant 0 : i32
    return %arg1, %c0_i32, %c0_i32_0 : i32, i32, i32
  }
  func.func @transform_14(%arg0: i32, %arg1: i32) -> (i32, i32, i32) {
    %c0_i32 = arith.constant 0 : i32
    %c0_i32_0 = arith.constant 0 : i32
    %c0_i32_1 = arith.constant 0 : i32
    return %arg1, %c0_i32, %c0_i32_0 : i32, i32, i32
  }
  func.func @transform_15(%arg0: i32, %arg1: i32) -> (i32, i32, i32) {
    %c0_i32 = arith.constant 0 : i32
    %c0_i32_0 = arith.constant 0 : i32
    %c0_i32_1 = arith.constant 0 : i32
    return %arg1, %c0_i32, %c0_i32_0 : i32, i32, i32
  }
  func.func @transform_16(%arg0: i32, %arg1: i32) -> (i32, i32, i32) {
    %c0_i32 = arith.constant 0 : i32
    %c0_i32_0 = arith.constant 0 : i32
    %c0_i32_1 = arith.constant 0 : i32
    return %arg1, %c0_i32, %c0_i32_0 : i32, i32, i32
  }
  func.func @transform_17(%arg0: i32, %arg1: i32) -> (i32, i32) {
    %c0_i32 = arith.constant 0 : i32
    %c0_i32_0 = arith.constant 0 : i32
    %c0_i32_1 = arith.constant 0 : i32
    return %c0_i32, %c0_i32_0 : i32, i32
  }
  func.func @transform_18(%arg0: i32, %arg1: i32) -> (i32, i32) {
    %c0_i32 = arith.constant 0 : i32
    %c0_i32_0 = arith.constant 0 : i32
    %c0_i32_1 = arith.constant 0 : i32
    return %c0_i32, %c0_i32_0 : i32, i32
  }
  func.func @transform_19(%arg0: i32, %arg1: i32) -> (i32, i32) {
    %c0_i32 = arith.constant 0 : i32
    %c0_i32_0 = arith.constant 0 : i32
    %c0_i32_1 = arith.constant 0 : i32
    return %c0_i32, %c0_i32_0 : i32, i32
  }
  func.func @transform_20(%arg0: i32, %arg1: i32) -> (i32, i32) {
    %c0_i32 = arith.constant 0 : i32
    %c0_i32_0 = arith.constant 0 : i32
    %c0_i32_1 = arith.constant 0 : i32
    return %c0_i32, %c0_i32_0 : i32, i32
  }
  func.func @transform_21(%arg0: i32, %arg1: i32) -> (i32, i32, i32) {
    %c0_i32 = arith.constant 0 : i32
    %c0_i32_0 = arith.constant 0 : i32
    %c0_i32_1 = arith.constant 0 : i32
    return %arg0, %c0_i32, %c0_i32_0 : i32, i32, i32
  }
}

</mosaic_0001>

<llo_original>
// kernel: bb_transformer_forward.1
$region0: #{bb_transformer_forward.1}
  #allocation0 [shape = 'u32[]', space=smem, size = 0x4, offset = 0x4, fixed_abs, tag = 'smem constant byte address 0x4 - core index']
  #allocation1 [shape = 'u32[144,128]{1,0:T(1,128)}', space=vmem, size = 0x12000, scoped, tag = 'internal scratch']
  #allocation2 [shape = 'f32[8,32]{1,0:T(8,128)}', space=vmem, size = 0x1000, scoped, tag = 'scratch operand']
  %s0 = inlined_call_operand.vmem [shape: bf16[2,7,192], index: 0, kind: input, shape index: {}]
  %s1 = inlined_call_operand.vmem [shape: bf16[192,32], index: 1, kind: input, shape index: {}]
  %s2 = inlined_call_operand.vmem [shape: f32[1,32], index: 2, kind: input, shape index: {}]
  %s3 = inlined_call_operand.vmem [shape: f32[1,1,32], index: 3, kind: input, shape index: {}]
  %s4 = inlined_call_operand.vmem [shape: f32[2,1,32], index: 4, kind: input, shape index: {}]
  %s5 = inlined_call_operand.vmem [shape: bf16[2,32,96], index: 5, kind: input, shape index: {}]
  %s6 = inlined_call_operand.vmem [shape: f32[2,1,96], index: 6, kind: input, shape index: {}]
  %s7 = inlined_call_operand.vmem [shape: bf16[2,32,32], index: 7, kind: input, shape index: {}]
  %s8 = inlined_call_operand.vmem [shape: f32[2,1,32], index: 8, kind: input, shape index: {}]
  %s9 = inlined_call_operand.vmem [shape: f32[2,1,32], index: 9, kind: input, shape index: {}]
  %s10 = inlined_call_operand.vmem [shape: f32[2,1,32], index: 10, kind: input, shape index: {}]
  %s11 = inlined_call_operand.vmem [shape: f32[2,1,32], index: 11, kind: input, shape index: {}]
  %s12 = inlined_call_operand.vmem [shape: f32[2,1,32], index: 12, kind: input, shape index: {}]
  %s13 = inlined_call_operand.vmem [shape: bf16[2,32,2048], index: 13, kind: input, shape index: {}]
  %s14 = inlined_call_operand.vmem [shape: f32[2,1,2048], index: 14, kind: input, shape index: {}]
  %s15 = inlined_call_operand.vmem [shape: bf16[2,2048,32], index: 15, kind: input, shape index: {}]
  %s16 = inlined_call_operand.vmem [shape: f32[2,1,32], index: 16, kind: input, shape index: {}]
  %s17 = inlined_call_operand.vmem [shape: f32[1,32], index: 17, kind: input, shape index: {}]
  %s18 = inlined_call_operand.vmem [shape: f32[1,32], index: 18, kind: input, shape index: {}]
  %s19 = inlined_call_operand.vmem [shape: bf16[32,128], index: 19, kind: input, shape index: {}]
  %s20 = inlined_call_operand.vmem [shape: f32[1,128], index: 20, kind: input, shape index: {}]
  %s21 = inlined_call_operand.hbm [shape: f32[2,1,128], index: 21, kind: output, shape index: {}]
  %s22 = sld [smem:[#allocation0]]
  $region125: #{bb_transformer_forward.1} parent=0
    _
  %s24 = ssub.s32 1, %s22
  %s25 = scalar_select 0, %s24, %s22
  $region1: #{bb_transformer_forward.1} parent=0
    #allocation3 [shape = 'u8[1024]{0}', space=vmem, size = 0x400, scoped, tag = 'output window, operand 0']
    #allocation4 [shape = 's32[2]{0}', space=sflag, size = 0x8, scoped, tag = 'scoped memory for bb_transformer_forward.1']
    %26 = vsyncpa [#allocation4], 0
    %s27 = scalar_lea.sflag [#allocation4], 1
    %28 = vsyncpa %s27, 0
    loop: start=0, step=1, limit=6
    $region2: #{bb_transformer_forward.1} parent=1 // loop_pre_header
      _
    $region3: #{bb_transformer_forward.1} parent=1 // loop_header
      %s30 = sphi 0, %s34
      %p31 = scmp.ge.s32.totalorder %s30, 6
      %s37 = sphi 0, %s49
      %s38 = sphi 0, %s45
      %s39 = sphi 0, %s37
      %s40 = sphi 0, %s38
      %s41 = sphi 0, %s39
      %s42 = sphi 0, %s40
      %s52 = sphi 0, %s54
      %s55 = sphi 0, %s52
      %s56 = sphi 0, %s55
      %s72 = sphi 0, %s56
      %s76 = sphi 0, %s76
      %s78 = sphi 0, %s76
      %s79 = sphi 0, %s78
      %s93 = sphi 0, %s79
      %s97 = sphi 0, %s97
      %s99 = sphi 0, %s97
      %s100 = sphi 0, %s99
      %s114 = sphi 0, %s100
      %s118 = sphi 0, %s118
      %s120 = sphi 0, %s118
      %s121 = sphi 0, %s120
      %s135 = sphi 0, %s121
      %s141 = sphi 0, %s143
      %s144 = sphi 0, %s141
      %s145 = sphi 0, %s144
      %s161 = sphi 0, %s145
      %s167 = sphi 0, %s169
      %s170 = sphi 0, %s167
      %s171 = sphi 0, %s170
      %s187 = sphi 0, %s171
      %s193 = sphi 0, %s195
      %s196 = sphi 0, %s193
      %s197 = sphi 0, %s196
      %s213 = sphi 0, %s197
      %s219 = sphi 0, %s221
      %s222 = sphi 0, %s219
      %s223 = sphi 0, %s222
      %s239 = sphi 0, %s223
      %s245 = sphi 0, %s247
      %s248 = sphi 0, %s245
      %s249 = sphi 0, %s248
      %s265 = sphi 0, %s249
      %s271 = sphi 0, %s273
      %s274 = sphi 0, %s271
      %s275 = sphi 0, %s274
      %s291 = sphi 0, %s275
      %s297 = sphi 0, %s299
      %s300 = sphi 0, %s297
      %s301 = sphi 0, %s300
      %s317 = sphi 0, %s301
      %s323 = sphi 0, %s325
      %s326 = sphi 0, %s323
      %s327 = sphi 0, %s326
      %s343 = sphi 0, %s327
      %s349 = sphi 0, %s351
      %s352 = sphi 0, %s349
      %s353 = sphi 0, %s352
      %s369 = sphi 0, %s353
      %s375 = sphi 0, %s377
      %s378 = sphi 0, %s375
      %s379 = sphi 0, %s378
      %s395 = sphi 0, %s379
      %s401 = sphi 0, %s403
      %s404 = sphi 0, %s401
      %s405 = sphi 0, %s404
      %s421 = sphi 0, %s405
      %s427 = sphi 0, %s429
      %s430 = sphi 0, %s427
      %s431 = sphi 0, %s430
      %s447 = sphi 0, %s431
      %s453 = sphi 0, %s455
      %s456 = sphi 0, %s453
      %s457 = sphi 0, %s456
      %s473 = sphi 0, %s457
      %s477 = sphi 0, %s477
      %s479 = sphi 0, %s477
      %s480 = sphi 0, %s479
      %s494 = sphi 0, %s480
      %s498 = sphi 0, %s498
      %s500 = sphi 0, %s498
      %s501 = sphi 0, %s500
      %s515 = sphi 0, %s501
      %s519 = sphi 0, %s519
      %s521 = sphi 0, %s519
      %s522 = sphi 0, %s521
      %s536 = sphi 0, %s522
      %s540 = sphi 0, %s540
      %s542 = sphi 0, %s540
      %s543 = sphi 0, %s542
      %s557 = sphi 0, %s543
      %s563 = sphi 0, %s565
      %s566 = sphi 0, %s563
      %s567 = sphi 0, %s566
      %s583 = sphi 0, %s567
    $region4: #{bb_transformer_forward.1} parent=1 // loop_header_branch
      %33 = sbr.rel (%p31) target = $region8
    $region5: #{bb_transformer_forward.1} parent=1 // loop_body
      %s35 = ssub.s32 %s30, 1
      %s36 = ssub.s32 %s30, 2
      %s43 = sadd.s32 1, %s38
      %p44 = scmp.ge.s32.totalorder %s43, 2
      %s45 = scalar_select %p44, 0, %s43
      %s46 = sadd.s32 1, %s37
      %s47 = scalar_select %p44, %s46, %s37
      %p48 = scmp.ge.s32.totalorder %s47, 2
      %s49 = scalar_select %p48, 0, %s47
      %s50 = ssub.s32 %s37, %s49
      %p51 = scmp.eq.s32.totalorder %s50, 0
      %s53 = sadd.s32 %s52, 1
      %s54 = scalar_select %p51, %s52, %s53
      %p57 = pneg %p51
      %p58 = scmp.eq.s32.totalorder %s30, 3
      %p59 = por %p57, %p58
      %p60 = scmp.ne.s32.totalorder %s52, %s55
      %p61 = scmp.eq.s32.totalorder %s30, 0
      %p62 = por %p60, %p61
      %p63 = scmp.ne.s32.totalorder %s52, %s55
      %p64 = scmp.eq.s32.totalorder %s35, 3
      %p65 = por %p63, %p64
      %p66 = scmp.ne.s32.totalorder %s55, %s56
      %p67 = scmp.eq.s32.totalorder %s35, 0
      %p68 = por %p66, %p67
      %p69 = scmp.ne.s32.totalorder %s55, %s56
      %p70 = scmp.eq.s32.totalorder %s36, 3
      %p71 = por %p69, %p70
      %p73 = scmp.ne.s32.totalorder %s56, %s72
      %p74 = scmp.eq.s32.totalorder %s36, 0
      %p75 = por %p73, %p74
      %s77 = sadd.s32 %s76, 1
      %p80 = scmp.eq.s32.totalorder %s30, 3
      %p81 = scmp.ne.s32.totalorder %s76, %s78
      %p82 = scmp.eq.s32.totalorder %s30, 0
      %p83 = por %p81, %p82
      %p84 = scmp.ne.s32.totalorder %s76, %s78
      %p85 = scmp.eq.s32.totalorder %s35, 3
      %p86 = por %p84, %p85
      %p87 = scmp.ne.s32.totalorder %s78, %s79
      %p88 = scmp.eq.s32.totalorder %s35, 0
      %p89 = por %p87, %p88
      %p90 = scmp.ne.s32.totalorder %s78, %s79
      %p91 = scmp.eq.s32.totalorder %s36, 3
      %p92 = por %p90, %p91
      %p94 = scmp.ne.s32.totalorder %s79, %s93
      %p95 = scmp.eq.s32.totalorder %s36, 0
      %p96 = por %p94, %p95
      %s98 = sadd.s32 %s97, 1
      %p101 = scmp.eq.s32.totalorder %s30, 3
      %p102 = scmp.ne.s32.totalorder %s97, %s99
      %p103 = scmp.eq.s32.totalorder %s30, 0
      %p104 = por %p102, %p103
      %p105 = scmp.ne.s32.totalorder %s97, %s99
      %p106 = scmp.eq.s32.totalorder %s35, 3
      %p107 = por %p105, %p106
      %p108 = scmp.ne.s32.totalorder %s99, %s100
      %p109 = scmp.eq.s32.totalorder %s35, 0
      %p110 = por %p108, %p109
      %p111 = scmp.ne.s32.totalorder %s99, %s100
      %p112 = scmp.eq.s32.totalorder %s36, 3
      %p113 = por %p111, %p112
      %p115 = scmp.ne.s32.totalorder %s100, %s114
      %p116 = scmp.eq.s32.totalorder %s36, 0
      %p117 = por %p115, %p116
      %s119 = sadd.s32 %s118, 1
      %p122 = scmp.eq.s32.totalorder %s30, 3
      %p123 = scmp.ne.s32.totalorder %s118, %s120
      %p124 = scmp.eq.s32.totalorder %s30, 0
      %p125 = por %p123, %p124
      %p126 = scmp.ne.s32.totalorder %s118, %s120
      %p127 = scmp.eq.s32.totalorder %s35, 3
      %p128 = por %p126, %p127
      %p129 = scmp.ne.s32.totalorder %s120, %s121
      %p130 = scmp.eq.s32.totalorder %s35, 0
      %p131 = por %p129, %p130
      %p132 = scmp.ne.s32.totalorder %s120, %s121
      %p133 = scmp.eq.s32.totalorder %s36, 3
      %p134 = por %p132, %p133
      %p136 = scmp.ne.s32.totalorder %s121, %s135
      %p137 = scmp.eq.s32.totalorder %s36, 0
      %p138 = por %p136, %p137
      %s139 = ssub.s32 %s37, %s49
      %p140 = scmp.eq.s32.totalorder %s139, 0
      %s142 = sadd.s32 %s141, 1
      %s143 = scalar_select %p140, %s141, %s142
      %p146 = pneg %p140
      %p147 = scmp.eq.s32.totalorder %s30, 3
      %p148 = por %p146, %p147
      %p149 = scmp.ne.s32.totalorder %s141, %s144
      %p150 = scmp.eq.s32.totalorder %s30, 0
      %p151 = por %p149, %p150
      %p152 = scmp.ne.s32.totalorder %s141, %s144
      %p153 = scmp.eq.s32.totalorder %s35, 3
      %p154 = por %p152, %p153
      %p155 = scmp.ne.s32.totalorder %s144, %s145
      %p156 = scmp.eq.s32.totalorder %s35, 0
      %p157 = por %p155, %p156
      %p158 = scmp.ne.s32.totalorder %s144, %s145
      %p159 = scmp.eq.s32.totalorder %s36, 3
      %p160 = por %p158, %p159
      %p162 = scmp.ne.s32.totalorder %s145, %s161
      %p163 = scmp.eq.s32.totalorder %s36, 0
      %p164 = por %p162, %p163
      %s165 = ssub.s32 %s38, %s45
      %p166 = scmp.eq.s32.totalorder %s165, 0
      %s168 = sadd.s32 %s167, 1
      %s169 = scalar_select %p166, %s167, %s168
      %p172 = pneg %p166
      %p173 = scmp.eq.s32.totalorder %s30, 3
      %p174 = por %p172, %p173
      %p175 = scmp.ne.s32.totalorder %s167, %s170
      %p176 = scmp.eq.s32.totalorder %s30, 0
      %p177 = por %p175, %p176
      %p178 = scmp.ne.s32.totalorder %s167, %s170
      %p179 = scmp.eq.s32.totalorder %s35, 3
      %p180 = por %p178, %p179
      %p181 = scmp.ne.s32.totalorder %s170, %s171
      %p182 = scmp.eq.s32.totalorder %s35, 0
      %p183 = por %p181, %p182
      %p184 = scmp.ne.s32.totalorder %s170, %s171
      %p185 = scmp.eq.s32.totalorder %s36, 3
      %p186 = por %p184, %p185
      %p188 = scmp.ne.s32.totalorder %s171, %s187
      %p189 = scmp.eq.s32.totalorder %s36, 0
      %p190 = por %p188, %p189
      %s191 = ssub.s32 %s38, %s45
      %p192 = scmp.eq.s32.totalorder %s191, 0
      %s194 = sadd.s32 %s193, 1
      %s195 = scalar_select %p192, %s193, %s194
      %p198 = pneg %p192
      %p199 = scmp.eq.s32.totalorder %s30, 3
      %p200 = por %p198, %p199
      %p201 = scmp.ne.s32.totalorder %s193, %s196
      %p202 = scmp.eq.s32.totalorder %s30, 0
      %p203 = por %p201, %p202
      %p204 = scmp.ne.s32.totalorder %s193, %s196
      %p205 = scmp.eq.s32.totalorder %s35, 3
      %p206 = por %p204, %p205
      %p207 = scmp.ne.s32.totalorder %s196, %s197
      %p208 = scmp.eq.s32.totalorder %s35, 0
      %p209 = por %p207, %p208
      %p210 = scmp.ne.s32.totalorder %s196, %s197
      %p211 = scmp.eq.s32.totalorder %s36, 3
      %p212 = por %p210, %p211
      %p214 = scmp.ne.s32.totalorder %s197, %s213
      %p215 = scmp.eq.s32.totalorder %s36, 0
      %p216 = por %p214, %p215
      %s217 = ssub.s32 %s38, %s45
      %p218 = scmp.eq.s32.totalorder %s217, 0
      %s220 = sadd.s32 %s219, 1
      %s221 = scalar_select %p218, %s219, %s220
      %p224 = pneg %p218
      %p225 = scmp.eq.s32.totalorder %s30, 3
      %p226 = por %p224, %p225
      %p227 = scmp.ne.s32.totalorder %s219, %s222
      %p228 = scmp.eq.s32.totalorder %s30, 0
      %p229 = por %p227, %p228
      %p230 = scmp.ne.s32.totalorder %s219, %s222
      %p231 = scmp.eq.s32.totalorder %s35, 3
      %p232 = por %p230, %p231
      %p233 = scmp.ne.s32.totalorder %s222, %s223
      %p234 = scmp.eq.s32.totalorder %s35, 0
      %p235 = por %p233, %p234
      %p236 = scmp.ne.s32.totalorder %s222, %s223
      %p237 = scmp.eq.s32.totalorder %s36, 3
      %p238 = por %p236, %p237
      %p240 = scmp.ne.s32.totalorder %s223, %s239
      %p241 = scmp.eq.s32.totalorder %s36, 0
      %p242 = por %p240, %p241
      %s243 = ssub.s32 %s38, %s45
      %p244 = scmp.eq.s32.totalorder %s243, 0
      %s246 = sadd.s32 %s245, 1
      %s247 = scalar_select %p244, %s245, %s246
      %p250 = pneg %p244
      %p251 = scmp.eq.s32.totalorder %s30, 3
      %p252 = por %p250, %p251
      %p253 = scmp.ne.s32.totalorder %s245, %s248
      %p254 = scmp.eq.s32.totalorder %s30, 0
      %p255 = por %p253, %p254
      %p256 = scmp.ne.s32.totalorder %s245, %s248
      %p257 = scmp.eq.s32.totalorder %s35, 3
      %p258 = por %p256, %p257
      %p259 = scmp.ne.s32.totalorder %s248, %s249
      %p260 = scmp.eq.s32.totalorder %s35, 0
      %p261 = por %p259, %p260
      %p262 = scmp.ne.s32.totalorder %s248, %s249
      %p263 = scmp.eq.s32.totalorder %s36, 3
      %p264 = por %p262, %p263
      %p266 = scmp.ne.s32.totalorder %s249, %s265
      %p267 = scmp.eq.s32.totalorder %s36, 0
      %p268 = por %p266, %p267
      %s269 = ssub.s32 %s38, %s45
      %p270 = scmp.eq.s32.totalorder %s269, 0
      %s272 = sadd.s32 %s271, 1
      %s273 = scalar_select %p270, %s271, %s272
      %p276 = pneg %p270
      %p277 = scmp.eq.s32.totalorder %s30, 3
      %p278 = por %p276, %p277
      %p279 = scmp.ne.s32.totalorder %s271, %s274
      %p280 = scmp.eq.s32.totalorder %s30, 0
      %p281 = por %p279, %p280
      %p282 = scmp.ne.s32.totalorder %s271, %s274
      %p283 = scmp.eq.s32.totalorder %s35, 3
      %p284 = por %p282, %p283
      %p285 = scmp.ne.s32.totalorder %s274, %s275
      %p286 = scmp.eq.s32.totalorder %s35, 0
      %p287 = por %p285, %p286
      %p288 = scmp.ne.s32.totalorder %s274, %s275
      %p289 = scmp.eq.s32.totalorder %s36, 3
      %p290 = por %p288, %p289
      %p292 = scmp.ne.s32.totalorder %s275, %s291
      %p293 = scmp.eq.s32.totalorder %s36, 0
      %p294 = por %p292, %p293
      %s295 = ssub.s32 %s38, %s45
      %p296 = scmp.eq.s32.totalorder %s295, 0
      %s298 = sadd.s32 %s297, 1
      %s299 = scalar_select %p296, %s297, %s298
      %p302 = pneg %p296
      %p303 = scmp.eq.s32.totalorder %s30, 3
      %p304 = por %p302, %p303
      %p305 = scmp.ne.s32.totalorder %s297, %s300
      %p306 = scmp.eq.s32.totalorder %s30, 0
      %p307 = por %p305, %p306
      %p308 = scmp.ne.s32.totalorder %s297, %s300
      %p309 = scmp.eq.s32.totalorder %s35, 3
      %p310 = por %p308, %p309
      %p311 = scmp.ne.s32.totalorder %s300, %s301
      %p312 = scmp.eq.s32.totalorder %s35, 0
      %p313 = por %p311, %p312
      %p314 = scmp.ne.s32.totalorder %s300, %s301
      %p315 = scmp.eq.s32.totalorder %s36, 3
      %p316 = por %p314, %p315
      %p318 = scmp.ne.s32.totalorder %s301, %s317
      %p319 = scmp.eq.s32.totalorder %s36, 0
      %p320 = por %p318, %p319
      %s321 = ssub.s32 %s38, %s45
      %p322 = scmp.eq.s32.totalorder %s321, 0
      %s324 = sadd.s32 %s323, 1
      %s325 = scalar_select %p322, %s323, %s324
      %p328 = pneg %p322
      %p329 = scmp.eq.s32.totalorder %s30, 3
      %p330 = por %p328, %p329
      %p331 = scmp.ne.s32.totalorder %s323, %s326
      %p332 = scmp.eq.s32.totalorder %s30, 0
      %p333 = por %p331, %p332
      %p334 = scmp.ne.s32.totalorder %s323, %s326
      %p335 = scmp.eq.s32.totalorder %s35, 3
      %p336 = por %p334, %p335
      %p337 = scmp.ne.s32.totalorder %s326, %s327
      %p338 = scmp.eq.s32.totalorder %s35, 0
      %p339 = por %p337, %p338
      %p340 = scmp.ne.s32.totalorder %s326, %s327
      %p341 = scmp.eq.s32.totalorder %s36, 3
      %p342 = por %p340, %p341
      %p344 = scmp.ne.s32.totalorder %s327, %s343
      %p345 = scmp.eq.s32.totalorder %s36, 0
      %p346 = por %p344, %p345
      %s347 = ssub.s32 %s38, %s45
      %p348 = scmp.eq.s32.totalorder %s347, 0
      %s350 = sadd.s32 %s349, 1
      %s351 = scalar_select %p348, %s349, %s350
      %p354 = pneg %p348
      %p355 = scmp.eq.s32.totalorder %s30, 3
      %p356 = por %p354, %p355
      %p357 = scmp.ne.s32.totalorder %s349, %s352
      %p358 = scmp.eq.s32.totalorder %s30, 0
      %p359 = por %p357, %p358
      %p360 = scmp.ne.s32.totalorder %s349, %s352
      %p361 = scmp.eq.s32.totalorder %s35, 3
      %p362 = por %p360, %p361
      %p363 = scmp.ne.s32.totalorder %s352, %s353
      %p364 = scmp.eq.s32.totalorder %s35, 0
      %p365 = por %p363, %p364
      %p366 = scmp.ne.s32.totalorder %s352, %s353
      %p367 = scmp.eq.s32.totalorder %s36, 3
      %p368 = por %p366, %p367
      %p370 = scmp.ne.s32.totalorder %s353, %s369
      %p371 = scmp.eq.s32.totalorder %s36, 0
      %p372 = por %p370, %p371
      %s373 = ssub.s32 %s38, %s45
      %p374 = scmp.eq.s32.totalorder %s373, 0
      %s376 = sadd.s32 %s375, 1
      %s377 = scalar_select %p374, %s375, %s376
      %p380 = pneg %p374
      %p381 = scmp.eq.s32.totalorder %s30, 3
      %p382 = por %p380, %p381
      %p383 = scmp.ne.s32.totalorder %s375, %s378
      %p384 = scmp.eq.s32.totalorder %s30, 0
      %p385 = por %p383, %p384
      %p386 = scmp.ne.s32.totalorder %s375, %s378
      %p387 = scmp.eq.s32.totalorder %s35, 3
      %p388 = por %p386, %p387
      %p389 = scmp.ne.s32.totalorder %s378, %s379
      %p390 = scmp.eq.s32.totalorder %s35, 0
      %p391 = por %p389, %p390
      %p392 = scmp.ne.s32.totalorder %s378, %s379
      %p393 = scmp.eq.s32.totalorder %s36, 3
      %p394 = por %p392, %p393
      %p396 = scmp.ne.s32.totalorder %s379, %s395
      %p397 = scmp.eq.s32.totalorder %s36, 0
      %p398 = por %p396, %p397
      %s399 = ssub.s32 %s38, %s45
      %p400 = scmp.eq.s32.totalorder %s399, 0
      %s402 = sadd.s32 %s401, 1
      %s403 = scalar_select %p400, %s401, %s402
      %p406 = pneg %p400
      %p407 = scmp.eq.s32.totalorder %s30, 3
      %p408 = por %p406, %p407
      %p409 = scmp.ne.s32.totalorder %s401, %s404
      %p410 = scmp.eq.s32.totalorder %s30, 0
      %p411 = por %p409, %p410
      %p412 = scmp.ne.s32.totalorder %s401, %s404
      %p413 = scmp.eq.s32.totalorder %s35, 3
      %p414 = por %p412, %p413
      %p415 = scmp.ne.s32.totalorder %s404, %s405
      %p416 = scmp.eq.s32.totalorder %s35, 0
      %p417 = por %p415, %p416
      %p418 = scmp.ne.s32.totalorder %s404, %s405
      %p419 = scmp.eq.s32.totalorder %s36, 3
      %p420 = por %p418, %p419
      %p422 = scmp.ne.s32.totalorder %s405, %s421
      %p423 = scmp.eq.s32.totalorder %s36, 0
      %p424 = por %p422, %p423
      %s425 = ssub.s32 %s38, %s45
      %p426 = scmp.eq.s32.totalorder %s425, 0
      %s428 = sadd.s32 %s427, 1
      %s429 = scalar_select %p426, %s427, %s428
      %p432 = pneg %p426
      %p433 = scmp.eq.s32.totalorder %s30, 3
      %p434 = por %p432, %p433
      %p435 = scmp.ne.s32.totalorder %s427, %s430
      %p436 = scmp.eq.s32.totalorder %s30, 0
      %p437 = por %p435, %p436
      %p438 = scmp.ne.s32.totalorder %s427, %s430
      %p439 = scmp.eq.s32.totalorder %s35, 3
      %p440 = por %p438, %p439
      %p441 = scmp.ne.s32.totalorder %s430, %s431
      %p442 = scmp.eq.s32.totalorder %s35, 0
      %p443 = por %p441, %p442
      %p444 = scmp.ne.s32.totalorder %s430, %s431
      %p445 = scmp.eq.s32.totalorder %s36, 3
      %p446 = por %p444, %p445
      %p448 = scmp.ne.s32.totalorder %s431, %s447
      %p449 = scmp.eq.s32.totalorder %s36, 0
      %p450 = por %p448, %p449
      %s451 = ssub.s32 %s38, %s45
      %p452 = scmp.eq.s32.totalorder %s451, 0
      %s454 = sadd.s32 %s453, 1
      %s455 = scalar_select %p452, %s453, %s454
      %p458 = pneg %p452
      %p459 = scmp.eq.s32.totalorder %s30, 3
      %p460 = por %p458, %p459
      %p461 = scmp.ne.s32.totalorder %s453, %s456
      %p462 = scmp.eq.s32.totalorder %s30, 0
      %p463 = por %p461, %p462
      %p464 = scmp.ne.s32.totalorder %s453, %s456
      %p465 = scmp.eq.s32.totalorder %s35, 3
      %p466 = por %p464, %p465
      %p467 = scmp.ne.s32.totalorder %s456, %s457
      %p468 = scmp.eq.s32.totalorder %s35, 0
      %p469 = por %p467, %p468
      %p470 = scmp.ne.s32.totalorder %s456, %s457
      %p471 = scmp.eq.s32.totalorder %s36, 3
      %p472 = por %p470, %p471
      %p474 = scmp.ne.s32.totalorder %s457, %s473
      %p475 = scmp.eq.s32.totalorder %s36, 0
      %p476 = por %p474, %p475
      %s478 = sadd.s32 %s477, 1
      %p481 = scmp.eq.s32.totalorder %s30, 3
      %p482 = scmp.ne.s32.totalorder %s477, %s479
      %p483 = scmp.eq.s32.totalorder %s30, 0
      %p484 = por %p482, %p483
      %p485 = scmp.ne.s32.totalorder %s477, %s479
      %p486 = scmp.eq.s32.totalorder %s35, 3
      %p487 = por %p485, %p486
      %p488 = scmp.ne.s32.totalorder %s479, %s480
      %p489 = scmp.eq.s32.totalorder %s35, 0
      %p490 = por %p488, %p489
      %p491 = scmp.ne.s32.totalorder %s479, %s480
      %p492 = scmp.eq.s32.totalorder %s36, 3
      %p493 = por %p491, %p492
      %p495 = scmp.ne.s32.totalorder %s480, %s494
      %p496 = scmp.eq.s32.totalorder %s36, 0
      %p497 = por %p495, %p496
      %s499 = sadd.s32 %s498, 1
      %p502 = scmp.eq.s32.totalorder %s30, 3
      %p503 = scmp.ne.s32.totalorder %s498, %s500
      %p504 = scmp.eq.s32.totalorder %s30, 0
      %p505 = por %p503, %p504
      %p506 = scmp.ne.s32.totalorder %s498, %s500
      %p507 = scmp.eq.s32.totalorder %s35, 3
      %p508 = por %p506, %p507
      %p509 = scmp.ne.s32.totalorder %s500, %s501
      %p510 = scmp.eq.s32.totalorder %s35, 0
      %p511 = por %p509, %p510
      %p512 = scmp.ne.s32.totalorder %s500, %s501
      %p513 = scmp.eq.s32.totalorder %s36, 3
      %p514 = por %p512, %p513
      %p516 = scmp.ne.s32.totalorder %s501, %s515
      %p517 = scmp.eq.s32.totalorder %s36, 0
      %p518 = por %p516, %p517
      %s520 = sadd.s32 %s519, 1
      %p523 = scmp.eq.s32.totalorder %s30, 3
      %p524 = scmp.ne.s32.totalorder %s519, %s521
      %p525 = scmp.eq.s32.totalorder %s30, 0
      %p526 = por %p524, %p525
      %p527 = scmp.ne.s32.totalorder %s519, %s521
      %p528 = scmp.eq.s32.totalorder %s35, 3
      %p529 = por %p527, %p528
      %p530 = scmp.ne.s32.totalorder %s521, %s522
      %p531 = scmp.eq.s32.totalorder %s35, 0
      %p532 = por %p530, %p531
      %p533 = scmp.ne.s32.totalorder %s521, %s522
      %p534 = scmp.eq.s32.totalorder %s36, 3
      %p535 = por %p533, %p534
      %p537 = scmp.ne.s32.totalorder %s522, %s536
      %p538 = scmp.eq.s32.totalorder %s36, 0
      %p539 = por %p537, %p538
      %s541 = sadd.s32 %s540, 1
      %p544 = scmp.eq.s32.totalorder %s30, 3
      %p545 = scmp.ne.s32.totalorder %s540, %s542
      %p546 = scmp.eq.s32.totalorder %s30, 0
      %p547 = por %p545, %p546
      %p548 = scmp.ne.s32.totalorder %s540, %s542
      %p549 = scmp.eq.s32.totalorder %s35, 3
      %p550 = por %p548, %p549
      %p551 = scmp.ne.s32.totalorder %s542, %s543
      %p552 = scmp.eq.s32.totalorder %s35, 0
      %p553 = por %p551, %p552
      %p554 = scmp.ne.s32.totalorder %s542, %s543
      %p555 = scmp.eq.s32.totalorder %s36, 3
      %p556 = por %p554, %p555
      %p558 = scmp.ne.s32.totalorder %s543, %s557
      %p559 = scmp.eq.s32.totalorder %s36, 0
      %p560 = por %p558, %p559
      %s561 = ssub.s32 %s37, %s49
      %p562 = scmp.eq.s32.totalorder %s561, 0
      %s564 = sadd.s32 %s563, 1
      %s565 = scalar_select %p562, %s563, %s564
      %p568 = pneg %p562
      %p569 = scmp.eq.s32.totalorder %s30, 3
      %p570 = por %p568, %p569
      %p571 = scmp.ne.s32.totalorder %s563, %s566
      %p572 = scmp.eq.s32.totalorder %s30, 0
      %p573 = por %p571, %p572
      %p574 = scmp.ne.s32.totalorder %s563, %s566
      %p575 = scmp.eq.s32.totalorder %s35, 3
      %p576 = por %p574, %p575
      %p577 = scmp.ne.s32.totalorder %s566, %s567
      %p578 = scmp.eq.s32.totalorder %s35, 0
      %p579 = por %p577, %p578
      %p580 = scmp.ne.s32.totalorder %s566, %s567
      %p581 = scmp.eq.s32.totalorder %s36, 3
      %p582 = por %p580, %p581
      %p584 = scmp.ne.s32.totalorder %s567, %s583
      %p585 = scmp.eq.s32.totalorder %s36, 0
      %p586 = por %p584, %p585
      %p587 = scmp.le.s32.totalorder 1, %s30
      %p588 = scmp.lt.s32.totalorder %s30, 5
      %p589 = pnand %p587, %p588
      %p590 = pneg %p589
      // Predicated region
      $region9: #{bb_transformer_forward.1} parent=5 // pred_check
        _
      $region10: #{bb_transformer_forward.1} parent=5 // pred_check_branch
        %592 = sbr.rel (%p589) target = $region12
      $region11: #{bb_transformer_forward.1} parent=5 // pred_region
        %s593 = ssub.s32 %s30, 1
        // Predicated region
        $region13: #{bb_transformer_forward.1} parent=11 // pred_check
          %p594 = pneg %p89
        $region14: #{bb_transformer_forward.1} parent=11 // pred_check_branch
          %596 = sbr.rel (%p594) target = $region16
        $region15: #{bb_transformer_forward.1} parent=11 // pred_region
          _
        $region16: #{bb_transformer_forward.1} parent=11 // pred_fallthru
          _
        // Predicated region
        $region17: #{bb_transformer_forward.1} parent=11 // pred_check
          %p597 = pneg %p110
        $region18: #{bb_transformer_forward.1} parent=11 // pred_check_branch
          %599 = sbr.rel (%p597) target = $region20
        $region19: #{bb_transformer_forward.1} parent=11 // pred_region
          _
        $region20: #{bb_transformer_forward.1} parent=11 // pred_fallthru
          _
        // Predicated region
        $region21: #{bb_transformer_forward.1} parent=11 // pred_check
          %p600 = pneg %p131
        $region22: #{bb_transformer_forward.1} parent=11 // pred_check_branch
          %602 = sbr.rel (%p600) target = $region24
        $region23: #{bb_transformer_forward.1} parent=11 // pred_region
          _
        $region24: #{bb_transformer_forward.1} parent=11 // pred_fallthru
          _
        // Predicated region
        $region25: #{bb_transformer_forward.1} parent=11 // pred_check
          %p603 = pneg %p490
        $region26: #{bb_transformer_forward.1} parent=11 // pred_check_branch
          %605 = sbr.rel (%p603) target = $region28
        $region27: #{bb_transformer_forward.1} parent=11 // pred_region
          _
        $region28: #{bb_transformer_forward.1} parent=11 // pred_fallthru
          _
        // Predicated region
        $region29: #{bb_transformer_forward.1} parent=11 // pred_check
          %p606 = pneg %p511
        $region30: #{bb_transformer_forward.1} parent=11 // pred_check_branch
          %608 = sbr.rel (%p606) target = $region32
        $region31: #{bb_transformer_forward.1} parent=11 // pred_region
          _
        $region32: #{bb_transformer_forward.1} parent=11 // pred_fallthru
          _
        // Predicated region
        $region33: #{bb_transformer_forward.1} parent=11 // pred_check
          %p609 = pneg %p532
        $region34: #{bb_transformer_forward.1} parent=11 // pred_check_branch
          %611 = sbr.rel (%p609) target = $region36
        $region35: #{bb_transformer_forward.1} parent=11 // pred_region
          _
        $region36: #{bb_transformer_forward.1} parent=11 // pred_fallthru
          _
        // Predicated region
        $region37: #{bb_transformer_forward.1} parent=11 // pred_check
          %p612 = pneg %p553
        $region38: #{bb_transformer_forward.1} parent=11 // pred_check_branch
          %614 = sbr.rel (%p612) target = $region40
        $region39: #{bb_transformer_forward.1} parent=11 // pred_region
          _
        $region40: #{bb_transformer_forward.1} parent=11 // pred_fallthru
          _
      $region12: #{bb_transformer_forward.1} parent=5 // pred_fallthru
        _
      %p615 = scmp.lt.s32.totalorder %s30, 4
      // Predicated region
      $region41: #{bb_transformer_forward.1} parent=5 // pred_check
        %p616 = pneg %p615
      $region42: #{bb_transformer_forward.1} parent=5 // pred_check_branch
        %618 = sbr.rel (%p616) target = $region44
      $region43: #{bb_transformer_forward.1} parent=5 // pred_region
        // Predicated region
        $region45: #{bb_transformer_forward.1} parent=43 // pred_check
          %p619 = pneg %p62
        $region46: #{bb_transformer_forward.1} parent=43 // pred_check_branch
          %621 = sbr.rel (%p619) target = $region48
        $region47: #{bb_transformer_forward.1} parent=43 // pred_region
          %p622 = scmp.lt.s32.totalorder %s37, 1
          %s623 = scalar_select %p622, %s37, 1
          %s624 = smul.addr %s623, 2
          %s625 = smul.addr %s624, 4
          %s626 = scalar_lea.vmem %s0, %s625
        $region48: #{bb_transformer_forward.1} parent=43 // pred_fallthru
          _
        // Predicated region
        $region49: #{bb_transformer_forward.1} parent=43 // pred_check
          %p627 = pneg %p151
        $region50: #{bb_transformer_forward.1} parent=43 // pred_check_branch
          %629 = sbr.rel (%p627) target = $region52
        $region51: #{bb_transformer_forward.1} parent=43 // pred_region
          %p630 = scmp.lt.s32.totalorder %s37, 1
          %s631 = scalar_select %p630, %s37, 1
          %s632 = scalar_lea.vmem %s4, %s631
        $region52: #{bb_transformer_forward.1} parent=43 // pred_fallthru
          _
        // Predicated region
        $region53: #{bb_transformer_forward.1} parent=43 // pred_check
          %p633 = pneg %p177
        $region54: #{bb_transformer_forward.1} parent=43 // pred_check_branch
          %635 = sbr.rel (%p633) target = $region56
        $region55: #{bb_transformer_forward.1} parent=43 // pred_region
          %p636 = scmp.lt.s32.totalorder %s38, 1
          %s637 = scalar_select %p636, %s38, 1
          %s638 = smul.addr %s637, 4
          %s639 = smul.addr %s638, 4
          %s640 = scalar_lea.vmem %s5, %s639
        $region56: #{bb_transformer_forward.1} parent=43 // pred_fallthru
          _
        // Predicated region
        $region57: #{bb_transformer_forward.1} parent=43 // pred_check
          %p641 = pneg %p203
        $region58: #{bb_transformer_forward.1} parent=43 // pred_check_branch
          %643 = sbr.rel (%p641) target = $region60
        $region59: #{bb_transformer_forward.1} parent=43 // pred_region
          %p644 = scmp.lt.s32.totalorder %s38, 1
          %s645 = scalar_select %p644, %s38, 1
          %s646 = scalar_lea.vmem %s6, %s645
        $region60: #{bb_transformer_forward.1} parent=43 // pred_fallthru
          _
        // Predicated region
        $region61: #{bb_transformer_forward.1} parent=43 // pred_check
          %p647 = pneg %p229
        $region62: #{bb_transformer_forward.1} parent=43 // pred_check_branch
          %649 = sbr.rel (%p647) target = $region64
        $region63: #{bb_transformer_forward.1} parent=43 // pred_region
          %p650 = scmp.lt.s32.totalorder %s38, 1
          %s651 = scalar_select %p650, %s38, 1
          %s652 = smul.addr %s651, 4
          %s653 = smul.addr %s652, 4
          %s654 = scalar_lea.vmem %s7, %s653
        $region64: #{bb_transformer_forward.1} parent=43 // pred_fallthru
          _
        // Predicated region
        $region65: #{bb_transformer_forward.1} parent=43 // pred_check
          %p655 = pneg %p255
        $region66: #{bb_transformer_forward.1} parent=43 // pred_check_branch
          %657 = sbr.rel (%p655) target = $region68
        $region67: #{bb_transformer_forward.1} parent=43 // pred_region
          %p658 = scmp.lt.s32.totalorder %s38, 1
          %s659 = scalar_select %p658, %s38, 1
          %s660 = scalar_lea.vmem %s8, %s659
        $region68: #{bb_transformer_forward.1} parent=43 // pred_fallthru
          _
        // Predicated region
        $region69: #{bb_transformer_forward.1} parent=43 // pred_check
          %p661 = pneg %p281
        $region70: #{bb_transformer_forward.1} parent=43 // pred_check_branch
          %663 = sbr.rel (%p661) target = $region72
        $region71: #{bb_transformer_forward.1} parent=43 // pred_region
          %p664 = scmp.lt.s32.totalorder %s38, 1
          %s665 = scalar_select %p664, %s38, 1
          %s666 = scalar_lea.vmem %s9, %s665
        $region72: #{bb_transformer_forward.1} parent=43 // pred_fallthru
          _
        // Predicated region
        $region73: #{bb_transformer_forward.1} parent=43 // pred_check
          %p667 = pneg %p307
        $region74: #{bb_transformer_forward.1} parent=43 // pred_check_branch
          %669 = sbr.rel (%p667) target = $region76
        $region75: #{bb_transformer_forward.1} parent=43 // pred_region
          %p670 = scmp.lt.s32.totalorder %s38, 1
          %s671 = scalar_select %p670, %s38, 1
          %s672 = scalar_lea.vmem %s10, %s671
        $region76: #{bb_transformer_forward.1} parent=43 // pred_fallthru
          _
        // Predicated region
        $region77: #{bb_transformer_forward.1} parent=43 // pred_check
          %p673 = pneg %p333
        $region78: #{bb_transformer_forward.1} parent=43 // pred_check_branch
          %675 = sbr.rel (%p673) target = $region80
        $region79: #{bb_transformer_forward.1} parent=43 // pred_region
          %p676 = scmp.lt.s32.totalorder %s38, 1
          %s677 = scalar_select %p676, %s38, 1
          %s678 = scalar_lea.vmem %s11, %s677
        $region80: #{bb_transformer_forward.1} parent=43 // pred_fallthru
          _
        // Predicated region
        $region81: #{bb_transformer_forward.1} parent=43 // pred_check
          %p679 = pneg %p359
        $region82: #{bb_transformer_forward.1} parent=43 // pred_check_branch
          %681 = sbr.rel (%p679) target = $region84
        $region83: #{bb_transformer_forward.1} parent=43 // pred_region
          %p682 = scmp.lt.s32.totalorder %s38, 1
          %s683 = scalar_select %p682, %s38, 1
          %s684 = scalar_lea.vmem %s12, %s683
        $region84: #{bb_transformer_forward.1} parent=43 // pred_fallthru
          _
        // Predicated region
        $region85: #{bb_transformer_forward.1} parent=43 // pred_check
          %p685 = pneg %p385
        $region86: #{bb_transformer_forward.1} parent=43 // pred_check_branch
          %687 = sbr.rel (%p685) target = $region88
        $region87: #{bb_transformer_forward.1} parent=43 // pred_region
          %p688 = scmp.lt.s32.totalorder %s38, 1
          %s689 = scalar_select %p688, %s38, 1
          %s690 = smul.addr %s689, 64
          %s691 = smul.addr %s690, 4
          %s692 = scalar_lea.vmem %s13, %s691
        $region88: #{bb_transformer_forward.1} parent=43 // pred_fallthru
          _
        // Predicated region
        $region89: #{bb_transformer_forward.1} parent=43 // pred_check
          %p693 = pneg %p411
        $region90: #{bb_transformer_forward.1} parent=43 // pred_check_branch
          %695 = sbr.rel (%p693) target = $region92
        $region91: #{bb_transformer_forward.1} parent=43 // pred_region
          %p696 = scmp.lt.s32.totalorder %s38, 1
          %s697 = scalar_select %p696, %s38, 1
          %s698 = smul.addr %s697, 16
          %s699 = scalar_lea.vmem %s14, %s698
        $region92: #{bb_transformer_forward.1} parent=43 // pred_fallthru
          _
        // Predicated region
        $region93: #{bb_transformer_forward.1} parent=43 // pred_check
          %p700 = pneg %p437
        $region94: #{bb_transformer_forward.1} parent=43 // pred_check_branch
          %702 = sbr.rel (%p700) target = $region96
        $region95: #{bb_transformer_forward.1} parent=43 // pred_region
          %p703 = scmp.lt.s32.totalorder %s38, 1
          %s704 = scalar_select %p703, %s38, 1
          %s705 = smul.addr %s704, 256
          %s706 = smul.addr %s705, 4
          %s707 = scalar_lea.vmem %s15, %s706
        $region96: #{bb_transformer_forward.1} parent=43 // pred_fallthru
          _
        // Predicated region
        $region97: #{bb_transformer_forward.1} parent=43 // pred_check
          %p708 = pneg %p463
        $region98: #{bb_transformer_forward.1} parent=43 // pred_check_branch
          %710 = sbr.rel (%p708) target = $region100
        $region99: #{bb_transformer_forward.1} parent=43 // pred_region
          %p711 = scmp.lt.s32.totalorder %s38, 1
          %s712 = scalar_select %p711, %s38, 1
          %s713 = scalar_lea.vmem %s16, %s712
        $region100: #{bb_transformer_forward.1} parent=43 // pred_fallthru
          _
      $region44: #{bb_transformer_forward.1} parent=5 // pred_fallthru
        _
      %p714 = scmp.le.s32.totalorder 1, %s30
      %p715 = scmp.lt.s32.totalorder %s30, 5
      %p716 = pnand %p714, %p715
      %p717 = pneg %p716
      // Predicated region
      $region101: #{bb_transformer_forward.1} parent=5 // pred_check
        _
      $region102: #{bb_transformer_forward.1} parent=5 // pred_check_branch
        %719 = sbr.rel (%p716) target = $region104
      $region103: #{bb_transformer_forward.1} parent=5 // pred_region
        %s720 = ssub.s32 %s30, 1
        %p721 = scmp.lt.s32.totalorder %s39, 1
        %s722 = scalar_select %p721, %s39, 1
        %s723 = smul.addr %s722, 2
        %s724 = smul.addr %s723, 4
        %s725 = scalar_lea.vmem %s0, %s724
        %p726 = pneg %p68
        %p727 = pneg %p65
        %p728 = pneg %p89
        %p729 = pneg %p86
        %p730 = pneg %p110
        %p731 = pneg %p107
        %p732 = pneg %p131
        %p733 = pneg %p128
        %p734 = scmp.lt.s32.totalorder %s39, 1
        %s735 = scalar_select %p734, %s39, 1
        %s736 = scalar_lea.vmem %s4, %s735
        %p737 = pneg %p157
        %p738 = pneg %p154
        %p739 = scmp.lt.s32.totalorder %s40, 1
        %s740 = scalar_select %p739, %s40, 1
        %s741 = smul.addr %s740, 4
        %s742 = smul.addr %s741, 4
        %s743 = scalar_lea.vmem %s5, %s742
        %p744 = pneg %p183
        %p745 = pneg %p180
        %p746 = scmp.lt.s32.totalorder %s40, 1
        %s747 = scalar_select %p746, %s40, 1
        %s748 = scalar_lea.vmem %s6, %s747
        %p749 = pneg %p209
        %p750 = pneg %p206
        %p751 = scmp.lt.s32.totalorder %s40, 1
        %s752 = scalar_select %p751, %s40, 1
        %s753 = smul.addr %s752, 4
        %s754 = smul.addr %s753, 4
        %s755 = scalar_lea.vmem %s7, %s754
        %p756 = pneg %p235
        %p757 = pneg %p232
        %p758 = scmp.lt.s32.totalorder %s40, 1
        %s759 = scalar_select %p758, %s40, 1
        %s760 = scalar_lea.vmem %s8, %s759
        %p761 = pneg %p261
        %p762 = pneg %p258
        %p763 = scmp.lt.s32.totalorder %s40, 1
        %s764 = scalar_select %p763, %s40, 1
        %s765 = scalar_lea.vmem %s9, %s764
        %p766 = pneg %p287
        %p767 = pneg %p284
        %p768 = scmp.lt.s32.totalorder %s40, 1
        %s769 = scalar_select %p768, %s40, 1
        %s770 = scalar_lea.vmem %s10, %s769
        %p771 = pneg %p313
        %p772 = pneg %p310
        %p773 = scmp.lt.s32.totalorder %s40, 1
        %s774 = scalar_select %p773, %s40, 1
        %s775 = scalar_lea.vmem %s11, %s774
        %p776 = pneg %p339
        %p777 = pneg %p336
        %p778 = scmp.lt.s32.totalorder %s40, 1
        %s779 = scalar_select %p778, %s40, 1
        %s780 = scalar_lea.vmem %s12, %s779
        %p781 = pneg %p365
        %p782 = pneg %p362
        %p783 = scmp.lt.s32.totalorder %s40, 1
        %s784 = scalar_select %p783, %s40, 1
        %s785 = smul.addr %s784, 64
        %s786 = smul.addr %s785, 4
        %s787 = scalar_lea.vmem %s13, %s786
        %p788 = pneg %p391
        %p789 = pneg %p388
        %p790 = scmp.lt.s32.totalorder %s40, 1
        %s791 = scalar_select %p790, %s40, 1
        %s792 = smul.addr %s791, 16
        %s793 = scalar_lea.vmem %s14, %s792
        %p794 = pneg %p417
        %p795 = pneg %p414
        %p796 = scmp.lt.s32.totalorder %s40, 1
        %s797 = scalar_select %p796, %s40, 1
        %s798 = smul.addr %s797, 256
        %s799 = smul.addr %s798, 4
        %s800 = scalar_lea.vmem %s15, %s799
        %p801 = pneg %p443
        %p802 = pneg %p440
        %p803 = scmp.lt.s32.totalorder %s40, 1
        %s804 = scalar_select %p803, %s40, 1
        %s805 = scalar_lea.vmem %s16, %s804
        %p806 = pneg %p469
        %p807 = pneg %p466
        %p808 = pneg %p490
        %p809 = pneg %p487
        %p810 = pneg %p511
        %p811 = pneg %p508
        %p812 = pneg %p532
        %p813 = pneg %p529
        %p814 = pneg %p553
        %p815 = pneg %p550
        %p816 = pneg %p579
        %p817 = pneg %p576
        %s818 = sand.u32 %s566, 1
        %s819 = scalar_lea.sflag [#allocation4], %s818
        %s820 = sand.u32 %s566, 1
        %s821 = scalar_lea.vmem [#allocation3], %s820
        %p822 = scmp.lt.s32.totalorder %s39, 1
        %s823 = scalar_select %p822, %s39, 1
        %s824 = smul.addr %s823, 2
        %s825 = smul.addr %s824, 4
        %s826 = scalar_lea.vmem %s0, %s825
        %p827 = scmp.lt.s32.totalorder %s39, 1
        %s828 = scalar_select %p827, %s39, 1
        %s829 = scalar_lea.vmem %s4, %s828
        %p830 = scmp.lt.s32.totalorder %s40, 1
        %s831 = scalar_select %p830, %s40, 1
        %s832 = smul.addr %s831, 4
        %s833 = smul.addr %s832, 4
        %s834 = scalar_lea.vmem %s5, %s833
        %p835 = scmp.lt.s32.totalorder %s40, 1
        %s836 = scalar_select %p835, %s40, 1
        %s837 = scalar_lea.vmem %s6, %s836
        %p838 = scmp.lt.s32.totalorder %s40, 1
        %s839 = scalar_select %p838, %s40, 1
        %s840 = smul.addr %s839, 4
        %s841 = smul.addr %s840, 4
        %s842 = scalar_lea.vmem %s7, %s841
        %p843 = scmp.lt.s32.totalorder %s40, 1
        %s844 = scalar_select %p843, %s40, 1
        %s845 = scalar_lea.vmem %s8, %s844
        %p846 = scmp.lt.s32.totalorder %s40, 1
        %s847 = scalar_select %p846, %s40, 1
        %s848 = scalar_lea.vmem %s9, %s847
        %p849 = scmp.lt.s32.totalorder %s40, 1
        %s850 = scalar_select %p849, %s40, 1
        %s851 = scalar_lea.vmem %s10, %s850
        %p852 = scmp.lt.s32.totalorder %s40, 1
        %s853 = scalar_select %p852, %s40, 1
        %s854 = scalar_lea.vmem %s11, %s853
        %p855 = scmp.lt.s32.totalorder %s40, 1
        %s856 = scalar_select %p855, %s40, 1
        %s857 = scalar_lea.vmem %s12, %s856
        %p858 = scmp.lt.s32.totalorder %s40, 1
        %s859 = scalar_select %p858, %s40, 1
        %s860 = smul.addr %s859, 64
        %s861 = smul.addr %s860, 4
        %s862 = scalar_lea.vmem %s13, %s861
        %p863 = scmp.lt.s32.totalorder %s40, 1
        %s864 = scalar_select %p863, %s40, 1
        %s865 = smul.addr %s864, 16
        %s866 = scalar_lea.vmem %s14, %s865
        %p867 = scmp.lt.s32.totalorder %s40, 1
        %s868 = scalar_select %p867, %s40, 1
        %s869 = smul.addr %s868, 256
        %s870 = smul.addr %s869, 4
        %s871 = scalar_lea.vmem %s15, %s870
        %p872 = scmp.lt.s32.totalorder %s40, 1
        %s873 = scalar_select %p872, %s40, 1
        %s874 = scalar_lea.vmem %s16, %s873
        %p876 = scmp.eq.s32.totalorder %s40, 0
        // Predicated region
        $region105: #{bb_transformer_forward.1} parent=103 // pred_check
          %p877 = pneg %p876
        $region106: #{bb_transformer_forward.1} parent=103 // pred_check_branch
          %879 = sbr.rel (%p877) target = $region108
        $region107: #{bb_transformer_forward.1} parent=103 // pred_region
          %v880 = vld [vmem:[%s826] sm:$0xff]
          %v881 = vld [vmem:[%s1] sm:$0xf]
          %v882 = vld [vmem:[%s1 + $0x4] sm:$0xf]
          %v883 = vld [vmem:[%s1 + $0x8] sm:$0xf]
          %v884 = vld [vmem:[%s1 + $0xc] sm:$0xf]
          %v885 = vld [vmem:[%s1 + $0x10] sm:$0xf]
          %v886 = vld [vmem:[%s1 + $0x14] sm:$0xf]
          %v887 = vld [vmem:[%s1 + $0x18] sm:$0xf]
          %v888 = vld [vmem:[%s1 + $0x1c] sm:$0xf]
          %v889 = vld [vmem:[%s1 + $0x20] sm:$0xf]
          %v890 = vld [vmem:[%s1 + $0x24] sm:$0xf]
          %v891 = vld [vmem:[%s1 + $0x28] sm:$0xf]
          %v892 = vld [vmem:[%s1 + $0x2c] sm:$0xf]
          %v893 = vld [vmem:[%s1 + $0x30] sm:$0xf]
          %v894 = vld [vmem:[%s1 + $0x34] sm:$0xf]
          %v895 = vld [vmem:[%s1 + $0x38] sm:$0xf]
          %v896 = vld [vmem:[%s1 + $0x3c] sm:$0xf]
          %v897 = vld [vmem:[%s1 + $0x40] sm:$0xf]
          %v898 = vld [vmem:[%s1 + $0x44] sm:$0xf]
          %v899 = vld [vmem:[%s1 + $0x48] sm:$0xf]
          %v900 = vld [vmem:[%s1 + $0x4c] sm:$0xf]
          %v901 = vld [vmem:[%s1 + $0x50] sm:$0xf]
          %v902 = vld [vmem:[%s1 + $0x54] sm:$0xf]
          %v903 = vld [vmem:[%s1 + $0x58] sm:$0xf]
          %v904 = vld [vmem:[%s1 + $0x5c] sm:$0xf]
          %v905 = vld [vmem:[%s2] sm:$0x1]
          %v907 = vlaneseq
          %v908 = vshrl.u32 %v907, 7
          %v909 = vsub.s32 0, %v908
          %v910 = vrot.slane %v905, %v909
          %v913 = vunpack.c.l.b16 %v880
          %v914 = vunpack.c.h.b16 %v880
          %v915 = vpack.c.b16 %v913, %v913
          %v916 = vpack.c.b16 %v914, %v914
          %v942 = vunpack.c.l.b16 %v881
          %v943 = vunpack.c.l.b16 %v882
          %v944 = vunpack.c.l.b16 %v883
          %v945 = vunpack.c.l.b16 %v884
          %v946 = vunpack.c.l.b16 %v885
          %v947 = vunpack.c.l.b16 %v886
          %v948 = vunpack.c.l.b16 %v887
          %v949 = vunpack.c.l.b16 %v888
          %v950 = vunpack.c.l.b16 %v889
          %v951 = vunpack.c.l.b16 %v890
          %v952 = vunpack.c.l.b16 %v891
          %v953 = vunpack.c.l.b16 %v892
          %v954 = vunpack.c.l.b16 %v893
          %v955 = vunpack.c.l.b16 %v894
          %v956 = vunpack.c.l.b16 %v895
          %v957 = vunpack.c.l.b16 %v896
          %v958 = vunpack.c.l.b16 %v897
          %v959 = vunpack.c.l.b16 %v898
          %v960 = vunpack.c.l.b16 %v899
          %v961 = vunpack.c.l.b16 %v900
          %v962 = vunpack.c.l.b16 %v901
          %v963 = vunpack.c.l.b16 %v902
          %v964 = vunpack.c.l.b16 %v903
          %v965 = vunpack.c.l.b16 %v904
          %v966 = vpack.c.b16 %v943, %v942
          %v967 = vpack.c.b16 %v945, %v944
          %v968 = vpack.c.b16 %v947, %v946
          %v969 = vpack.c.b16 %v949, %v948
          %v970 = vpack.c.b16 %v951, %v950
          %v971 = vpack.c.b16 %v953, %v952
          %v972 = vpack.c.b16 %v955, %v954
          %v973 = vpack.c.b16 %v957, %v956
          %v974 = vpack.c.b16 %v959, %v958
          %v975 = vpack.c.b16 %v961, %v960
          %v976 = vpack.c.b16 %v963, %v962
          %v977 = vpack.c.b16 %v965, %v964
          %vm990 = vcmask 523264
          %v992 = vsel %vm990, %v916, 0
          %994 = vmatprep.subr.bf16.mxu0 0
          %995 = vmatpush1.bf16.msra.mxu0 %v966
          %996 = vmatprep.subr.bf16.mxu0 0
          %997 = vmatpush1.bf16.msra.mxu0 %v967
          %998 = vmatprep.subr.bf16.mxu0 0
          %999 = vmatpush1.bf16.msra.mxu0 %v968
          %1000 = vmatprep.subr.bf16.mxu0 0
          %1001 = vmatpush1.bf16.msra.mxu0 %v969
          %1002 = vmatprep.subr.bf16.mxu0 0
          %1003 = vmatpush1.bf16.msra.mxu0 %v970
          %1004 = vmatprep.subr.bf16.mxu0 0
          %1005 = vmatpush1.bf16.msra.mxu0 %v971
          %1006 = vmatprep.subr.bf16.mxu0 0
          %1007 = vmatpush1.bf16.msra.mxu0 %v972
          %1008 = vmatprep.subr.bf16.mxu0 0
          %1009 = vmatpush1.bf16.msra.mxu0 %v973
          %1010 = vmatprep.subr.bf16.mxu0 0
          %1011 = vmatpush1.bf16.msra.mxu0 %v974
          %1012 = vmatprep.subr.bf16.mxu0 0
          %1013 = vmatpush1.bf16.msra.mxu0 %v975
          %1014 = vmatprep.subr.bf16.mxu0 0
          %1015 = vmatpush1.bf16.msra.mxu0 %v976
          %1016 = vmatprep.subr.bf16.mxu0 0
          %1017 = vmatpush1.bf16.msra.mxu0 %v977
          %1018 = vmatprep.subr.bf16.mxu0 0
          %1019 = vmatpush1.bf16.msra.mxu0 0
          %1020 = vmatprep.subr.bf16.mxu0 0
          %1021 = vmatpush1.bf16.msra.mxu0 0
          %1022 = vmatprep.subr.bf16.mxu0 0
          %1023 = vmatpush1.bf16.msra.mxu0 0
          %1024 = vmatprep.subr.bf16.mxu0 0
          %1025 = vmatpush1.bf16.msra.mxu0 0
          %1026 = vmatprep.mubr.bf16.mxu0 %v992
          %1027 = vmatmul.mubr.bf16.gmra.mrb[0].mxu0 %v915
          %v1028 = vpop.f32.mrb[0].mxu0
          %v1029 = vadd.f32 %v910, %v1028
          %v1030 = vpop.f32.mrb[0].mxu0
          %v1031 = vpop.f32.mrb[0].mxu0
          %v1032 = vpop.f32.mrb[0].mxu0
          %1033 = vdwg.mxu0
          %v1034 = vld [vmem:[%s829] sm:$0x1]
          %v1035 = vld [vmem:[%s3] sm:$0x1]
          %v1036 = vadd.f32 %v1035, %v1034
          %vm1037 = vcmask 253952
          %1038 = vst.msk [vmem:[#allocation2] sm:$0x1] %vm1037, %v1036
          %v1040 = vlaneseq
          %v1041 = vshrl.u32 %v1040, 7
          %v1042 = vsub.s32 0, %v1041
          %v1043 = vrot.slane %v1034, %v1042
          %v1045 = vadd.f32 %v1029, %v1043
          %vm1046 = vcmask 260096
          %1047 = vst.msk [vmem:[#allocation2 + $0x1] sm:$0x7f] %vm1046, %v1045
        $region108: #{bb_transformer_forward.1} parent=103 // pred_fallthru
          _
        %v1048 = vld [vmem:[#allocation2] sm:$0xff]
        %v1049 = vpack.c.bf16 %v1048, %v1048
        %v1050 = vld [vmem:[%s834] sm:$0xf]
        %v1051 = vld [vmem:[%s834 + $0x4] sm:$0xf]
        %v1052 = vld [vmem:[%s834 + $0x8] sm:$0xf]
        %v1053 = vld [vmem:[%s834 + $0xc] sm:$0xf]
        %v1054 = vld [vmem:[%s837] sm:$0x1]
        %v1056 = vlaneseq
        %v1057 = vshrl.u32 %v1056, 7
        %v1058 = vsub.s32 0, %v1057
        %v1059 = vrot.slane %v1054, %v1058
        %v1065 = vunpack.c.l.b16 %v1050
        %v1066 = vunpack.c.l.b16 %v1051
        %v1067 = vunpack.c.l.b16 %v1052
        %v1068 = vunpack.c.l.b16 %v1053
        %v1069 = vpack.c.b16 %v1066, %v1065
        %v1070 = vpack.c.b16 %v1068, %v1067
        %vm1073 = vcmask 261120
        %v1075 = vsel %vm1073, %v1049, 0
        %1077 = vmatprep.subr.bf16.mxu0 0
        %1078 = vmatpush1.bf16.msra.mxu0 %v1069
        %1079 = vmatprep.subr.bf16.mxu0 0
        %1080 = vmatpush1.bf16.msra.mxu0 %v1070
        %1081 = vmatprep.subr.bf16.mxu0 0
        %1082 = vmatpush1.bf16.msra.mxu0 0
        %1083 = vmatprep.subr.bf16.mxu0 0
        %1084 = vmatpush1.bf16.msra.mxu0 0
        %1085 = vmatprep.subr.bf16.mxu0 0
        %1086 = vmatpush1.bf16.msra.mxu0 0
        %1087 = vmatprep.subr.bf16.mxu0 0
        %1088 = vmatpush1.bf16.msra.mxu0 0
        %1089 = vmatprep.subr.bf16.mxu0 0
        %1090 = vmatpush1.bf16.msra.mxu0 0
        %1091 = vmatprep.subr.bf16.mxu0 0
        %1092 = vmatpush1.bf16.msra.mxu0 0
        %1093 = vmatprep.subr.bf16.mxu0 0
        %1094 = vmatpush1.bf16.msra.mxu0 0
        %1095 = vmatprep.subr.bf16.mxu0 0
        %1096 = vmatpush1.bf16.msra.mxu0 0
        %1097 = vmatprep.subr.bf16.mxu0 0
        %1098 = vmatpush1.bf16.msra.mxu0 0
        %1099 = vmatprep.subr.bf16.mxu0 0
        %1100 = vmatpush1.bf16.msra.mxu0 0
        %1101 = vmatprep.subr.bf16.mxu0 0
        %1102 = vmatpush1.bf16.msra.mxu0 0
        %1103 = vmatprep.subr.bf16.mxu0 0
        %1104 = vmatpush1.bf16.msra.mxu0 0
        %1105 = vmatprep.subr.bf16.mxu0 0
        %1106 = vmatpush1.bf16.msra.mxu0 0
        %1107 = vmatprep.subr.bf16.mxu0 0
        %1108 = vmatpush1.bf16.msra.mxu0 0
        %1109 = vmatprep.mubr.bf16.mxu0 0
        %1110 = vmatmul.mubr.bf16.gmra.mrb[0].mxu0 %v1075
        %v1111 = vpop.f32.mrb[0].mxu0
        %v1112 = vadd.f32 %v1059, %v1111
        %v1113 = vpop.f32.mrb[0].mxu0
        %v1114 = vpop.f32.mrb[0].mxu0
        %v1115 = vpop.f32.mrb[0].mxu0
        %1116 = vdwg.mxu0
        %1118 = vrot.lane.b32.xlu0 %v1112, 96
        %v1119 = vpop.permute.xlu0 %1118
        %vm1120 = vcmask 64512
        %v1121 = vsel %vm1120, %v1112, 0
        %v1123 = vsel %vm1120, %v1119, 0
        %1125 = vmatprep.subr.mxu0 0.0
        %1126 = vmatpush1.xpose.msra.mxu0 %v1123
        %1127 = vmatprep.subr.mxu0 0.0
        %1128 = vmatpush1.xpose.msra.mxu0 0.0
        %1129 = vmatprep.subr.mxu0 0.0
        %1130 = vmatpush1.xpose.msra.mxu0 0.0
        %1131 = vmatprep.subr.mxu0 0.0
        %1132 = vmatpush1.xpose.msra.mxu0 0.0
        %1133 = vmatprep.subr.mxu0 0.0
        %1134 = vmatpush1.xpose.msra.mxu0 0.0
        %1135 = vmatprep.subr.mxu0 0.0
        %1136 = vmatpush1.xpose.msra.mxu0 0.0
        %1137 = vmatprep.subr.mxu0 0.0
        %1138 = vmatpush1.xpose.msra.mxu0 0.0
        %1139 = vmatprep.subr.mxu0 0.0
        %1140 = vmatpush1.xpose.msra.mxu0 0.0
        %1141 = vmatprep.subr.mxu0 0.0
        %1142 = vmatpush1.xpose.msra.mxu0 0.0
        %1143 = vmatprep.subr.mxu0 0.0
        %1144 = vmatpush1.xpose.msra.mxu0 0.0
        %1145 = vmatprep.subr.mxu0 0.0
        %1146 = vmatpush1.xpose.msra.mxu0 0.0
        %1147 = vmatprep.subr.mxu0 0.0
        %1148 = vmatpush1.xpose.msra.mxu0 0.0
        %1149 = vmatprep.subr.mxu0 0.0
        %1150 = vmatpush1.xpose.msra.mxu0 0.0
        %1151 = vmatprep.subr.mxu0 0.0
        %1152 = vmatpush1.xpose.msra.mxu0 0.0
        %1153 = vmatprep.subr.mxu0 0.0
        %1154 = vmatpush1.xpose.msra.mxu0 0.0
        %1155 = vmatprep.subr.mxu0 0.0
        %1156 = vmatpush1.xpose.msra.mxu0 0.0
        %1157 = vmatprep.subr.mxu0 0.0
        %1158 = vmatpush1.xpose.msra.mxu0 0.0
        %1159 = vmatprep.subr.mxu0 0.0
        %1160 = vmatpush1.xpose.msra.mxu0 0.0
        %1161 = vmatprep.subr.mxu0 0.0
        %1162 = vmatpush1.xpose.msra.mxu0 0.0
        %1163 = vmatprep.subr.mxu0 0.0
        %1164 = vmatpush1.xpose.msra.mxu0 0.0
        %1165 = vmatprep.subr.mxu0 0.0
        %1166 = vmatpush1.xpose.msra.mxu0 0.0
        %1167 = vmatprep.subr.mxu0 0.0
        %1168 = vmatpush1.xpose.msra.mxu0 0.0
        %1169 = vmatprep.subr.mxu0 0.0
        %1170 = vmatpush1.xpose.msra.mxu0 0.0
        %1171 = vmatprep.subr.mxu0 0.0
        %1172 = vmatpush1.xpose.msra.mxu0 0.0
        %1173 = vmatprep.subr.mxu0 0.0
        %1174 = vmatpush1.xpose.msra.mxu0 0.0
        %1175 = vmatprep.subr.mxu0 0.0
        %1176 = vmatpush1.xpose.msra.mxu0 0.0
        %1177 = vmatprep.subr.mxu0 0.0
        %1178 = vmatpush1.xpose.msra.mxu0 0.0
        %1179 = vmatprep.subr.mxu0 0.0
        %1180 = vmatpush1.xpose.msra.mxu0 0.0
        %1181 = vmatprep.subr.mxu0 0.0
        %1182 = vmatpush1.xpose.msra.mxu0 0.0
        %1183 = vmatprep.subr.mxu0 0.0
        %1184 = vmatpush1.xpose.msra.mxu0 0.0
        %1185 = vmatprep.subr.mxu0 0.0
        %1186 = vmatpush1.xpose.msra.mxu0 0.0
        %1187 = vmatprep.subr.mxu0 0.0
        %1188 = vmatpush1.xpose.msra.mxu0 0.0
        %1189 = vmatprep.mubr.f32.mxu0 0.0
        %1190 = vmatmul.mubr.f32.gmra.mrb[0].mxu0 %v1121
        %v1191 = vpop.f32.mrb[0].mxu0
        %v1192 = vadd.f32 0.0, %v1191
        %v1193 = vpop.f32.mrb[0].mxu0
        %1194 = vdwg.mxu0
        %v1195 = vmul.f32 %v1192, 0.35355338
        %v1196 = vsel %vm1120, %v1195, -inf
        %1197 = vmax.xlane.f32.xlu0 %v1196
        %v1198 = vpop.xlane.xlu0 %1197
        %v1199 = vsub.f32 %v1195, %v1198
        %v1200 = vmul.f32 %v1199, 1.442695
        %v1201 = vpow.pop %v1200
        %v1202 = vsel %vm1120, %v1201, 0.0
        %1203 = vadd.xlane.f32.xlu0 %v1202
        %v1204 = vpop.xlane.xlu0 %1203
        %v1205 = vrcp.pop %v1204
        %v1206 = vmul.f32 %v1201, %v1205
        %1207 = vrot.lane.b32.xlu0 %v1112, 64
        %v1208 = vpop.permute.xlu0 %1207
        %v1211 = vsel %vm1120, %v1206, 0
        %1213 = vmatprep.subr.mxu0 0.0
        %1214 = vmatpush1.msra.mxu0 %v1208
        %1215 = vmatprep.subr.mxu0 0.0
        %1216 = vmatpush1.msra.mxu0 0.0
        %1217 = vmatprep.subr.mxu0 0.0
        %1218 = vmatpush1.msra.mxu0 0.0
        %1219 = vmatprep.subr.mxu0 0.0
        %1220 = vmatpush1.msra.mxu0 0.0
        %1221 = vmatprep.subr.mxu0 0.0
        %1222 = vmatpush1.msra.mxu0 0.0
        %1223 = vmatprep.subr.mxu0 0.0
        %1224 = vmatpush1.msra.mxu0 0.0
        %1225 = vmatprep.subr.mxu0 0.0
        %1226 = vmatpush1.msra.mxu0 0.0
        %1227 = vmatprep.subr.mxu0 0.0
        %1228 = vmatpush1.msra.mxu0 0.0
        %1229 = vmatprep.subr.mxu0 0.0
        %1230 = vmatpush1.msra.mxu0 0.0
        %1231 = vmatprep.subr.mxu0 0.0
        %1232 = vmatpush1.msra.mxu0 0.0
        %1233 = vmatprep.subr.mxu0 0.0
        %1234 = vmatpush1.msra.mxu0 0.0
        %1235 = vmatprep.subr.mxu0 0.0
        %1236 = vmatpush1.msra.mxu0 0.0
        %1237 = vmatprep.subr.mxu0 0.0
        %1238 = vmatpush1.msra.mxu0 0.0
        %1239 = vmatprep.subr.mxu0 0.0
        %1240 = vmatpush1.msra.mxu0 0.0
        %1241 = vmatprep.subr.mxu0 0.0
        %1242 = vmatpush1.msra.mxu0 0.0
        %1243 = vmatprep.subr.mxu0 0.0
        %1244 = vmatpush1.msra.mxu0 0.0
        %1245 = vmatprep.subr.mxu0 0.0
        %1246 = vmatpush1.msra.mxu0 0.0
        %1247 = vmatprep.subr.mxu0 0.0
        %1248 = vmatpush1.msra.mxu0 0.0
        %1249 = vmatprep.subr.mxu0 0.0
        %1250 = vmatpush1.msra.mxu0 0.0
        %1251 = vmatprep.subr.mxu0 0.0
        %1252 = vmatpush1.msra.mxu0 0.0
        %1253 = vmatprep.subr.mxu0 0.0
        %1254 = vmatpush1.msra.mxu0 0.0
        %1255 = vmatprep.subr.mxu0 0.0
        %1256 = vmatpush1.msra.mxu0 0.0
        %1257 = vmatprep.subr.mxu0 0.0
        %1258 = vmatpush1.msra.mxu0 0.0
        %1259 = vmatprep.subr.mxu0 0.0
        %1260 = vmatpush1.msra.mxu0 0.0
        %1261 = vmatprep.subr.mxu0 0.0
        %1262 = vmatpush1.msra.mxu0 0.0
        %1263 = vmatprep.subr.mxu0 0.0
        %1264 = vmatpush1.msra.mxu0 0.0
        %1265 = vmatprep.subr.mxu0 0.0
        %1266 = vmatpush1.msra.mxu0 0.0
        %1267 = vmatprep.subr.mxu0 0.0
        %1268 = vmatpush1.msra.mxu0 0.0
        %1269 = vmatprep.subr.mxu0 0.0
        %1270 = vmatpush1.msra.mxu0 0.0
        %1271 = vmatprep.subr.mxu0 0.0
        %1272 = vmatpush1.msra.mxu0 0.0
        %1273 = vmatprep.subr.mxu0 0.0
        %1274 = vmatpush1.msra.mxu0 0.0
        %1275 = vmatprep.subr.mxu0 0.0
        %1276 = vmatpush1.msra.mxu0 0.0
        %1277 = vmatprep.mubr.f32.mxu0 0.0
        %1278 = vmatmul.mubr.f32.gmra.mrb[0].mxu0 %v1211
        %v1279 = vpop.f32.mrb[0].mxu0
        %v1280 = vadd.f32 0.0, %v1279
        %v1281 = vpop.f32.mrb[0].mxu0
        %1282 = vdwg.mxu0
        %1283 = vrot.lane.b32.xlu0 %v1112, 120
        %v1284 = vpop.permute.xlu0 %1283
        %1285 = vrot.lane.b32.xlu0 %v1112, 88
        %v1286 = vpop.permute.xlu0 %1285
        %v1287 = vsel %vm1120, %v1284, 0
        %v1289 = vsel %vm1120, %v1286, 0
        %1291 = vmatprep.subr.mxu0 0.0
        %1292 = vmatpush1.xpose.msra.mxu0 %v1289
        %1293 = vmatprep.subr.mxu0 0.0
        %1294 = vmatpush1.xpose.msra.mxu0 0.0
        %1295 = vmatprep.subr.mxu0 0.0
        %1296 = vmatpush1.xpose.msra.mxu0 0.0
        %1297 = vmatprep.subr.mxu0 0.0
        %1298 = vmatpush1.xpose.msra.mxu0 0.0
        %1299 = vmatprep.subr.mxu0 0.0
        %1300 = vmatpush1.xpose.msra.mxu0 0.0
        %1301 = vmatprep.subr.mxu0 0.0
        %1302 = vmatpush1.xpose.msra.mxu0 0.0
        %1303 = vmatprep.subr.mxu0 0.0
        %1304 = vmatpush1.xpose.msra.mxu0 0.0
        %1305 = vmatprep.subr.mxu0 0.0
        %1306 = vmatpush1.xpose.msra.mxu0 0.0
        %1307 = vmatprep.subr.mxu0 0.0
        %1308 = vmatpush1.xpose.msra.mxu0 0.0
        %1309 = vmatprep.subr.mxu0 0.0
        %1310 = vmatpush1.xpose.msra.mxu0 0.0
        %1311 = vmatprep.subr.mxu0 0.0
        %1312 = vmatpush1.xpose.msra.mxu0 0.0
        %1313 = vmatprep.subr.mxu0 0.0
        %1314 = vmatpush1.xpose.msra.mxu0 0.0
        %1315 = vmatprep.subr.mxu0 0.0
        %1316 = vmatpush1.xpose.msra.mxu0 0.0
        %1317 = vmatprep.subr.mxu0 0.0
        %1318 = vmatpush1.xpose.msra.mxu0 0.0
        %1319 = vmatprep.subr.mxu0 0.0
        %1320 = vmatpush1.xpose.msra.mxu0 0.0
        %1321 = vmatprep.subr.mxu0 0.0
        %1322 = vmatpush1.xpose.msra.mxu0 0.0
        %1323 = vmatprep.subr.mxu0 0.0
        %1324 = vmatpush1.xpose.msra.mxu0 0.0
        %1325 = vmatprep.subr.mxu0 0.0
        %1326 = vmatpush1.xpose.msra.mxu0 0.0
        %1327 = vmatprep.subr.mxu0 0.0
        %1328 = vmatpush1.xpose.msra.mxu0 0.0
        %1329 = vmatprep.subr.mxu0 0.0
        %1330 = vmatpush1.xpose.msra.mxu0 0.0
        %1331 = vmatprep.subr.mxu0 0.0
        %1332 = vmatpush1.xpose.msra.mxu0 0.0
        %1333 = vmatprep.subr.mxu0 0.0
        %1334 = vmatpush1.xpose.msra.mxu0 0.0
        %1335 = vmatprep.subr.mxu0 0.0
        %1336 = vmatpush1.xpose.msra.mxu0 0.0
        %1337 = vmatprep.subr.mxu0 0.0
        %1338 = vmatpush1.xpose.msra.mxu0 0.0
        %1339 = vmatprep.subr.mxu0 0.0
        %1340 = vmatpush1.xpose.msra.mxu0 0.0
        %1341 = vmatprep.subr.mxu0 0.0
        %1342 = vmatpush1.xpose.msra.mxu0 0.0
        %1343 = vmatprep.subr.mxu0 0.0
        %1344 = vmatpush1.xpose.msra.mxu0 0.0
        %1345 = vmatprep.subr.mxu0 0.0
        %1346 = vmatpush1.xpose.msra.mxu0 0.0
        %1347 = vmatprep.subr.mxu0 0.0
        %1348 = vmatpush1.xpose.msra.mxu0 0.0
        %1349 = vmatprep.subr.mxu0 0.0
        %1350 = vmatpush1.xpose.msra.mxu0 0.0
        %1351 = vmatprep.subr.mxu0 0.0
        %1352 = vmatpush1.xpose.msra.mxu0 0.0
        %1353 = vmatprep.subr.mxu0 0.0
        %1354 = vmatpush1.xpose.msra.mxu0 0.0
        %1355 = vmatprep.mubr.f32.mxu0 0.0
        %1356 = vmatmul.mubr.f32.gmra.mrb[0].mxu0 %v1287
        %v1357 = vpop.f32.mrb[0].mxu0
        %v1358 = vadd.f32 0.0, %v1357
        %v1359 = vpop.f32.mrb[0].mxu0
        %1360 = vdwg.mxu0
        %v1361 = vmul.f32 %v1358, 0.35355338
        %v1362 = vsel %vm1120, %v1361, -inf
        %1363 = vmax.xlane.f32.xlu0 %v1362
        %v1364 = vpop.xlane.xlu0 %1363
        %v1365 = vsub.f32 %v1361, %v1364
        %v1366 = vmul.f32 %v1365, 1.442695
        %v1367 = vpow.pop %v1366
        %v1368 = vsel %vm1120, %v1367, 0.0
        %1369 = vadd.xlane.f32.xlu0 %v1368
        %v1370 = vpop.xlane.xlu0 %1369
        %v1371 = vrcp.pop %v1370
        %v1372 = vmul.f32 %v1367, %v1371
        %1373 = vrot.lane.b32.xlu0 %v1112, 56
        %v1374 = vpop.permute.xlu0 %1373
        %v1377 = vsel %vm1120, %v1372, 0
        %1379 = vmatprep.subr.mxu0 0.0
        %1380 = vmatpush1.msra.mxu0 %v1374
        %1381 = vmatprep.subr.mxu0 0.0
        %1382 = vmatpush1.msra.mxu0 0.0
        %1383 = vmatprep.subr.mxu0 0.0
        %1384 = vmatpush1.msra.mxu0 0.0
        %1385 = vmatprep.subr.mxu0 0.0
        %1386 = vmatpush1.msra.mxu0 0.0
        %1387 = vmatprep.subr.mxu0 0.0
        %1388 = vmatpush1.msra.mxu0 0.0
        %1389 = vmatprep.subr.mxu0 0.0
        %1390 = vmatpush1.msra.mxu0 0.0
        %1391 = vmatprep.subr.mxu0 0.0
        %1392 = vmatpush1.msra.mxu0 0.0
        %1393 = vmatprep.subr.mxu0 0.0
        %1394 = vmatpush1.msra.mxu0 0.0
        %1395 = vmatprep.subr.mxu0 0.0
        %1396 = vmatpush1.msra.mxu0 0.0
        %1397 = vmatprep.subr.mxu0 0.0
        %1398 = vmatpush1.msra.mxu0 0.0
        %1399 = vmatprep.subr.mxu0 0.0
        %1400 = vmatpush1.msra.mxu0 0.0
        %1401 = vmatprep.subr.mxu0 0.0
        %1402 = vmatpush1.msra.mxu0 0.0
        %1403 = vmatprep.subr.mxu0 0.0
        %1404 = vmatpush1.msra.mxu0 0.0
        %1405 = vmatprep.subr.mxu0 0.0
        %1406 = vmatpush1.msra.mxu0 0.0
        %1407 = vmatprep.subr.mxu0 0.0
        %1408 = vmatpush1.msra.mxu0 0.0
        %1409 = vmatprep.subr.mxu0 0.0
        %1410 = vmatpush1.msra.mxu0 0.0
        %1411 = vmatprep.subr.mxu0 0.0
        %1412 = vmatpush1.msra.mxu0 0.0
        %1413 = vmatprep.subr.mxu0 0.0
        %1414 = vmatpush1.msra.mxu0 0.0
        %1415 = vmatprep.subr.mxu0 0.0
        %1416 = vmatpush1.msra.mxu0 0.0
        %1417 = vmatprep.subr.mxu0 0.0
        %1418 = vmatpush1.msra.mxu0 0.0
        %1419 = vmatprep.subr.mxu0 0.0
        %1420 = vmatpush1.msra.mxu0 0.0
        %1421 = vmatprep.subr.mxu0 0.0
        %1422 = vmatpush1.msra.mxu0 0.0
        %1423 = vmatprep.subr.mxu0 0.0
        %1424 = vmatpush1.msra.mxu0 0.0
        %1425 = vmatprep.subr.mxu0 0.0
        %1426 = vmatpush1.msra.mxu0 0.0
        %1427 = vmatprep.subr.mxu0 0.0
        %1428 = vmatpush1.msra.mxu0 0.0
        %1429 = vmatprep.subr.mxu0 0.0
        %1430 = vmatpush1.msra.mxu0 0.0
        %1431 = vmatprep.subr.mxu0 0.0
        %1432 = vmatpush1.msra.mxu0 0.0
        %1433 = vmatprep.subr.mxu0 0.0
        %1434 = vmatpush1.msra.mxu0 0.0
        %1435 = vmatprep.subr.mxu0 0.0
        %1436 = vmatpush1.msra.mxu0 0.0
        %1437 = vmatprep.subr.mxu0 0.0
        %1438 = vmatpush1.msra.mxu0 0.0
        %1439 = vmatprep.subr.mxu0 0.0
        %1440 = vmatpush1.msra.mxu0 0.0
        %1441 = vmatprep.subr.mxu0 0.0
        %1442 = vmatpush1.msra.mxu0 0.0
        %1443 = vmatprep.mubr.f32.mxu0 0.0
        %1444 = vmatmul.mubr.f32.gmra.mrb[0].mxu0 %v1377
        %v1445 = vpop.f32.mrb[0].mxu0
        %v1446 = vadd.f32 0.0, %v1445
        %v1447 = vpop.f32.mrb[0].mxu0
        %1448 = vdwg.mxu0
        %1449 = vrot.lane.b32.xlu0 %v1112, 112
        %v1450 = vpop.permute.xlu0 %1449
        %1451 = vrot.lane.b32.xlu0 %v1112, 80
        %v1452 = vpop.permute.xlu0 %1451
        %v1453 = vsel %vm1120, %v1450, 0
        %v1455 = vsel %vm1120, %v1452, 0
        %1457 = vmatprep.subr.mxu0 0.0
        %1458 = vmatpush1.xpose.msra.mxu0 %v1455
        %1459 = vmatprep.subr.mxu0 0.0
        %1460 = vmatpush1.xpose.msra.mxu0 0.0
        %1461 = vmatprep.subr.mxu0 0.0
        %1462 = vmatpush1.xpose.msra.mxu0 0.0
        %1463 = vmatprep.subr.mxu0 0.0
        %1464 = vmatpush1.xpose.msra.mxu0 0.0
        %1465 = vmatprep.subr.mxu0 0.0
        %1466 = vmatpush1.xpose.msra.mxu0 0.0
        %1467 = vmatprep.subr.mxu0 0.0
        %1468 = vmatpush1.xpose.msra.mxu0 0.0
        %1469 = vmatprep.subr.mxu0 0.0
        %1470 = vmatpush1.xpose.msra.mxu0 0.0
        %1471 = vmatprep.subr.mxu0 0.0
        %1472 = vmatpush1.xpose.msra.mxu0 0.0
        %1473 = vmatprep.subr.mxu0 0.0
        %1474 = vmatpush1.xpose.msra.mxu0 0.0
        %1475 = vmatprep.subr.mxu0 0.0
        %1476 = vmatpush1.xpose.msra.mxu0 0.0
        %1477 = vmatprep.subr.mxu0 0.0
        %1478 = vmatpush1.xpose.msra.mxu0 0.0
        %1479 = vmatprep.subr.mxu0 0.0
        %1480 = vmatpush1.xpose.msra.mxu0 0.0
        %1481 = vmatprep.subr.mxu0 0.0
        %1482 = vmatpush1.xpose.msra.mxu0 0.0
        %1483 = vmatprep.subr.mxu0 0.0
        %1484 = vmatpush1.xpose.msra.mxu0 0.0
        %1485 = vmatprep.subr.mxu0 0.0
        %1486 = vmatpush1.xpose.msra.mxu0 0.0
        %1487 = vmatprep.subr.mxu0 0.0
        %1488 = vmatpush1.xpose.msra.mxu0 0.0
        %1489 = vmatprep.subr.mxu0 0.0
        %1490 = vmatpush1.xpose.msra.mxu0 0.0
        %1491 = vmatprep.subr.mxu0 0.0
        %1492 = vmatpush1.xpose.msra.mxu0 0.0
        %1493 = vmatprep.subr.mxu0 0.0
        %1494 = vmatpush1.xpose.msra.mxu0 0.0
        %1495 = vmatprep.subr.mxu0 0.0
        %1496 = vmatpush1.xpose.msra.mxu0 0.0
        %1497 = vmatprep.subr.mxu0 0.0
        %1498 = vmatpush1.xpose.msra.mxu0 0.0
        %1499 = vmatprep.subr.mxu0 0.0
        %1500 = vmatpush1.xpose.msra.mxu0 0.0
        %1501 = vmatprep.subr.mxu0 0.0
        %1502 = vmatpush1.xpose.msra.mxu0 0.0
        %1503 = vmatprep.subr.mxu0 0.0
        %1504 = vmatpush1.xpose.msra.mxu0 0.0
        %1505 = vmatprep.subr.mxu0 0.0
        %1506 = vmatpush1.xpose.msra.mxu0 0.0
        %1507 = vmatprep.subr.mxu0 0.0
        %1508 = vmatpush1.xpose.msra.mxu0 0.0
        %1509 = vmatprep.subr.mxu0 0.0
        %1510 = vmatpush1.xpose.msra.mxu0 0.0
        %1511 = vmatprep.subr.mxu0 0.0
        %1512 = vmatpush1.xpose.msra.mxu0 0.0
        %1513 = vmatprep.subr.mxu0 0.0
        %1514 = vmatpush1.xpose.msra.mxu0 0.0
        %1515 = vmatprep.subr.mxu0 0.0
        %1516 = vmatpush1.xpose.msra.mxu0 0.0
        %1517 = vmatprep.subr.mxu0 0.0
        %1518 = vmatpush1.xpose.msra.mxu0 0.0
        %1519 = vmatprep.subr.mxu0 0.0
        %1520 = vmatpush1.xpose.msra.mxu0 0.0
        %1521 = vmatprep.mubr.f32.mxu0 0.0
        %1522 = vmatmul.mubr.f32.gmra.mrb[0].mxu0 %v1453
        %v1523 = vpop.f32.mrb[0].mxu0
        %v1524 = vadd.f32 0.0, %v1523
        %v1525 = vpop.f32.mrb[0].mxu0
        %1526 = vdwg.mxu0
        %v1527 = vmul.f32 %v1524, 0.35355338
        %v1528 = vsel %vm1120, %v1527, -inf
        %1529 = vmax.xlane.f32.xlu0 %v1528
        %v1530 = vpop.xlane.xlu0 %1529
        %v1531 = vsub.f32 %v1527, %v1530
        %v1532 = vmul.f32 %v1531, 1.442695
        %v1533 = vpow.pop %v1532
        %v1534 = vsel %vm1120, %v1533, 0.0
        %1535 = vadd.xlane.f32.xlu0 %v1534
        %v1536 = vpop.xlane.xlu0 %1535
        %v1537 = vrcp.pop %v1536
        %v1538 = vmul.f32 %v1533, %v1537
        %1539 = vrot.lane.b32.xlu0 %v1112, 48
        %v1540 = vpop.permute.xlu0 %1539
        %v1543 = vsel %vm1120, %v1538, 0
        %1545 = vmatprep.subr.mxu0 0.0
        %1546 = vmatpush1.msra.mxu0 %v1540
        %1547 = vmatprep.subr.mxu0 0.0
        %1548 = vmatpush1.msra.mxu0 0.0
        %1549 = vmatprep.subr.mxu0 0.0
        %1550 = vmatpush1.msra.mxu0 0.0
        %1551 = vmatprep.subr.mxu0 0.0
        %1552 = vmatpush1.msra.mxu0 0.0
        %1553 = vmatprep.subr.mxu0 0.0
        %1554 = vmatpush1.msra.mxu0 0.0
        %1555 = vmatprep.subr.mxu0 0.0
        %1556 = vmatpush1.msra.mxu0 0.0
        %1557 = vmatprep.subr.mxu0 0.0
        %1558 = vmatpush1.msra.mxu0 0.0
        %1559 = vmatprep.subr.mxu0 0.0
        %1560 = vmatpush1.msra.mxu0 0.0
        %1561 = vmatprep.subr.mxu0 0.0
        %1562 = vmatpush1.msra.mxu0 0.0
        %1563 = vmatprep.subr.mxu0 0.0
        %1564 = vmatpush1.msra.mxu0 0.0
        %1565 = vmatprep.subr.mxu0 0.0
        %1566 = vmatpush1.msra.mxu0 0.0
        %1567 = vmatprep.subr.mxu0 0.0
        %1568 = vmatpush1.msra.mxu0 0.0
        %1569 = vmatprep.subr.mxu0 0.0
        %1570 = vmatpush1.msra.mxu0 0.0
        %1571 = vmatprep.subr.mxu0 0.0
        %1572 = vmatpush1.msra.mxu0 0.0
        %1573 = vmatprep.subr.mxu0 0.0
        %1574 = vmatpush1.msra.mxu0 0.0
        %1575 = vmatprep.subr.mxu0 0.0
        %1576 = vmatpush1.msra.mxu0 0.0
        %1577 = vmatprep.subr.mxu0 0.0
        %1578 = vmatpush1.msra.mxu0 0.0
        %1579 = vmatprep.subr.mxu0 0.0
        %1580 = vmatpush1.msra.mxu0 0.0
        %1581 = vmatprep.subr.mxu0 0.0
        %1582 = vmatpush1.msra.mxu0 0.0
        %1583 = vmatprep.subr.mxu0 0.0
        %1584 = vmatpush1.msra.mxu0 0.0
        %1585 = vmatprep.subr.mxu0 0.0
        %1586 = vmatpush1.msra.mxu0 0.0
        %1587 = vmatprep.subr.mxu0 0.0
        %1588 = vmatpush1.msra.mxu0 0.0
        %1589 = vmatprep.subr.mxu0 0.0
        %1590 = vmatpush1.msra.mxu0 0.0
        %1591 = vmatprep.subr.mxu0 0.0
        %1592 = vmatpush1.msra.mxu0 0.0
        %1593 = vmatprep.subr.mxu0 0.0
        %1594 = vmatpush1.msra.mxu0 0.0
        %1595 = vmatprep.subr.mxu0 0.0
        %1596 = vmatpush1.msra.mxu0 0.0
        %1597 = vmatprep.subr.mxu0 0.0
        %1598 = vmatpush1.msra.mxu0 0.0
        %1599 = vmatprep.subr.mxu0 0.0
        %1600 = vmatpush1.msra.mxu0 0.0
        %1601 = vmatprep.subr.mxu0 0.0
        %1602 = vmatpush1.msra.mxu0 0.0
        %1603 = vmatprep.subr.mxu0 0.0
        %1604 = vmatpush1.msra.mxu0 0.0
        %1605 = vmatprep.subr.mxu0 0.0
        %1606 = vmatpush1.msra.mxu0 0.0
        %1607 = vmatprep.subr.mxu0 0.0
        %1608 = vmatpush1.msra.mxu0 0.0
        %1609 = vmatprep.mubr.f32.mxu0 0.0
        %1610 = vmatmul.mubr.f32.gmra.mrb[0].mxu0 %v1543
        %v1611 = vpop.f32.mrb[0].mxu0
        %v1612 = vadd.f32 0.0, %v1611
        %v1613 = vpop.f32.mrb[0].mxu0
        %1614 = vdwg.mxu0
        %1615 = vrot.lane.b32.xlu0 %v1112, 104
        %v1616 = vpop.permute.xlu0 %1615
        %1617 = vrot.lane.b32.xlu0 %v1112, 72
        %v1618 = vpop.permute.xlu0 %1617
        %v1619 = vsel %vm1120, %v1616, 0
        %v1621 = vsel %vm1120, %v1618, 0
        %1623 = vmatprep.subr.mxu0 0.0
        %1624 = vmatpush1.xpose.msra.mxu0 %v1621
        %1625 = vmatprep.subr.mxu0 0.0
        %1626 = vmatpush1.xpose.msra.mxu0 0.0
        %1627 = vmatprep.subr.mxu0 0.0
        %1628 = vmatpush1.xpose.msra.mxu0 0.0
        %1629 = vmatprep.subr.mxu0 0.0
        %1630 = vmatpush1.xpose.msra.mxu0 0.0
        %1631 = vmatprep.subr.mxu0 0.0
        %1632 = vmatpush1.xpose.msra.mxu0 0.0
        %1633 = vmatprep.subr.mxu0 0.0
        %1634 = vmatpush1.xpose.msra.mxu0 0.0
        %1635 = vmatprep.subr.mxu0 0.0
        %1636 = vmatpush1.xpose.msra.mxu0 0.0
        %1637 = vmatprep.subr.mxu0 0.0
        %1638 = vmatpush1.xpose.msra.mxu0 0.0
        %1639 = vmatprep.subr.mxu0 0.0
        %1640 = vmatpush1.xpose.msra.mxu0 0.0
        %1641 = vmatprep.subr.mxu0 0.0
        %1642 = vmatpush1.xpose.msra.mxu0 0.0
        %1643 = vmatprep.subr.mxu0 0.0
        %1644 = vmatpush1.xpose.msra.mxu0 0.0
        %1645 = vmatprep.subr.mxu0 0.0
        %1646 = vmatpush1.xpose.msra.mxu0 0.0
        %1647 = vmatprep.subr.mxu0 0.0
        %1648 = vmatpush1.xpose.msra.mxu0 0.0
        %1649 = vmatprep.subr.mxu0 0.0
        %1650 = vmatpush1.xpose.msra.mxu0 0.0
        %1651 = vmatprep.subr.mxu0 0.0
        %1652 = vmatpush1.xpose.msra.mxu0 0.0
        %1653 = vmatprep.subr.mxu0 0.0
        %1654 = vmatpush1.xpose.msra.mxu0 0.0
        %1655 = vmatprep.subr.mxu0 0.0
        %1656 = vmatpush1.xpose.msra.mxu0 0.0
        %1657 = vmatprep.subr.mxu0 0.0
        %1658 = vmatpush1.xpose.msra.mxu0 0.0
        %1659 = vmatprep.subr.mxu0 0.0
        %1660 = vmatpush1.xpose.msra.mxu0 0.0
        %1661 = vmatprep.subr.mxu0 0.0
        %1662 = vmatpush1.xpose.msra.mxu0 0.0
        %1663 = vmatprep.subr.mxu0 0.0
        %1664 = vmatpush1.xpose.msra.mxu0 0.0
        %1665 = vmatprep.subr.mxu0 0.0
        %1666 = vmatpush1.xpose.msra.mxu0 0.0
        %1667 = vmatprep.subr.mxu0 0.0
        %1668 = vmatpush1.xpose.msra.mxu0 0.0
        %1669 = vmatprep.subr.mxu0 0.0
        %1670 = vmatpush1.xpose.msra.mxu0 0.0
        %1671 = vmatprep.subr.mxu0 0.0
        %1672 = vmatpush1.xpose.msra.mxu0 0.0
        %1673 = vmatprep.subr.mxu0 0.0
        %1674 = vmatpush1.xpose.msra.mxu0 0.0
        %1675 = vmatprep.subr.mxu0 0.0
        %1676 = vmatpush1.xpose.msra.mxu0 0.0
        %1677 = vmatprep.subr.mxu0 0.0
        %1678 = vmatpush1.xpose.msra.mxu0 0.0
        %1679 = vmatprep.subr.mxu0 0.0
        %1680 = vmatpush1.xpose.msra.mxu0 0.0
        %1681 = vmatprep.subr.mxu0 0.0
        %1682 = vmatpush1.xpose.msra.mxu0 0.0
        %1683 = vmatprep.subr.mxu0 0.0
        %1684 = vmatpush1.xpose.msra.mxu0 0.0
        %1685 = vmatprep.subr.mxu0 0.0
        %1686 = vmatpush1.xpose.msra.mxu0 0.0
        %1687 = vmatprep.mubr.f32.mxu0 0.0
        %1688 = vmatmul.mubr.f32.gmra.mrb[0].mxu0 %v1619
        %v1689 = vpop.f32.mrb[0].mxu0
        %v1690 = vadd.f32 0.0, %v1689
        %v1691 = vpop.f32.mrb[0].mxu0
        %1692 = vdwg.mxu0
        %v1693 = vmul.f32 %v1690, 0.35355338
        %v1694 = vsel %vm1120, %v1693, -inf
        %1695 = vmax.xlane.f32.xlu0 %v1694
        %v1696 = vpop.xlane.xlu0 %1695
        %v1697 = vsub.f32 %v1693, %v1696
        %v1698 = vmul.f32 %v1697, 1.442695
        %v1699 = vpow.pop %v1698
        %v1700 = vsel %vm1120, %v1699, 0.0
        %1701 = vadd.xlane.f32.xlu0 %v1700
        %v1702 = vpop.xlane.xlu0 %1701
        %v1703 = vrcp.pop %v1702
        %v1704 = vmul.f32 %v1699, %v1703
        %1705 = vrot.lane.b32.xlu0 %v1112, 40
        %v1706 = vpop.permute.xlu0 %1705
        %v1709 = vsel %vm1120, %v1704, 0
        %1711 = vmatprep.subr.mxu0 0.0
        %1712 = vmatpush1.msra.mxu0 %v1706
        %1713 = vmatprep.subr.mxu0 0.0
        %1714 = vmatpush1.msra.mxu0 0.0
        %1715 = vmatprep.subr.mxu0 0.0
        %1716 = vmatpush1.msra.mxu0 0.0
        %1717 = vmatprep.subr.mxu0 0.0
        %1718 = vmatpush1.msra.mxu0 0.0
        %1719 = vmatprep.subr.mxu0 0.0
        %1720 = vmatpush1.msra.mxu0 0.0
        %1721 = vmatprep.subr.mxu0 0.0
        %1722 = vmatpush1.msra.mxu0 0.0
        %1723 = vmatprep.subr.mxu0 0.0
        %1724 = vmatpush1.msra.mxu0 0.0
        %1725 = vmatprep.subr.mxu0 0.0
        %1726 = vmatpush1.msra.mxu0 0.0
        %1727 = vmatprep.subr.mxu0 0.0
        %1728 = vmatpush1.msra.mxu0 0.0
        %1729 = vmatprep.subr.mxu0 0.0
        %1730 = vmatpush1.msra.mxu0 0.0
        %1731 = vmatprep.subr.mxu0 0.0
        %1732 = vmatpush1.msra.mxu0 0.0
        %1733 = vmatprep.subr.mxu0 0.0
        %1734 = vmatpush1.msra.mxu0 0.0
        %1735 = vmatprep.subr.mxu0 0.0
        %1736 = vmatpush1.msra.mxu0 0.0
        %1737 = vmatprep.subr.mxu0 0.0
        %1738 = vmatpush1.msra.mxu0 0.0
        %1739 = vmatprep.subr.mxu0 0.0
        %1740 = vmatpush1.msra.mxu0 0.0
        %1741 = vmatprep.subr.mxu0 0.0
        %1742 = vmatpush1.msra.mxu0 0.0
        %1743 = vmatprep.subr.mxu0 0.0
        %1744 = vmatpush1.msra.mxu0 0.0
        %1745 = vmatprep.subr.mxu0 0.0
        %1746 = vmatpush1.msra.mxu0 0.0
        %1747 = vmatprep.subr.mxu0 0.0
        %1748 = vmatpush1.msra.mxu0 0.0
        %1749 = vmatprep.subr.mxu0 0.0
        %1750 = vmatpush1.msra.mxu0 0.0
        %1751 = vmatprep.subr.mxu0 0.0
        %1752 = vmatpush1.msra.mxu0 0.0
        %1753 = vmatprep.subr.mxu0 0.0
        %1754 = vmatpush1.msra.mxu0 0.0
        %1755 = vmatprep.subr.mxu0 0.0
        %1756 = vmatpush1.msra.mxu0 0.0
        %1757 = vmatprep.subr.mxu0 0.0
        %1758 = vmatpush1.msra.mxu0 0.0
        %1759 = vmatprep.subr.mxu0 0.0
        %1760 = vmatpush1.msra.mxu0 0.0
        %1761 = vmatprep.subr.mxu0 0.0
        %1762 = vmatpush1.msra.mxu0 0.0
        %1763 = vmatprep.subr.mxu0 0.0
        %1764 = vmatpush1.msra.mxu0 0.0
        %1765 = vmatprep.subr.mxu0 0.0
        %1766 = vmatpush1.msra.mxu0 0.0
        %1767 = vmatprep.subr.mxu0 0.0
        %1768 = vmatpush1.msra.mxu0 0.0
        %1769 = vmatprep.subr.mxu0 0.0
        %1770 = vmatpush1.msra.mxu0 0.0
        %1771 = vmatprep.subr.mxu0 0.0
        %1772 = vmatpush1.msra.mxu0 0.0
        %1773 = vmatprep.subr.mxu0 0.0
        %1774 = vmatpush1.msra.mxu0 0.0
        %1775 = vmatprep.mubr.f32.mxu0 0.0
        %1776 = vmatmul.mubr.f32.gmra.mrb[0].mxu0 %v1709
        %v1777 = vpop.f32.mrb[0].mxu0
        %v1778 = vadd.f32 0.0, %v1777
        %v1779 = vpop.f32.mrb[0].mxu0
        %1780 = vdwg.mxu0
        %1782 = vrot.lane.b32.xlu0 %v1446, 8
        %v1783 = vpop.permute.xlu0 %1782
        %1786 = vrot.lane.b32.xlu0 %v1612, 16
        %v1787 = vpop.permute.xlu0 %1786
        %1790 = vrot.lane.b32.xlu0 %v1778, 24
        %v1791 = vpop.permute.xlu0 %1790
        %v1793 = vsel %vm1120, %v1280, %v1783
        %vm1794 = vcmask 130048
        %v1795 = vsel %vm1794, %v1793, %v1787
        %vm1796 = vcmask 195584
        %v1797 = vsel %vm1796, %v1795, %v1791
        %v1798 = vpack.c.bf16 %v1797, %v1797
        %v1799 = vld [vmem:[%s842] sm:$0xf]
        %v1800 = vld [vmem:[%s842 + $0x4] sm:$0xf]
        %v1801 = vld [vmem:[%s842 + $0x8] sm:$0xf]
        %v1802 = vld [vmem:[%s842 + $0xc] sm:$0xf]
        %v1803 = vld [vmem:[%s845] sm:$0x1]
        %v1805 = vlaneseq
        %v1806 = vshrl.u32 %v1805, 7
        %v1807 = vsub.s32 0, %v1806
        %v1808 = vrot.slane %v1803, %v1807
        %v1814 = vunpack.c.l.b16 %v1799
        %v1815 = vunpack.c.l.b16 %v1800
        %v1816 = vunpack.c.l.b16 %v1801
        %v1817 = vunpack.c.l.b16 %v1802
        %v1818 = vpack.c.b16 %v1815, %v1814
        %v1819 = vpack.c.b16 %v1817, %v1816
        %v1823 = vsel %vm1073, %v1798, 0
        %1825 = vmatprep.subr.bf16.mxu0 0
        %1826 = vmatpush1.bf16.msra.mxu0 %v1818
        %1827 = vmatprep.subr.bf16.mxu0 0
        %1828 = vmatpush1.bf16.msra.mxu0 %v1819
        %1829 = vmatprep.subr.bf16.mxu0 0
        %1830 = vmatpush1.bf16.msra.mxu0 0
        %1831 = vmatprep.subr.bf16.mxu0 0
        %1832 = vmatpush1.bf16.msra.mxu0 0
        %1833 = vmatprep.subr.bf16.mxu0 0
        %1834 = vmatpush1.bf16.msra.mxu0 0
        %1835 = vmatprep.subr.bf16.mxu0 0
        %1836 = vmatpush1.bf16.msra.mxu0 0
        %1837 = vmatprep.subr.bf16.mxu0 0
        %1838 = vmatpush1.bf16.msra.mxu0 0
        %1839 = vmatprep.subr.bf16.mxu0 0
        %1840 = vmatpush1.bf16.msra.mxu0 0
        %1841 = vmatprep.subr.bf16.mxu0 0
        %1842 = vmatpush1.bf16.msra.mxu0 0
        %1843 = vmatprep.subr.bf16.mxu0 0
        %1844 = vmatpush1.bf16.msra.mxu0 0
        %1845 = vmatprep.subr.bf16.mxu0 0
        %1846 = vmatpush1.bf16.msra.mxu0 0
        %1847 = vmatprep.subr.bf16.mxu0 0
        %1848 = vmatpush1.bf16.msra.mxu0 0
        %1849 = vmatprep.subr.bf16.mxu0 0
        %1850 = vmatpush1.bf16.msra.mxu0 0
        %1851 = vmatprep.subr.bf16.mxu0 0
        %1852 = vmatpush1.bf16.msra.mxu0 0
        %1853 = vmatprep.subr.bf16.mxu0 0
        %1854 = vmatpush1.bf16.msra.mxu0 0
        %1855 = vmatprep.subr.bf16.mxu0 0
        %1856 = vmatpush1.bf16.msra.mxu0 0
        %1857 = vmatprep.mubr.bf16.mxu0 0
        %1858 = vmatmul.mubr.bf16.gmra.mrb[0].mxu0 %v1823
        %v1859 = vpop.f32.mrb[0].mxu0
        %v1860 = vadd.f32 %v1808, %v1859
        %v1861 = vpop.f32.mrb[0].mxu0
        %v1862 = vpop.f32.mrb[0].mxu0
        %v1863 = vpop.f32.mrb[0].mxu0
        %1864 = vdwg.mxu0
        %v1865 = vadd.f32 %v1048, %v1860
        %v1866 = vld [vmem:[%s848] sm:$0x1]
        %v1867 = vld [vmem:[%s851] sm:$0x1]
        %v1868 = vsel %vm1073, %v1865, 0.0
        %1869 = vadd.xlane.f32.xlu0 %v1868
        %v1870 = vpop.xlane.xlu0 %1869
        %v1871 = vrcp.pop 32.0
        %v1872 = vmul.f32 %v1870, %v1871
        %v1873 = vsub.f32 %v1865, %v1872
        %v1874 = vmul.f32 %v1873, %v1873
        %v1875 = vsel %vm1073, %v1874, 0.0
        %1876 = vadd.xlane.f32.xlu0 %v1875
        %v1877 = vpop.xlane.xlu0 %1876
        %v1878 = vmul.f32 %v1877, %v1871
        %v1879 = vadd.f32 %v1878, 1e-05
        %v1880 = vrsqrt.pop %v1879
        %v1881 = vmul.f32 %v1873, %v1880
        %v1883 = vlaneseq
        %v1884 = vshrl.u32 %v1883, 7
        %v1885 = vsub.s32 0, %v1884
        %v1886 = vrot.slane %v1866, %v1885
        %v1888 = vmul.f32 %v1881, %v1886
        %v1890 = vlaneseq
        %v1891 = vshrl.u32 %v1890, 7
        %v1892 = vsub.s32 0, %v1891
        %v1893 = vrot.slane %v1867, %v1892
        %v1895 = vadd.f32 %v1888, %v1893
        %v1896 = vpack.c.bf16 %v1895, %v1895
        %v1897 = vld [vmem:[%s862] sm:$0xff]
        %v1898 = vld [vmem:[%s862 + $0x8] sm:$0xff]
        %v1899 = vld [vmem:[%s862 + $0x10] sm:$0xff]
        %v1900 = vld [vmem:[%s862 + $0x18] sm:$0xff]
        %v1901 = vld [vmem:[%s862 + $0x20] sm:$0xff]
        %v1902 = vld [vmem:[%s862 + $0x28] sm:$0xff]
        %v1903 = vld [vmem:[%s862 + $0x30] sm:$0xff]
        %v1904 = vld [vmem:[%s862 + $0x38] sm:$0xff]
        %v1905 = vld [vmem:[%s862 + $0x40] sm:$0xff]
        %v1906 = vld [vmem:[%s862 + $0x48] sm:$0xff]
        %v1907 = vld [vmem:[%s862 + $0x50] sm:$0xff]
        %v1908 = vld [vmem:[%s862 + $0x58] sm:$0xff]
        %v1909 = vld [vmem:[%s862 + $0x60] sm:$0xff]
        %v1910 = vld [vmem:[%s862 + $0x68] sm:$0xff]
        %v1911 = vld [vmem:[%s862 + $0x70] sm:$0xff]
        %v1912 = vld [vmem:[%s862 + $0x78] sm:$0xff]
        %v1913 = vld [vmem:[%s862 + $0x80] sm:$0xff]
        %v1914 = vld [vmem:[%s862 + $0x88] sm:$0xff]
        %v1915 = vld [vmem:[%s862 + $0x90] sm:$0xff]
        %v1916 = vld [vmem:[%s862 + $0x98] sm:$0xff]
        %v1917 = vld [vmem:[%s862 + $0xa0] sm:$0xff]
        %v1918 = vld [vmem:[%s862 + $0xa8] sm:$0xff]
        %v1919 = vld [vmem:[%s862 + $0xb0] sm:$0xff]
        %v1920 = vld [vmem:[%s862 + $0xb8] sm:$0xff]
        %v1921 = vld [vmem:[%s862 + $0xc0] sm:$0xff]
        %v1922 = vld [vmem:[%s862 + $0xc8] sm:$0xff]
        %v1923 = vld [vmem:[%s862 + $0xd0] sm:$0xff]
        %v1924 = vld [vmem:[%s862 + $0xd8] sm:$0xff]
        %v1925 = vld [vmem:[%s862 + $0xe0] sm:$0xff]
        %v1926 = vld [vmem:[%s862 + $0xe8] sm:$0xff]
        %v1927 = vld [vmem:[%s862 + $0xf0] sm:$0xff]
        %v1928 = vld [vmem:[%s862 + $0xf8] sm:$0xff]
        %v1929 = vld [vmem:[%s866] sm:$0xff]
        %v1930 = vld [vmem:[%s866 + $0x8] sm:$0xff]
        %v1933 = vlaneseq
        %v1934 = vshrl.u32 %v1933, 7
        %v1935 = vsub.s32 0, %v1934
        %v1936 = vrot.slane %v1929, %v1935
        %v1937 = vlaneseq
        %v1938 = vshrl.u32 %v1937, 7
        %v1939 = vsub.s32 1, %v1938
        %v1940 = vrot.slane %v1929, %v1939
        %v1941 = vlaneseq
        %v1942 = vshrl.u32 %v1941, 7
        %v1943 = vsub.s32 2, %v1942
        %v1944 = vrot.slane %v1929, %v1943
        %v1945 = vlaneseq
        %v1946 = vshrl.u32 %v1945, 7
        %v1947 = vsub.s32 3, %v1946
        %v1948 = vrot.slane %v1929, %v1947
        %v1949 = vlaneseq
        %v1950 = vshrl.u32 %v1949, 7
        %v1951 = vsub.s32 4, %v1950
        %v1952 = vrot.slane %v1929, %v1951
        %v1953 = vlaneseq
        %v1954 = vshrl.u32 %v1953, 7
        %v1955 = vsub.s32 5, %v1954
        %v1956 = vrot.slane %v1929, %v1955
        %v1957 = vlaneseq
        %v1958 = vshrl.u32 %v1957, 7
        %v1959 = vsub.s32 6, %v1958
        %v1960 = vrot.slane %v1929, %v1959
        %v1961 = vlaneseq
        %v1962 = vshrl.u32 %v1961, 7
        %v1963 = vsub.s32 7, %v1962
        %v1964 = vrot.slane %v1929, %v1963
        %v1965 = vlaneseq
        %v1966 = vshrl.u32 %v1965, 7
        %v1967 = vsub.s32 0, %v1966
        %v1968 = vrot.slane %v1930, %v1967
        %v1969 = vlaneseq
        %v1970 = vshrl.u32 %v1969, 7
        %v1971 = vsub.s32 1, %v1970
        %v1972 = vrot.slane %v1930, %v1971
        %v1973 = vlaneseq
        %v1974 = vshrl.u32 %v1973, 7
        %v1975 = vsub.s32 2, %v1974
        %v1976 = vrot.slane %v1930, %v1975
        %v1977 = vlaneseq
        %v1978 = vshrl.u32 %v1977, 7
        %v1979 = vsub.s32 3, %v1978
        %v1980 = vrot.slane %v1930, %v1979
        %v1981 = vlaneseq
        %v1982 = vshrl.u32 %v1981, 7
        %v1983 = vsub.s32 4, %v1982
        %v1984 = vrot.slane %v1930, %v1983
        %v1985 = vlaneseq
        %v1986 = vshrl.u32 %v1985, 7
        %v1987 = vsub.s32 5, %v1986
        %v1988 = vrot.slane %v1930, %v1987
        %v1989 = vlaneseq
        %v1990 = vshrl.u32 %v1989, 7
        %v1991 = vsub.s32 6, %v1990
        %v1992 = vrot.slane %v1930, %v1991
        %v1993 = vlaneseq
        %v1994 = vshrl.u32 %v1993, 7
        %v1995 = vsub.s32 7, %v1994
        %v1996 = vrot.slane %v1930, %v1995
        %v2045 = vunpack.c.l.b16 %v1897
        %v2046 = vunpack.c.h.b16 %v1897
        %v2047 = vunpack.c.l.b16 %v1898
        %v2048 = vunpack.c.h.b16 %v1898
        %v2049 = vunpack.c.l.b16 %v1899
        %v2050 = vunpack.c.h.b16 %v1899
        %v2051 = vunpack.c.l.b16 %v1900
        %v2052 = vunpack.c.h.b16 %v1900
        %v2053 = vunpack.c.l.b16 %v1901
        %v2054 = vunpack.c.h.b16 %v1901
        %v2055 = vunpack.c.l.b16 %v1902
        %v2056 = vunpack.c.h.b16 %v1902
        %v2057 = vunpack.c.l.b16 %v1903
        %v2058 = vunpack.c.h.b16 %v1903
        %v2059 = vunpack.c.l.b16 %v1904
        %v2060 = vunpack.c.h.b16 %v1904
        %v2061 = vunpack.c.l.b16 %v1905
        %v2062 = vunpack.c.h.b16 %v1905
        %v2063 = vunpack.c.l.b16 %v1906
        %v2064 = vunpack.c.h.b16 %v1906
        %v2065 = vunpack.c.l.b16 %v1907
        %v2066 = vunpack.c.h.b16 %v1907
        %v2067 = vunpack.c.l.b16 %v1908
        %v2068 = vunpack.c.h.b16 %v1908
        %v2069 = vunpack.c.l.b16 %v1909
        %v2070 = vunpack.c.h.b16 %v1909
        %v2071 = vunpack.c.l.b16 %v1910
        %v2072 = vunpack.c.h.b16 %v1910
        %v2073 = vunpack.c.l.b16 %v1911
        %v2074 = vunpack.c.h.b16 %v1911
        %v2075 = vunpack.c.l.b16 %v1912
        %v2076 = vunpack.c.h.b16 %v1912
        %v2077 = vunpack.c.l.b16 %v1913
        %v2078 = vunpack.c.h.b16 %v1913
        %v2079 = vunpack.c.l.b16 %v1914
        %v2080 = vunpack.c.h.b16 %v1914
        %v2081 = vunpack.c.l.b16 %v1915
        %v2082 = vunpack.c.h.b16 %v1915
        %v2083 = vunpack.c.l.b16 %v1916
        %v2084 = vunpack.c.h.b16 %v1916
        %v2085 = vunpack.c.l.b16 %v1917
        %v2086 = vunpack.c.h.b16 %v1917
        %v2087 = vunpack.c.l.b16 %v1918
        %v2088 = vunpack.c.h.b16 %v1918
        %v2089 = vunpack.c.l.b16 %v1919
        %v2090 = vunpack.c.h.b16 %v1919
        %v2091 = vunpack.c.l.b16 %v1920
        %v2092 = vunpack.c.h.b16 %v1920
        %v2093 = vunpack.c.l.b16 %v1921
        %v2094 = vunpack.c.h.b16 %v1921
        %v2095 = vunpack.c.l.b16 %v1922
        %v2096 = vunpack.c.h.b16 %v1922
        %v2097 = vunpack.c.l.b16 %v1923
        %v2098 = vunpack.c.h.b16 %v1923
        %v2099 = vunpack.c.l.b16 %v1924
        %v2100 = vunpack.c.h.b16 %v1924
        %v2101 = vunpack.c.l.b16 %v1925
        %v2102 = vunpack.c.h.b16 %v1925
        %v2103 = vunpack.c.l.b16 %v1926
        %v2104 = vunpack.c.h.b16 %v1926
        %v2105 = vunpack.c.l.b16 %v1927
        %v2106 = vunpack.c.h.b16 %v1927
        %v2107 = vunpack.c.l.b16 %v1928
        %v2108 = vunpack.c.h.b16 %v1928
        %v2109 = vpack.c.b16 %v2061, %v2045
        %v2110 = vpack.c.b16 %v2062, %v2046
        %v2111 = vpack.c.b16 %v2063, %v2047
        %v2112 = vpack.c.b16 %v2064, %v2048
        %v2113 = vpack.c.b16 %v2065, %v2049
        %v2114 = vpack.c.b16 %v2066, %v2050
        %v2115 = vpack.c.b16 %v2067, %v2051
        %v2116 = vpack.c.b16 %v2068, %v2052
        %v2117 = vpack.c.b16 %v2069, %v2053
        %v2118 = vpack.c.b16 %v2070, %v2054
        %v2119 = vpack.c.b16 %v2071, %v2055
        %v2120 = vpack.c.b16 %v2072, %v2056
        %v2121 = vpack.c.b16 %v2073, %v2057
        %v2122 = vpack.c.b16 %v2074, %v2058
        %v2123 = vpack.c.b16 %v2075, %v2059
        %v2124 = vpack.c.b16 %v2076, %v2060
        %v2125 = vpack.c.b16 %v2093, %v2077
        %v2126 = vpack.c.b16 %v2094, %v2078
        %v2127 = vpack.c.b16 %v2095, %v2079
        %v2128 = vpack.c.b16 %v2096, %v2080
        %v2129 = vpack.c.b16 %v2097, %v2081
        %v2130 = vpack.c.b16 %v2098, %v2082
        %v2131 = vpack.c.b16 %v2099, %v2083
        %v2132 = vpack.c.b16 %v2100, %v2084
        %v2133 = vpack.c.b16 %v2101, %v2085
        %v2134 = vpack.c.b16 %v2102, %v2086
        %v2135 = vpack.c.b16 %v2103, %v2087
        %v2136 = vpack.c.b16 %v2104, %v2088
        %v2137 = vpack.c.b16 %v2105, %v2089
        %v2138 = vpack.c.b16 %v2106, %v2090
        %v2139 = vpack.c.b16 %v2107, %v2091
        %v2140 = vpack.c.b16 %v2108, %v2092
        %v2174 = vsel %vm1073, %v1896, 0
        %2176 = vmatprep.subr.bf16.mxu0 %v2110
        %2177 = vmatpush1.bf16.msra.mxu0 %v2109
        %2178 = vmatprep.subr.bf16.mxu0 %v2126
        %2179 = vmatpush1.bf16.msra.mxu0 %v2125
        %2180 = vmatprep.subr.bf16.mxu0 0
        %2181 = vmatpush1.bf16.msra.mxu0 0
        %2182 = vmatprep.subr.bf16.mxu0 0
        %2183 = vmatpush1.bf16.msra.mxu0 0
        %2184 = vmatprep.subr.bf16.mxu0 0
        %2185 = vmatpush1.bf16.msra.mxu0 0
        %2186 = vmatprep.subr.bf16.mxu0 0
        %2187 = vmatpush1.bf16.msra.mxu0 0
        %2188 = vmatprep.subr.bf16.mxu0 0
        %2189 = vmatpush1.bf16.msra.mxu0 0
        %2190 = vmatprep.subr.bf16.mxu0 0
        %2191 = vmatpush1.bf16.msra.mxu0 0
        %2192 = vmatprep.subr.bf16.mxu0 0
        %2193 = vmatpush1.bf16.msra.mxu0 0
        %2194 = vmatprep.subr.bf16.mxu0 0
        %2195 = vmatpush1.bf16.msra.mxu0 0
        %2196 = vmatprep.subr.bf16.mxu0 0
        %2197 = vmatpush1.bf16.msra.mxu0 0
        %2198 = vmatprep.subr.bf16.mxu0 0
        %2199 = vmatpush1.bf16.msra.mxu0 0
        %2200 = vmatprep.subr.bf16.mxu0 0
        %2201 = vmatpush1.bf16.msra.mxu0 0
        %2202 = vmatprep.subr.bf16.mxu0 0
        %2203 = vmatpush1.bf16.msra.mxu0 0
        %2204 = vmatprep.subr.bf16.mxu0 0
        %2205 = vmatpush1.bf16.msra.mxu0 0
        %2206 = vmatprep.subr.bf16.mxu0 0
        %2207 = vmatpush1.bf16.msra.mxu0 0
        %2208 = vmatprep.mubr.bf16.mxu0 0
        %2209 = vmatmul.mubr.bf16.gmra.mrb[0].mxu0 %v2174
        %v2210 = vpop.f32.mrb[0].mxu0
        %v2211 = vadd.f32 %v1936, %v2210
        %v2212 = vpop.f32.mrb[0].mxu0
        %v2213 = vadd.f32 %v1940, %v2212
        %v2214 = vpop.f32.mrb[0].mxu0
        %v2215 = vpop.f32.mrb[0].mxu0
        %2216 = vdwg.mxu0
        %2217 = vmatprep.subr.bf16.mxu0 %v2112
        %2218 = vmatpush1.bf16.msra.mxu0 %v2111
        %2219 = vmatprep.subr.bf16.mxu0 %v2128
        %2220 = vmatpush1.bf16.msra.mxu0 %v2127
        %2221 = vmatprep.subr.bf16.mxu0 0
        %2222 = vmatpush1.bf16.msra.mxu0 0
        %2223 = vmatprep.subr.bf16.mxu0 0
        %2224 = vmatpush1.bf16.msra.mxu0 0
        %2225 = vmatprep.subr.bf16.mxu0 0
        %2226 = vmatpush1.bf16.msra.mxu0 0
        %2227 = vmatprep.subr.bf16.mxu0 0
        %2228 = vmatpush1.bf16.msra.mxu0 0
        %2229 = vmatprep.subr.bf16.mxu0 0
        %2230 = vmatpush1.bf16.msra.mxu0 0
        %2231 = vmatprep.subr.bf16.mxu0 0
        %2232 = vmatpush1.bf16.msra.mxu0 0
        %2233 = vmatprep.subr.bf16.mxu0 0
        %2234 = vmatpush1.bf16.msra.mxu0 0
        %2235 = vmatprep.subr.bf16.mxu0 0
        %2236 = vmatpush1.bf16.msra.mxu0 0
        %2237 = vmatprep.subr.bf16.mxu0 0
        %2238 = vmatpush1.bf16.msra.mxu0 0
        %2239 = vmatprep.subr.bf16.mxu0 0
        %2240 = vmatpush1.bf16.msra.mxu0 0
        %2241 = vmatprep.subr.bf16.mxu0 0
        %2242 = vmatpush1.bf16.msra.mxu0 0
        %2243 = vmatprep.subr.bf16.mxu0 0
        %2244 = vmatpush1.bf16.msra.mxu0 0
        %2245 = vmatprep.subr.bf16.mxu0 0
        %2246 = vmatpush1.bf16.msra.mxu0 0
        %2247 = vmatprep.subr.bf16.mxu0 0
        %2248 = vmatpush1.bf16.msra.mxu0 0
        %2249 = vmatprep.mubr.bf16.mxu0 0
        %2250 = vmatmul.mubr.bf16.gmra.mrb[0].mxu0 %v2174
        %v2251 = vpop.f32.mrb[0].mxu0
        %v2252 = vadd.f32 %v1944, %v2251
        %v2253 = vpop.f32.mrb[0].mxu0
        %v2254 = vadd.f32 %v1948, %v2253
        %v2255 = vpop.f32.mrb[0].mxu0
        %v2256 = vpop.f32.mrb[0].mxu0
        %2257 = vdwg.mxu0
        %2258 = vmatprep.subr.bf16.mxu0 %v2114
        %2259 = vmatpush1.bf16.msra.mxu0 %v2113
        %2260 = vmatprep.subr.bf16.mxu0 %v2130
        %2261 = vmatpush1.bf16.msra.mxu0 %v2129
        %2262 = vmatprep.subr.bf16.mxu0 0
        %2263 = vmatpush1.bf16.msra.mxu0 0
        %2264 = vmatprep.subr.bf16.mxu0 0
        %2265 = vmatpush1.bf16.msra.mxu0 0
        %2266 = vmatprep.subr.bf16.mxu0 0
        %2267 = vmatpush1.bf16.msra.mxu0 0
        %2268 = vmatprep.subr.bf16.mxu0 0
        %2269 = vmatpush1.bf16.msra.mxu0 0
        %2270 = vmatprep.subr.bf16.mxu0 0
        %2271 = vmatpush1.bf16.msra.mxu0 0
        %2272 = vmatprep.subr.bf16.mxu0 0
        %2273 = vmatpush1.bf16.msra.mxu0 0
        %2274 = vmatprep.subr.bf16.mxu0 0
        %2275 = vmatpush1.bf16.msra.mxu0 0
        %2276 = vmatprep.subr.bf16.mxu0 0
        %2277 = vmatpush1.bf16.msra.mxu0 0
        %2278 = vmatprep.subr.bf16.mxu0 0
        %2279 = vmatpush1.bf16.msra.mxu0 0
        %2280 = vmatprep.subr.bf16.mxu0 0
        %2281 = vmatpush1.bf16.msra.mxu0 0
        %2282 = vmatprep.subr.bf16.mxu0 0
        %2283 = vmatpush1.bf16.msra.mxu0 0
        %2284 = vmatprep.subr.bf16.mxu0 0
        %2285 = vmatpush1.bf16.msra.mxu0 0
        %2286 = vmatprep.subr.bf16.mxu0 0
        %2287 = vmatpush1.bf16.msra.mxu0 0
        %2288 = vmatprep.subr.bf16.mxu0 0
        %2289 = vmatpush1.bf16.msra.mxu0 0
        %2290 = vmatprep.mubr.bf16.mxu0 0
        %2291 = vmatmul.mubr.bf16.gmra.mrb[0].mxu0 %v2174
        %v2292 = vpop.f32.mrb[0].mxu0
        %v2293 = vadd.f32 %v1952, %v2292
        %v2294 = vpop.f32.mrb[0].mxu0
        %v2295 = vadd.f32 %v1956, %v2294
        %v2296 = vpop.f32.mrb[0].mxu0
        %v2297 = vpop.f32.mrb[0].mxu0
        %2298 = vdwg.mxu0
        %2299 = vmatprep.subr.bf16.mxu0 %v2116
        %2300 = vmatpush1.bf16.msra.mxu0 %v2115
        %2301 = vmatprep.subr.bf16.mxu0 %v2132
        %2302 = vmatpush1.bf16.msra.mxu0 %v2131
        %2303 = vmatprep.subr.bf16.mxu0 0
        %2304 = vmatpush1.bf16.msra.mxu0 0
        %2305 = vmatprep.subr.bf16.mxu0 0
        %2306 = vmatpush1.bf16.msra.mxu0 0
        %2307 = vmatprep.subr.bf16.mxu0 0
        %2308 = vmatpush1.bf16.msra.mxu0 0
        %2309 = vmatprep.subr.bf16.mxu0 0
        %2310 = vmatpush1.bf16.msra.mxu0 0
        %2311 = vmatprep.subr.bf16.mxu0 0
        %2312 = vmatpush1.bf16.msra.mxu0 0
        %2313 = vmatprep.subr.bf16.mxu0 0
        %2314 = vmatpush1.bf16.msra.mxu0 0
        %2315 = vmatprep.subr.bf16.mxu0 0
        %2316 = vmatpush1.bf16.msra.mxu0 0
        %2317 = vmatprep.subr.bf16.mxu0 0
        %2318 = vmatpush1.bf16.msra.mxu0 0
        %2319 = vmatprep.subr.bf16.mxu0 0
        %2320 = vmatpush1.bf16.msra.mxu0 0
        %2321 = vmatprep.subr.bf16.mxu0 0
        %2322 = vmatpush1.bf16.msra.mxu0 0
        %2323 = vmatprep.subr.bf16.mxu0 0
        %2324 = vmatpush1.bf16.msra.mxu0 0
        %2325 = vmatprep.subr.bf16.mxu0 0
        %2326 = vmatpush1.bf16.msra.mxu0 0
        %2327 = vmatprep.subr.bf16.mxu0 0
        %2328 = vmatpush1.bf16.msra.mxu0 0
        %2329 = vmatprep.subr.bf16.mxu0 0
        %2330 = vmatpush1.bf16.msra.mxu0 0
        %2331 = vmatprep.mubr.bf16.mxu0 0
        %2332 = vmatmul.mubr.bf16.gmra.mrb[0].mxu0 %v2174
        %v2333 = vpop.f32.mrb[0].mxu0
        %v2334 = vadd.f32 %v1960, %v2333
        %v2335 = vpop.f32.mrb[0].mxu0
        %v2336 = vadd.f32 %v1964, %v2335
        %v2337 = vpop.f32.mrb[0].mxu0
        %v2338 = vpop.f32.mrb[0].mxu0
        %2339 = vdwg.mxu0
        %2340 = vmatprep.subr.bf16.mxu0 %v2118
        %2341 = vmatpush1.bf16.msra.mxu0 %v2117
        %2342 = vmatprep.subr.bf16.mxu0 %v2134
        %2343 = vmatpush1.bf16.msra.mxu0 %v2133
        %2344 = vmatprep.subr.bf16.mxu0 0
        %2345 = vmatpush1.bf16.msra.mxu0 0
        %2346 = vmatprep.subr.bf16.mxu0 0
        %2347 = vmatpush1.bf16.msra.mxu0 0
        %2348 = vmatprep.subr.bf16.mxu0 0
        %2349 = vmatpush1.bf16.msra.mxu0 0
        %2350 = vmatprep.subr.bf16.mxu0 0
        %2351 = vmatpush1.bf16.msra.mxu0 0
        %2352 = vmatprep.subr.bf16.mxu0 0
        %2353 = vmatpush1.bf16.msra.mxu0 0
        %2354 = vmatprep.subr.bf16.mxu0 0
        %2355 = vmatpush1.bf16.msra.mxu0 0
        %2356 = vmatprep.subr.bf16.mxu0 0
        %2357 = vmatpush1.bf16.msra.mxu0 0
        %2358 = vmatprep.subr.bf16.mxu0 0
        %2359 = vmatpush1.bf16.msra.mxu0 0
        %2360 = vmatprep.subr.bf16.mxu0 0
        %2361 = vmatpush1.bf16.msra.mxu0 0
        %2362 = vmatprep.subr.bf16.mxu0 0
        %2363 = vmatpush1.bf16.msra.mxu0 0
        %2364 = vmatprep.subr.bf16.mxu0 0
        %2365 = vmatpush1.bf16.msra.mxu0 0
        %2366 = vmatprep.subr.bf16.mxu0 0
        %2367 = vmatpush1.bf16.msra.mxu0 0
        %2368 = vmatprep.subr.bf16.mxu0 0
        %2369 = vmatpush1.bf16.msra.mxu0 0
        %2370 = vmatprep.subr.bf16.mxu0 0
        %2371 = vmatpush1.bf16.msra.mxu0 0
        %2372 = vmatprep.mubr.bf16.mxu0 0
        %2373 = vmatmul.mubr.bf16.gmra.mrb[0].mxu0 %v2174
        %v2374 = vpop.f32.mrb[0].mxu0
        %v2375 = vadd.f32 %v1968, %v2374
        %v2376 = vpop.f32.mrb[0].mxu0
        %v2377 = vadd.f32 %v1972, %v2376
        %v2378 = vpop.f32.mrb[0].mxu0
        %v2379 = vpop.f32.mrb[0].mxu0
        %2380 = vdwg.mxu0
        %2381 = vmatprep.subr.bf16.mxu0 %v2120
        %2382 = vmatpush1.bf16.msra.mxu0 %v2119
        %2383 = vmatprep.subr.bf16.mxu0 %v2136
        %2384 = vmatpush1.bf16.msra.mxu0 %v2135
        %2385 = vmatprep.subr.bf16.mxu0 0
        %2386 = vmatpush1.bf16.msra.mxu0 0
        %2387 = vmatprep.subr.bf16.mxu0 0
        %2388 = vmatpush1.bf16.msra.mxu0 0
        %2389 = vmatprep.subr.bf16.mxu0 0
        %2390 = vmatpush1.bf16.msra.mxu0 0
        %2391 = vmatprep.subr.bf16.mxu0 0
        %2392 = vmatpush1.bf16.msra.mxu0 0
        %2393 = vmatprep.subr.bf16.mxu0 0
        %2394 = vmatpush1.bf16.msra.mxu0 0
        %2395 = vmatprep.subr.bf16.mxu0 0
        %2396 = vmatpush1.bf16.msra.mxu0 0
        %2397 = vmatprep.subr.bf16.mxu0 0
        %2398 = vmatpush1.bf16.msra.mxu0 0
        %2399 = vmatprep.subr.bf16.mxu0 0
        %2400 = vmatpush1.bf16.msra.mxu0 0
        %2401 = vmatprep.subr.bf16.mxu0 0
        %2402 = vmatpush1.bf16.msra.mxu0 0
        %2403 = vmatprep.subr.bf16.mxu0 0
        %2404 = vmatpush1.bf16.msra.mxu0 0
        %2405 = vmatprep.subr.bf16.mxu0 0
        %2406 = vmatpush1.bf16.msra.mxu0 0
        %2407 = vmatprep.subr.bf16.mxu0 0
        %2408 = vmatpush1.bf16.msra.mxu0 0
        %2409 = vmatprep.subr.bf16.mxu0 0
        %2410 = vmatpush1.bf16.msra.mxu0 0
        %2411 = vmatprep.subr.bf16.mxu0 0
        %2412 = vmatpush1.bf16.msra.mxu0 0
        %2413 = vmatprep.mubr.bf16.mxu0 0
        %2414 = vmatmul.mubr.bf16.gmra.mrb[0].mxu0 %v2174
        %v2415 = vpop.f32.mrb[0].mxu0
        %v2416 = vadd.f32 %v1976, %v2415
        %v2417 = vpop.f32.mrb[0].mxu0
        %v2418 = vadd.f32 %v1980, %v2417
        %v2419 = vpop.f32.mrb[0].mxu0
        %v2420 = vpop.f32.mrb[0].mxu0
        %2421 = vdwg.mxu0
        %2422 = vmatprep.subr.bf16.mxu0 %v2122
        %2423 = vmatpush1.bf16.msra.mxu0 %v2121
        %2424 = vmatprep.subr.bf16.mxu0 %v2138
        %2425 = vmatpush1.bf16.msra.mxu0 %v2137
        %2426 = vmatprep.subr.bf16.mxu0 0
        %2427 = vmatpush1.bf16.msra.mxu0 0
        %2428 = vmatprep.subr.bf16.mxu0 0
        %2429 = vmatpush1.bf16.msra.mxu0 0
        %2430 = vmatprep.subr.bf16.mxu0 0
        %2431 = vmatpush1.bf16.msra.mxu0 0
        %2432 = vmatprep.subr.bf16.mxu0 0
        %2433 = vmatpush1.bf16.msra.mxu0 0
        %2434 = vmatprep.subr.bf16.mxu0 0
        %2435 = vmatpush1.bf16.msra.mxu0 0
        %2436 = vmatprep.subr.bf16.mxu0 0
        %2437 = vmatpush1.bf16.msra.mxu0 0
        %2438 = vmatprep.subr.bf16.mxu0 0
        %2439 = vmatpush1.bf16.msra.mxu0 0
        %2440 = vmatprep.subr.bf16.mxu0 0
        %2441 = vmatpush1.bf16.msra.mxu0 0
        %2442 = vmatprep.subr.bf16.mxu0 0
        %2443 = vmatpush1.bf16.msra.mxu0 0
        %2444 = vmatprep.subr.bf16.mxu0 0
        %2445 = vmatpush1.bf16.msra.mxu0 0
        %2446 = vmatprep.subr.bf16.mxu0 0
        %2447 = vmatpush1.bf16.msra.mxu0 0
        %2448 = vmatprep.subr.bf16.mxu0 0
        %2449 = vmatpush1.bf16.msra.mxu0 0
        %2450 = vmatprep.subr.bf16.mxu0 0
        %2451 = vmatpush1.bf16.msra.mxu0 0
        %2452 = vmatprep.subr.bf16.mxu0 0
        %2453 = vmatpush1.bf16.msra.mxu0 0
        %2454 = vmatprep.mubr.bf16.mxu0 0
        %2455 = vmatmul.mubr.bf16.gmra.mrb[0].mxu0 %v2174
        %v2456 = vpop.f32.mrb[0].mxu0
        %v2457 = vadd.f32 %v1984, %v2456
        %v2458 = vpop.f32.mrb[0].mxu0
        %v2459 = vadd.f32 %v1988, %v2458
        %v2460 = vpop.f32.mrb[0].mxu0
        %v2461 = vpop.f32.mrb[0].mxu0
        %2462 = vdwg.mxu0
        %2463 = vmatprep.subr.bf16.mxu0 %v2124
        %2464 = vmatpush1.bf16.msra.mxu0 %v2123
        %2465 = vmatprep.subr.bf16.mxu0 %v2140
        %2466 = vmatpush1.bf16.msra.mxu0 %v2139
        %2467 = vmatprep.subr.bf16.mxu0 0
        %2468 = vmatpush1.bf16.msra.mxu0 0
        %2469 = vmatprep.subr.bf16.mxu0 0
        %2470 = vmatpush1.bf16.msra.mxu0 0
        %2471 = vmatprep.subr.bf16.mxu0 0
        %2472 = vmatpush1.bf16.msra.mxu0 0
        %2473 = vmatprep.subr.bf16.mxu0 0
        %2474 = vmatpush1.bf16.msra.mxu0 0
        %2475 = vmatprep.subr.bf16.mxu0 0
        %2476 = vmatpush1.bf16.msra.mxu0 0
        %2477 = vmatprep.subr.bf16.mxu0 0
        %2478 = vmatpush1.bf16.msra.mxu0 0
        %2479 = vmatprep.subr.bf16.mxu0 0
        %2480 = vmatpush1.bf16.msra.mxu0 0
        %2481 = vmatprep.subr.bf16.mxu0 0
        %2482 = vmatpush1.bf16.msra.mxu0 0
        %2483 = vmatprep.subr.bf16.mxu0 0
        %2484 = vmatpush1.bf16.msra.mxu0 0
        %2485 = vmatprep.subr.bf16.mxu0 0
        %2486 = vmatpush1.bf16.msra.mxu0 0
        %2487 = vmatprep.subr.bf16.mxu0 0
        %2488 = vmatpush1.bf16.msra.mxu0 0
        %2489 = vmatprep.subr.bf16.mxu0 0
        %2490 = vmatpush1.bf16.msra.mxu0 0
        %2491 = vmatprep.subr.bf16.mxu0 0
        %2492 = vmatpush1.bf16.msra.mxu0 0
        %2493 = vmatprep.subr.bf16.mxu0 0
        %2494 = vmatpush1.bf16.msra.mxu0 0
        %2495 = vmatprep.mubr.bf16.mxu0 0
        %2496 = vmatmul.mubr.bf16.gmra.mrb[0].mxu0 %v2174
        %v2497 = vpop.f32.mrb[0].mxu0
        %v2498 = vadd.f32 %v1992, %v2497
        %v2499 = vpop.f32.mrb[0].mxu0
        %v2500 = vadd.f32 %v1996, %v2499
        %v2501 = vpop.f32.mrb[0].mxu0
        %v2502 = vpop.f32.mrb[0].mxu0
        %2503 = vdwg.mxu0
        %v2504 = vmax.f32 %v2211, 0.0
        %v2505 = vmax.f32 %v2213, 0.0
        %v2506 = vmax.f32 %v2252, 0.0
        %v2507 = vmax.f32 %v2254, 0.0
        %v2508 = vmax.f32 %v2293, 0.0
        %v2509 = vmax.f32 %v2295, 0.0
        %v2510 = vmax.f32 %v2334, 0.0
        %v2511 = vmax.f32 %v2336, 0.0
        %v2512 = vmax.f32 %v2375, 0.0
        %v2513 = vmax.f32 %v2377, 0.0
        %v2514 = vmax.f32 %v2416, 0.0
        %v2515 = vmax.f32 %v2418, 0.0
        %v2516 = vmax.f32 %v2457, 0.0
        %v2517 = vmax.f32 %v2459, 0.0
        %v2518 = vmax.f32 %v2498, 0.0
        %v2519 = vmax.f32 %v2500, 0.0
        %v2520 = vpack.c.bf16 %v2504, %v2504
        %v2521 = vpack.c.bf16 %v2505, %v2505
        %v2522 = vpack.c.bf16 %v2506, %v2506
        %v2523 = vpack.c.bf16 %v2507, %v2507
        %v2524 = vpack.c.bf16 %v2508, %v2508
        %v2525 = vpack.c.bf16 %v2509, %v2509
        %v2526 = vpack.c.bf16 %v2510, %v2510
        %v2527 = vpack.c.bf16 %v2511, %v2511
        %v2528 = vpack.c.bf16 %v2512, %v2512
        %v2529 = vpack.c.bf16 %v2513, %v2513
        %v2530 = vpack.c.bf16 %v2514, %v2514
        %v2531 = vpack.c.bf16 %v2515, %v2515
        %v2532 = vpack.c.bf16 %v2516, %v2516
        %v2533 = vpack.c.bf16 %v2517, %v2517
        %v2534 = vpack.c.bf16 %v2518, %v2518
        %v2535 = vpack.c.bf16 %v2519, %v2519
        %v2536 = vld [vmem:[%s871] sm:$0xf]
        %v2537 = vld [vmem:[%s871 + $0x4] sm:$0xf]
        %v2538 = vld [vmem:[%s871 + $0x8] sm:$0xf]
        %v2539 = vld [vmem:[%s871 + $0xc] sm:$0xf]
        %v2540 = vld [vmem:[%s871 + $0x10] sm:$0xf]
        %v2541 = vld [vmem:[%s871 + $0x14] sm:$0xf]
        %v2542 = vld [vmem:[%s871 + $0x18] sm:$0xf]
        %v2543 = vld [vmem:[%s871 + $0x1c] sm:$0xf]
        %v2544 = vld [vmem:[%s871 + $0x20] sm:$0xf]
        %v2545 = vld [vmem:[%s871 + $0x24] sm:$0xf]
        %v2546 = vld [vmem:[%s871 + $0x28] sm:$0xf]
        %v2547 = vld [vmem:[%s871 + $0x2c] sm:$0xf]
        %v2548 = vld [vmem:[%s871 + $0x30] sm:$0xf]
        %v2549 = vld [vmem:[%s871 + $0x34] sm:$0xf]
        %v2550 = vld [vmem:[%s871 + $0x38] sm:$0xf]
        %v2551 = vld [vmem:[%s871 + $0x3c] sm:$0xf]
        %v2552 = vld [vmem:[%s871 + $0x40] sm:$0xf]
        %v2553 = vld [vmem:[%s871 + $0x44] sm:$0xf]
        %v2554 = vld [vmem:[%s871 + $0x48] sm:$0xf]
        %v2555 = vld [vmem:[%s871 + $0x4c] sm:$0xf]
        %v2556 = vld [vmem:[%s871 + $0x50] sm:$0xf]
        %v2557 = vld [vmem:[%s871 + $0x54] sm:$0xf]
        %v2558 = vld [vmem:[%s871 + $0x58] sm:$0xf]
        %v2559 = vld [vmem:[%s871 + $0x5c] sm:$0xf]
        %v2560 = vld [vmem:[%s871 + $0x60] sm:$0xf]
        %v2561 = vld [vmem:[%s871 + $0x64] sm:$0xf]
        %v2562 = vld [vmem:[%s871 + $0x68] sm:$0xf]
        %v2563 = vld [vmem:[%s871 + $0x6c] sm:$0xf]
        %v2564 = vld [vmem:[%s871 + $0x70] sm:$0xf]
        %v2565 = vld [vmem:[%s871 + $0x74] sm:$0xf]
        %v2566 = vld [vmem:[%s871 + $0x78] sm:$0xf]
        %v2567 = vld [vmem:[%s871 + $0x7c] sm:$0xf]
        %v2568 = vld [vmem:[%s871 + $0x80] sm:$0xf]
        %v2569 = vld [vmem:[%s871 + $0x84] sm:$0xf]
        %v2570 = vld [vmem:[%s871 + $0x88] sm:$0xf]
        %v2571 = vld [vmem:[%s871 + $0x8c] sm:$0xf]
        %v2572 = vld [vmem:[%s871 + $0x90] sm:$0xf]
        %v2573 = vld [vmem:[%s871 + $0x94] sm:$0xf]
        %v2574 = vld [vmem:[%s871 + $0x98] sm:$0xf]
        %v2575 = vld [vmem:[%s871 + $0x9c] sm:$0xf]
        %v2576 = vld [vmem:[%s871 + $0xa0] sm:$0xf]
        %v2577 = vld [vmem:[%s871 + $0xa4] sm:$0xf]
        %v2578 = vld [vmem:[%s871 + $0xa8] sm:$0xf]
        %v2579 = vld [vmem:[%s871 + $0xac] sm:$0xf]
        %v2580 = vld [vmem:[%s871 + $0xb0] sm:$0xf]
        %v2581 = vld [vmem:[%s871 + $0xb4] sm:$0xf]
        %v2582 = vld [vmem:[%s871 + $0xb8] sm:$0xf]
        %v2583 = vld [vmem:[%s871 + $0xbc] sm:$0xf]
        %v2584 = vld [vmem:[%s871 + $0xc0] sm:$0xf]
        %v2585 = vld [vmem:[%s871 + $0xc4] sm:$0xf]
        %v2586 = vld [vmem:[%s871 + $0xc8] sm:$0xf]
        %v2587 = vld [vmem:[%s871 + $0xcc] sm:$0xf]
        %v2588 = vld [vmem:[%s871 + $0xd0] sm:$0xf]
        %v2589 = vld [vmem:[%s871 + $0xd4] sm:$0xf]
        %v2590 = vld [vmem:[%s871 + $0xd8] sm:$0xf]
        %v2591 = vld [vmem:[%s871 + $0xdc] sm:$0xf]
        %v2592 = vld [vmem:[%s871 + $0xe0] sm:$0xf]
        %v2593 = vld [vmem:[%s871 + $0xe4] sm:$0xf]
        %v2594 = vld [vmem:[%s871 + $0xe8] sm:$0xf]
        %v2595 = vld [vmem:[%s871 + $0xec] sm:$0xf]
        %v2596 = vld [vmem:[%s871 + $0xf0] sm:$0xf]
        %v2597 = vld [vmem:[%s871 + $0xf4] sm:$0xf]
        %v2598 = vld [vmem:[%s871 + $0xf8] sm:$0xf]
        %v2599 = vld [vmem:[%s871 + $0xfc] sm:$0xf]
        %v2600 = vld [vmem:[%s871 + $0x100] sm:$0xf]
        %v2601 = vld [vmem:[%s871 + $0x104] sm:$0xf]
        %v2602 = vld [vmem:[%s871 + $0x108] sm:$0xf]
        %v2603 = vld [vmem:[%s871 + $0x10c] sm:$0xf]
        %v2604 = vld [vmem:[%s871 + $0x110] sm:$0xf]
        %v2605 = vld [vmem:[%s871 + $0x114] sm:$0xf]
        %v2606 = vld [vmem:[%s871 + $0x118] sm:$0xf]
        %v2607 = vld [vmem:[%s871 + $0x11c] sm:$0xf]
        %v2608 = vld [vmem:[%s871 + $0x120] sm:$0xf]
        %v2609 = vld [vmem:[%s871 + $0x124] sm:$0xf]
        %v2610 = vld [vmem:[%s871 + $0x128] sm:$0xf]
        %v2611 = vld [vmem:[%s871 + $0x12c] sm:$0xf]
        %v2612 = vld [vmem:[%s871 + $0x130] sm:$0xf]
        %v2613 = vld [vmem:[%s871 + $0x134] sm:$0xf]
        %v2614 = vld [vmem:[%s871 + $0x138] sm:$0xf]
        %v2615 = vld [vmem:[%s871 + $0x13c] sm:$0xf]
        %v2616 = vld [vmem:[%s871 + $0x140] sm:$0xf]
        %v2617 = vld [vmem:[%s871 + $0x144] sm:$0xf]
        %v2618 = vld [vmem:[%s871 + $0x148] sm:$0xf]
        %v2619 = vld [vmem:[%s871 + $0x14c] sm:$0xf]
        %v2620 = vld [vmem:[%s871 + $0x150] sm:$0xf]
        %v2621 = vld [vmem:[%s871 + $0x154] sm:$0xf]
        %v2622 = vld [vmem:[%s871 + $0x158] sm:$0xf]
        %v2623 = vld [vmem:[%s871 + $0x15c] sm:$0xf]
        %v2624 = vld [vmem:[%s871 + $0x160] sm:$0xf]
        %v2625 = vld [vmem:[%s871 + $0x164] sm:$0xf]
        %v2626 = vld [vmem:[%s871 + $0x168] sm:$0xf]
        %v2627 = vld [vmem:[%s871 + $0x16c] sm:$0xf]
        %v2628 = vld [vmem:[%s871 + $0x170] sm:$0xf]
        %v2629 = vld [vmem:[%s871 + $0x174] sm:$0xf]
        %v2630 = vld [vmem:[%s871 + $0x178] sm:$0xf]
        %v2631 = vld [vmem:[%s871 + $0x17c] sm:$0xf]
        %v2632 = vld [vmem:[%s871 + $0x180] sm:$0xf]
        %v2633 = vld [vmem:[%s871 + $0x184] sm:$0xf]
        %v2634 = vld [vmem:[%s871 + $0x188] sm:$0xf]
        %v2635 = vld [vmem:[%s871 + $0x18c] sm:$0xf]
        %v2636 = vld [vmem:[%s871 + $0x190] sm:$0xf]
        %v2637 = vld [vmem:[%s871 + $0x194] sm:$0xf]
        %v2638 = vld [vmem:[%s871 + $0x198] sm:$0xf]
        %v2639 = vld [vmem:[%s871 + $0x19c] sm:$0xf]
        %v2640 = vld [vmem:[%s871 + $0x1a0] sm:$0xf]
        %v2641 = vld [vmem:[%s871 + $0x1a4] sm:$0xf]
        %v2642 = vld [vmem:[%s871 + $0x1a8] sm:$0xf]
        %v2643 = vld [vmem:[%s871 + $0x1ac] sm:$0xf]
        %v2644 = vld [vmem:[%s871 + $0x1b0] sm:$0xf]
        %v2645 = vld [vmem:[%s871 + $0x1b4] sm:$0xf]
        %v2646 = vld [vmem:[%s871 + $0x1b8] sm:$0xf]
        %v2647 = vld [vmem:[%s871 + $0x1bc] sm:$0xf]
        %v2648 = vld [vmem:[%s871 + $0x1c0] sm:$0xf]
        %v2649 = vld [vmem:[%s871 + $0x1c4] sm:$0xf]
        %v2650 = vld [vmem:[%s871 + $0x1c8] sm:$0xf]
        %v2651 = vld [vmem:[%s871 + $0x1cc] sm:$0xf]
        %v2652 = vld [vmem:[%s871 + $0x1d0] sm:$0xf]
        %v2653 = vld [vmem:[%s871 + $0x1d4] sm:$0xf]
        %v2654 = vld [vmem:[%s871 + $0x1d8] sm:$0xf]
        %v2655 = vld [vmem:[%s871 + $0x1dc] sm:$0xf]
        %v2656 = vld [vmem:[%s871 + $0x1e0] sm:$0xf]
        %v2657 = vld [vmem:[%s871 + $0x1e4] sm:$0xf]
        %v2658 = vld [vmem:[%s871 + $0x1e8] sm:$0xf]
        %v2659 = vld [vmem:[%s871 + $0x1ec] sm:$0xf]
        %v2660 = vld [vmem:[%s871 + $0x1f0] sm:$0xf]
        %v2661 = vld [vmem:[%s871 + $0x1f4] sm:$0xf]
        %v2662 = vld [vmem:[%s871 + $0x1f8] sm:$0xf]
        %v2663 = vld [vmem:[%s871 + $0x1fc] sm:$0xf]
        %v2664 = vld [vmem:[%s871 + $0x200] sm:$0xf]
        %v2665 = vld [vmem:[%s871 + $0x204] sm:$0xf]
        %v2666 = vld [vmem:[%s871 + $0x208] sm:$0xf]
        %v2667 = vld [vmem:[%s871 + $0x20c] sm:$0xf]
        %v2668 = vld [vmem:[%s871 + $0x210] sm:$0xf]
        %v2669 = vld [vmem:[%s871 + $0x214] sm:$0xf]
        %v2670 = vld [vmem:[%s871 + $0x218] sm:$0xf]
        %v2671 = vld [vmem:[%s871 + $0x21c] sm:$0xf]
        %v2672 = vld [vmem:[%s871 + $0x220] sm:$0xf]
        %v2673 = vld [vmem:[%s871 + $0x224] sm:$0xf]
        %v2674 = vld [vmem:[%s871 + $0x228] sm:$0xf]
        %v2675 = vld [vmem:[%s871 + $0x22c] sm:$0xf]
        %v2676 = vld [vmem:[%s871 + $0x230] sm:$0xf]
        %v2677 = vld [vmem:[%s871 + $0x234] sm:$0xf]
        %v2678 = vld [vmem:[%s871 + $0x238] sm:$0xf]
        %v2679 = vld [vmem:[%s871 + $0x23c] sm:$0xf]
        %v2680 = vld [vmem:[%s871 + $0x240] sm:$0xf]
        %v2681 = vld [vmem:[%s871 + $0x244] sm:$0xf]
        %v2682 = vld [vmem:[%s871 + $0x248] sm:$0xf]
        %v2683 = vld [vmem:[%s871 + $0x24c] sm:$0xf]
        %v2684 = vld [vmem:[%s871 + $0x250] sm:$0xf]
        %v2685 = vld [vmem:[%s871 + $0x254] sm:$0xf]
        %v2686 = vld [vmem:[%s871 + $0x258] sm:$0xf]
        %v2687 = vld [vmem:[%s871 + $0x25c] sm:$0xf]
        %v2688 = vld [vmem:[%s871 + $0x260] sm:$0xf]
        %v2689 = vld [vmem:[%s871 + $0x264] sm:$0xf]
        %v2690 = vld [vmem:[%s871 + $0x268] sm:$0xf]
        %v2691 = vld [vmem:[%s871 + $0x26c] sm:$0xf]
        %v2692 = vld [vmem:[%s871 + $0x270] sm:$0xf]
        %v2693 = vld [vmem:[%s871 + $0x274] sm:$0xf]
        %v2694 = vld [vmem:[%s871 + $0x278] sm:$0xf]
        %v2695 = vld [vmem:[%s871 + $0x27c] sm:$0xf]
        %v2696 = vld [vmem:[%s871 + $0x280] sm:$0xf]
        %v2697 = vld [vmem:[%s871 + $0x284] sm:$0xf]
        %v2698 = vld [vmem:[%s871 + $0x288] sm:$0xf]
        %v2699 = vld [vmem:[%s871 + $0x28c] sm:$0xf]
        %v2700 = vld [vmem:[%s871 + $0x290] sm:$0xf]
        %v2701 = vld [vmem:[%s871 + $0x294] sm:$0xf]
        %v2702 = vld [vmem:[%s871 + $0x298] sm:$0xf]
        %v2703 = vld [vmem:[%s871 + $0x29c] sm:$0xf]
        %v2704 = vld [vmem:[%s871 + $0x2a0] sm:$0xf]
        %v2705 = vld [vmem:[%s871 + $0x2a4] sm:$0xf]
        %v2706 = vld [vmem:[%s871 + $0x2a8] sm:$0xf]
        %v2707 = vld [vmem:[%s871 + $0x2ac] sm:$0xf]
        %v2708 = vld [vmem:[%s871 + $0x2b0] sm:$0xf]
        %v2709 = vld [vmem:[%s871 + $0x2b4] sm:$0xf]
        %v2710 = vld [vmem:[%s871 + $0x2b8] sm:$0xf]
        %v2711 = vld [vmem:[%s871 + $0x2bc] sm:$0xf]
        %v2712 = vld [vmem:[%s871 + $0x2c0] sm:$0xf]
        %v2713 = vld [vmem:[%s871 + $0x2c4] sm:$0xf]
        %v2714 = vld [vmem:[%s871 + $0x2c8] sm:$0xf]
        %v2715 = vld [vmem:[%s871 + $0x2cc] sm:$0xf]
        %v2716 = vld [vmem:[%s871 + $0x2d0] sm:$0xf]
        %v2717 = vld [vmem:[%s871 + $0x2d4] sm:$0xf]
        %v2718 = vld [vmem:[%s871 + $0x2d8] sm:$0xf]
        %v2719 = vld [vmem:[%s871 + $0x2dc] sm:$0xf]
        %v2720 = vld [vmem:[%s871 + $0x2e0] sm:$0xf]
        %v2721 = vld [vmem:[%s871 + $0x2e4] sm:$0xf]
        %v2722 = vld [vmem:[%s871 + $0x2e8] sm:$0xf]
        %v2723 = vld [vmem:[%s871 + $0x2ec] sm:$0xf]
        %v2724 = vld [vmem:[%s871 + $0x2f0] sm:$0xf]
        %v2725 = vld [vmem:[%s871 + $0x2f4] sm:$0xf]
        %v2726 = vld [vmem:[%s871 + $0x2f8] sm:$0xf]
        %v2727 = vld [vmem:[%s871 + $0x2fc] sm:$0xf]
        %v2728 = vld [vmem:[%s871 + $0x300] sm:$0xf]
        %v2729 = vld [vmem:[%s871 + $0x304] sm:$0xf]
        %v2730 = vld [vmem:[%s871 + $0x308] sm:$0xf]
        %v2731 = vld [vmem:[%s871 + $0x30c] sm:$0xf]
        %v2732 = vld [vmem:[%s871 + $0x310] sm:$0xf]
        %v2733 = vld [vmem:[%s871 + $0x314] sm:$0xf]
        %v2734 = vld [vmem:[%s871 + $0x318] sm:$0xf]
        %v2735 = vld [vmem:[%s871 + $0x31c] sm:$0xf]
        %v2736 = vld [vmem:[%s871 + $0x320] sm:$0xf]
        %v2737 = vld [vmem:[%s871 + $0x324] sm:$0xf]
        %v2738 = vld [vmem:[%s871 + $0x328] sm:$0xf]
        %v2739 = vld [vmem:[%s871 + $0x32c] sm:$0xf]
        %v2740 = vld [vmem:[%s871 + $0x330] sm:$0xf]
        %v2741 = vld [vmem:[%s871 + $0x334] sm:$0xf]
        %v2742 = vld [vmem:[%s871 + $0x338] sm:$0xf]
        %v2743 = vld [vmem:[%s871 + $0x33c] sm:$0xf]
        %v2744 = vld [vmem:[%s871 + $0x340] sm:$0xf]
        %v2745 = vld [vmem:[%s871 + $0x344] sm:$0xf]
        %v2746 = vld [vmem:[%s871 + $0x348] sm:$0xf]
        %v2747 = vld [vmem:[%s871 + $0x34c] sm:$0xf]
        %v2748 = vld [vmem:[%s871 + $0x350] sm:$0xf]
        %v2749 = vld [vmem:[%s871 + $0x354] sm:$0xf]
        %v2750 = vld [vmem:[%s871 + $0x358] sm:$0xf]
        %v2751 = vld [vmem:[%s871 + $0x35c] sm:$0xf]
        %v2752 = vld [vmem:[%s871 + $0x360] sm:$0xf]
        %v2753 = vld [vmem:[%s871 + $0x364] sm:$0xf]
        %v2754 = vld [vmem:[%s871 + $0x368] sm:$0xf]
        %v2755 = vld [vmem:[%s871 + $0x36c] sm:$0xf]
        %v2756 = vld [vmem:[%s871 + $0x370] sm:$0xf]
        %v2757 = vld [vmem:[%s871 + $0x374] sm:$0xf]
        %v2758 = vld [vmem:[%s871 + $0x378] sm:$0xf]
        %v2759 = vld [vmem:[%s871 + $0x37c] sm:$0xf]
        %v2760 = vld [vmem:[%s871 + $0x380] sm:$0xf]
        %v2761 = vld [vmem:[%s871 + $0x384] sm:$0xf]
        %v2762 = vld [vmem:[%s871 + $0x388] sm:$0xf]
        %v2763 = vld [vmem:[%s871 + $0x38c] sm:$0xf]
        %v2764 = vld [vmem:[%s871 + $0x390] sm:$0xf]
        %v2765 = vld [vmem:[%s871 + $0x394] sm:$0xf]
        %v2766 = vld [vmem:[%s871 + $0x398] sm:$0xf]
        %v2767 = vld [vmem:[%s871 + $0x39c] sm:$0xf]
        %v2768 = vld [vmem:[%s871 + $0x3a0] sm:$0xf]
        %v2769 = vld [vmem:[%s871 + $0x3a4] sm:$0xf]
        %v2770 = vld [vmem:[%s871 + $0x3a8] sm:$0xf]
        %v2771 = vld [vmem:[%s871 + $0x3ac] sm:$0xf]
        %v2772 = vld [vmem:[%s871 + $0x3b0] sm:$0xf]
        %v2773 = vld [vmem:[%s871 + $0x3b4] sm:$0xf]
        %v2774 = vld [vmem:[%s871 + $0x3b8] sm:$0xf]
        %v2775 = vld [vmem:[%s871 + $0x3bc] sm:$0xf]
        %v2776 = vld [vmem:[%s871 + $0x3c0] sm:$0xf]
        %v2777 = vld [vmem:[%s871 + $0x3c4] sm:$0xf]
        %v2778 = vld [vmem:[%s871 + $0x3c8] sm:$0xf]
        %v2779 = vld [vmem:[%s871 + $0x3cc] sm:$0xf]
        %v2780 = vld [vmem:[%s871 + $0x3d0] sm:$0xf]
        %v2781 = vld [vmem:[%s871 + $0x3d4] sm:$0xf]
        %v2782 = vld [vmem:[%s871 + $0x3d8] sm:$0xf]
        %v2783 = vld [vmem:[%s871 + $0x3dc] sm:$0xf]
        %v2784 = vld [vmem:[%s871 + $0x3e0] sm:$0xf]
        %v2785 = vld [vmem:[%s871 + $0x3e4] sm:$0xf]
        %v2786 = vld [vmem:[%s871 + $0x3e8] sm:$0xf]
        %v2787 = vld [vmem:[%s871 + $0x3ec] sm:$0xf]
        %v2788 = vld [vmem:[%s871 + $0x3f0] sm:$0xf]
        %v2789 = vld [vmem:[%s871 + $0x3f4] sm:$0xf]
        %v2790 = vld [vmem:[%s871 + $0x3f8] sm:$0xf]
        %v2791 = vld [vmem:[%s871 + $0x3fc] sm:$0xf]
        %v2792 = vld [vmem:[%s874] sm:$0x1]
        %v2794 = vlaneseq
        %v2795 = vshrl.u32 %v2794, 7
        %v2796 = vsub.s32 0, %v2795
        %v2797 = vrot.slane %v2792, %v2796
        %v3055 = vunpack.c.l.b16 %v2536
        %v3056 = vunpack.c.l.b16 %v2537
        %v3057 = vunpack.c.l.b16 %v2538
        %v3058 = vunpack.c.l.b16 %v2539
        %v3059 = vunpack.c.l.b16 %v2540
        %v3060 = vunpack.c.l.b16 %v2541
        %v3061 = vunpack.c.l.b16 %v2542
        %v3062 = vunpack.c.l.b16 %v2543
        %v3063 = vunpack.c.l.b16 %v2544
        %v3064 = vunpack.c.l.b16 %v2545
        %v3065 = vunpack.c.l.b16 %v2546
        %v3066 = vunpack.c.l.b16 %v2547
        %v3067 = vunpack.c.l.b16 %v2548
        %v3068 = vunpack.c.l.b16 %v2549
        %v3069 = vunpack.c.l.b16 %v2550
        %v3070 = vunpack.c.l.b16 %v2551
        %v3071 = vunpack.c.l.b16 %v2552
        %v3072 = vunpack.c.l.b16 %v2553
        %v3073 = vunpack.c.l.b16 %v2554
        %v3074 = vunpack.c.l.b16 %v2555
        %v3075 = vunpack.c.l.b16 %v2556
        %v3076 = vunpack.c.l.b16 %v2557
        %v3077 = vunpack.c.l.b16 %v2558
        %v3078 = vunpack.c.l.b16 %v2559
        %v3079 = vunpack.c.l.b16 %v2560
        %v3080 = vunpack.c.l.b16 %v2561
        %v3081 = vunpack.c.l.b16 %v2562
        %v3082 = vunpack.c.l.b16 %v2563
        %v3083 = vunpack.c.l.b16 %v2564
        %v3084 = vunpack.c.l.b16 %v2565
        %v3085 = vunpack.c.l.b16 %v2566
        %v3086 = vunpack.c.l.b16 %v2567
        %v3087 = vunpack.c.l.b16 %v2568
        %v3088 = vunpack.c.l.b16 %v2569
        %v3089 = vunpack.c.l.b16 %v2570
        %v3090 = vunpack.c.l.b16 %v2571
        %v3091 = vunpack.c.l.b16 %v2572
        %v3092 = vunpack.c.l.b16 %v2573
        %v3093 = vunpack.c.l.b16 %v2574
        %v3094 = vunpack.c.l.b16 %v2575
        %v3095 = vunpack.c.l.b16 %v2576
        %v3096 = vunpack.c.l.b16 %v2577
        %v3097 = vunpack.c.l.b16 %v2578
        %v3098 = vunpack.c.l.b16 %v2579
        %v3099 = vunpack.c.l.b16 %v2580
        %v3100 = vunpack.c.l.b16 %v2581
        %v3101 = vunpack.c.l.b16 %v2582
        %v3102 = vunpack.c.l.b16 %v2583
        %v3103 = vunpack.c.l.b16 %v2584
        %v3104 = vunpack.c.l.b16 %v2585
        %v3105 = vunpack.c.l.b16 %v2586
        %v3106 = vunpack.c.l.b16 %v2587
        %v3107 = vunpack.c.l.b16 %v2588
        %v3108 = vunpack.c.l.b16 %v2589
        %v3109 = vunpack.c.l.b16 %v2590
        %v3110 = vunpack.c.l.b16 %v2591
        %v3111 = vunpack.c.l.b16 %v2592
        %v3112 = vunpack.c.l.b16 %v2593
        %v3113 = vunpack.c.l.b16 %v2594
        %v3114 = vunpack.c.l.b16 %v2595
        %v3115 = vunpack.c.l.b16 %v2596
        %v3116 = vunpack.c.l.b16 %v2597
        %v3117 = vunpack.c.l.b16 %v2598
        %v3118 = vunpack.c.l.b16 %v2599
        %v3119 = vunpack.c.l.b16 %v2600
        %v3120 = vunpack.c.l.b16 %v2601
        %v3121 = vunpack.c.l.b16 %v2602
        %v3122 = vunpack.c.l.b16 %v2603
        %v3123 = vunpack.c.l.b16 %v2604
        %v3124 = vunpack.c.l.b16 %v2605
        %v3125 = vunpack.c.l.b16 %v2606
        %v3126 = vunpack.c.l.b16 %v2607
        %v3127 = vunpack.c.l.b16 %v2608
        %v3128 = vunpack.c.l.b16 %v2609
        %v3129 = vunpack.c.l.b16 %v2610
        %v3130 = vunpack.c.l.b16 %v2611
        %v3131 = vunpack.c.l.b16 %v2612
        %v3132 = vunpack.c.l.b16 %v2613
        %v3133 = vunpack.c.l.b16 %v2614
        %v3134 = vunpack.c.l.b16 %v2615
        %v3135 = vunpack.c.l.b16 %v2616
        %v3136 = vunpack.c.l.b16 %v2617
        %v3137 = vunpack.c.l.b16 %v2618
        %v3138 = vunpack.c.l.b16 %v2619
        %v3139 = vunpack.c.l.b16 %v2620
        %v3140 = vunpack.c.l.b16 %v2621
        %v3141 = vunpack.c.l.b16 %v2622
        %v3142 = vunpack.c.l.b16 %v2623
        %v3143 = vunpack.c.l.b16 %v2624
        %v3144 = vunpack.c.l.b16 %v2625
        %v3145 = vunpack.c.l.b16 %v2626
        %v3146 = vunpack.c.l.b16 %v2627
        %v3147 = vunpack.c.l.b16 %v2628
        %v3148 = vunpack.c.l.b16 %v2629
        %v3149 = vunpack.c.l.b16 %v2630
        %v3150 = vunpack.c.l.b16 %v2631
        %v3151 = vunpack.c.l.b16 %v2632
        %v3152 = vunpack.c.l.b16 %v2633
        %v3153 = vunpack.c.l.b16 %v2634
        %v3154 = vunpack.c.l.b16 %v2635
        %v3155 = vunpack.c.l.b16 %v2636
        %v3156 = vunpack.c.l.b16 %v2637
        %v3157 = vunpack.c.l.b16 %v2638
        %v3158 = vunpack.c.l.b16 %v2639
        %v3159 = vunpack.c.l.b16 %v2640
        %v3160 = vunpack.c.l.b16 %v2641
        %v3161 = vunpack.c.l.b16 %v2642
        %v3162 = vunpack.c.l.b16 %v2643
        %v3163 = vunpack.c.l.b16 %v2644
        %v3164 = vunpack.c.l.b16 %v2645
        %v3165 = vunpack.c.l.b16 %v2646
        %v3166 = vunpack.c.l.b16 %v2647
        %v3167 = vunpack.c.l.b16 %v2648
        %v3168 = vunpack.c.l.b16 %v2649
        %v3169 = vunpack.c.l.b16 %v2650
        %v3170 = vunpack.c.l.b16 %v2651
        %v3171 = vunpack.c.l.b16 %v2652
        %v3172 = vunpack.c.l.b16 %v2653
        %v3173 = vunpack.c.l.b16 %v2654
        %v3174 = vunpack.c.l.b16 %v2655
        %v3175 = vunpack.c.l.b16 %v2656
        %v3176 = vunpack.c.l.b16 %v2657
        %v3177 = vunpack.c.l.b16 %v2658
        %v3178 = vunpack.c.l.b16 %v2659
        %v3179 = vunpack.c.l.b16 %v2660
        %v3180 = vunpack.c.l.b16 %v2661
        %v3181 = vunpack.c.l.b16 %v2662
        %v3182 = vunpack.c.l.b16 %v2663
        %v3183 = vunpack.c.l.b16 %v2664
        %v3184 = vunpack.c.l.b16 %v2665
        %v3185 = vunpack.c.l.b16 %v2666
        %v3186 = vunpack.c.l.b16 %v2667
        %v3187 = vunpack.c.l.b16 %v2668
        %v3188 = vunpack.c.l.b16 %v2669
        %v3189 = vunpack.c.l.b16 %v2670
        %v3190 = vunpack.c.l.b16 %v2671
        %v3191 = vunpack.c.l.b16 %v2672
        %v3192 = vunpack.c.l.b16 %v2673
        %v3193 = vunpack.c.l.b16 %v2674
        %v3194 = vunpack.c.l.b16 %v2675
        %v3195 = vunpack.c.l.b16 %v2676
        %v3196 = vunpack.c.l.b16 %v2677
        %v3197 = vunpack.c.l.b16 %v2678
        %v3198 = vunpack.c.l.b16 %v2679
        %v3199 = vunpack.c.l.b16 %v2680
        %v3200 = vunpack.c.l.b16 %v2681
        %v3201 = vunpack.c.l.b16 %v2682
        %v3202 = vunpack.c.l.b16 %v2683
        %v3203 = vunpack.c.l.b16 %v2684
        %v3204 = vunpack.c.l.b16 %v2685
        %v3205 = vunpack.c.l.b16 %v2686
        %v3206 = vunpack.c.l.b16 %v2687
        %v3207 = vunpack.c.l.b16 %v2688
        %v3208 = vunpack.c.l.b16 %v2689
        %v3209 = vunpack.c.l.b16 %v2690
        %v3210 = vunpack.c.l.b16 %v2691
        %v3211 = vunpack.c.l.b16 %v2692
        %v3212 = vunpack.c.l.b16 %v2693
        %v3213 = vunpack.c.l.b16 %v2694
        %v3214 = vunpack.c.l.b16 %v2695
        %v3215 = vunpack.c.l.b16 %v2696
        %v3216 = vunpack.c.l.b16 %v2697
        %v3217 = vunpack.c.l.b16 %v2698
        %v3218 = vunpack.c.l.b16 %v2699
        %v3219 = vunpack.c.l.b16 %v2700
        %v3220 = vunpack.c.l.b16 %v2701
        %v3221 = vunpack.c.l.b16 %v2702
        %v3222 = vunpack.c.l.b16 %v2703
        %v3223 = vunpack.c.l.b16 %v2704
        %v3224 = vunpack.c.l.b16 %v2705
        %v3225 = vunpack.c.l.b16 %v2706
        %v3226 = vunpack.c.l.b16 %v2707
        %v3227 = vunpack.c.l.b16 %v2708
        %v3228 = vunpack.c.l.b16 %v2709
        %v3229 = vunpack.c.l.b16 %v2710
        %v3230 = vunpack.c.l.b16 %v2711
        %v3231 = vunpack.c.l.b16 %v2712
        %v3232 = vunpack.c.l.b16 %v2713
        %v3233 = vunpack.c.l.b16 %v2714
        %v3234 = vunpack.c.l.b16 %v2715
        %v3235 = vunpack.c.l.b16 %v2716
        %v3236 = vunpack.c.l.b16 %v2717
        %v3237 = vunpack.c.l.b16 %v2718
        %v3238 = vunpack.c.l.b16 %v2719
        %v3239 = vunpack.c.l.b16 %v2720
        %v3240 = vunpack.c.l.b16 %v2721
        %v3241 = vunpack.c.l.b16 %v2722
        %v3242 = vunpack.c.l.b16 %v2723
        %v3243 = vunpack.c.l.b16 %v2724
        %v3244 = vunpack.c.l.b16 %v2725
        %v3245 = vunpack.c.l.b16 %v2726
        %v3246 = vunpack.c.l.b16 %v2727
        %v3247 = vunpack.c.l.b16 %v2728
        %v3248 = vunpack.c.l.b16 %v2729
        %v3249 = vunpack.c.l.b16 %v2730
        %v3250 = vunpack.c.l.b16 %v2731
        %v3251 = vunpack.c.l.b16 %v2732
        %v3252 = vunpack.c.l.b16 %v2733
        %v3253 = vunpack.c.l.b16 %v2734
        %v3254 = vunpack.c.l.b16 %v2735
        %v3255 = vunpack.c.l.b16 %v2736
        %v3256 = vunpack.c.l.b16 %v2737
        %v3257 = vunpack.c.l.b16 %v2738
        %v3258 = vunpack.c.l.b16 %v2739
        %v3259 = vunpack.c.l.b16 %v2740
        %v3260 = vunpack.c.l.b16 %v2741
        %v3261 = vunpack.c.l.b16 %v2742
        %v3262 = vunpack.c.l.b16 %v2743
        %v3263 = vunpack.c.l.b16 %v2744
        %v3264 = vunpack.c.l.b16 %v2745
        %v3265 = vunpack.c.l.b16 %v2746
        %v3266 = vunpack.c.l.b16 %v2747
        %v3267 = vunpack.c.l.b16 %v2748
        %v3268 = vunpack.c.l.b16 %v2749
        %v3269 = vunpack.c.l.b16 %v2750
        %v3270 = vunpack.c.l.b16 %v2751
        %v3271 = vunpack.c.l.b16 %v2752
        %v3272 = vunpack.c.l.b16 %v2753
        %v3273 = vunpack.c.l.b16 %v2754
        %v3274 = vunpack.c.l.b16 %v2755
        %v3275 = vunpack.c.l.b16 %v2756
        %v3276 = vunpack.c.l.b16 %v2757
        %v3277 = vunpack.c.l.b16 %v2758
        %v3278 = vunpack.c.l.b16 %v2759
        %v3279 = vunpack.c.l.b16 %v2760
        %v3280 = vunpack.c.l.b16 %v2761
        %v3281 = vunpack.c.l.b16 %v2762
        %v3282 = vunpack.c.l.b16 %v2763
        %v3283 = vunpack.c.l.b16 %v2764
        %v3284 = vunpack.c.l.b16 %v2765
        %v3285 = vunpack.c.l.b16 %v2766
        %v3286 = vunpack.c.l.b16 %v2767
        %v3287 = vunpack.c.l.b16 %v2768
        %v3288 = vunpack.c.l.b16 %v2769
        %v3289 = vunpack.c.l.b16 %v2770
        %v3290 = vunpack.c.l.b16 %v2771
        %v3291 = vunpack.c.l.b16 %v2772
        %v3292 = vunpack.c.l.b16 %v2773
        %v3293 = vunpack.c.l.b16 %v2774
        %v3294 = vunpack.c.l.b16 %v2775
        %v3295 = vunpack.c.l.b16 %v2776
        %v3296 = vunpack.c.l.b16 %v2777
        %v3297 = vunpack.c.l.b16 %v2778
        %v3298 = vunpack.c.l.b16 %v2779
        %v3299 = vunpack.c.l.b16 %v2780
        %v3300 = vunpack.c.l.b16 %v2781
        %v3301 = vunpack.c.l.b16 %v2782
        %v3302 = vunpack.c.l.b16 %v2783
        %v3303 = vunpack.c.l.b16 %v2784
        %v3304 = vunpack.c.l.b16 %v2785
        %v3305 = vunpack.c.l.b16 %v2786
        %v3306 = vunpack.c.l.b16 %v2787
        %v3307 = vunpack.c.l.b16 %v2788
        %v3308 = vunpack.c.l.b16 %v2789
        %v3309 = vunpack.c.l.b16 %v2790
        %v3310 = vunpack.c.l.b16 %v2791
        %v3311 = vpack.c.b16 %v3056, %v3055
        %v3312 = vpack.c.b16 %v3058, %v3057
        %v3313 = vpack.c.b16 %v3060, %v3059
        %v3314 = vpack.c.b16 %v3062, %v3061
        %v3315 = vpack.c.b16 %v3064, %v3063
        %v3316 = vpack.c.b16 %v3066, %v3065
        %v3317 = vpack.c.b16 %v3068, %v3067
        %v3318 = vpack.c.b16 %v3070, %v3069
        %v3319 = vpack.c.b16 %v3072, %v3071
        %v3320 = vpack.c.b16 %v3074, %v3073
        %v3321 = vpack.c.b16 %v3076, %v3075
        %v3322 = vpack.c.b16 %v3078, %v3077
        %v3323 = vpack.c.b16 %v3080, %v3079
        %v3324 = vpack.c.b16 %v3082, %v3081
        %v3325 = vpack.c.b16 %v3084, %v3083
        %v3326 = vpack.c.b16 %v3086, %v3085
        %v3327 = vpack.c.b16 %v3088, %v3087
        %v3328 = vpack.c.b16 %v3090, %v3089
        %v3329 = vpack.c.b16 %v3092, %v3091
        %v3330 = vpack.c.b16 %v3094, %v3093
        %v3331 = vpack.c.b16 %v3096, %v3095
        %v3332 = vpack.c.b16 %v3098, %v3097
        %v3333 = vpack.c.b16 %v3100, %v3099
        %v3334 = vpack.c.b16 %v3102, %v3101
        %v3335 = vpack.c.b16 %v3104, %v3103
        %v3336 = vpack.c.b16 %v3106, %v3105
        %v3337 = vpack.c.b16 %v3108, %v3107
        %v3338 = vpack.c.b16 %v3110, %v3109
        %v3339 = vpack.c.b16 %v3112, %v3111
        %v3340 = vpack.c.b16 %v3114, %v3113
        %v3341 = vpack.c.b16 %v3116, %v3115
        %v3342 = vpack.c.b16 %v3118, %v3117
        %v3343 = vpack.c.b16 %v3120, %v3119
        %v3344 = vpack.c.b16 %v3122, %v3121
        %v3345 = vpack.c.b16 %v3124, %v3123
        %v3346 = vpack.c.b16 %v3126, %v3125
        %v3347 = vpack.c.b16 %v3128, %v3127
        %v3348 = vpack.c.b16 %v3130, %v3129
        %v3349 = vpack.c.b16 %v3132, %v3131
        %v3350 = vpack.c.b16 %v3134, %v3133
        %v3351 = vpack.c.b16 %v3136, %v3135
        %v3352 = vpack.c.b16 %v3138, %v3137
        %v3353 = vpack.c.b16 %v3140, %v3139
        %v3354 = vpack.c.b16 %v3142, %v3141
        %v3355 = vpack.c.b16 %v3144, %v3143
        %v3356 = vpack.c.b16 %v3146, %v3145
        %v3357 = vpack.c.b16 %v3148, %v3147
        %v3358 = vpack.c.b16 %v3150, %v3149
        %v3359 = vpack.c.b16 %v3152, %v3151
        %v3360 = vpack.c.b16 %v3154, %v3153
        %v3361 = vpack.c.b16 %v3156, %v3155
        %v3362 = vpack.c.b16 %v3158, %v3157
        %v3363 = vpack.c.b16 %v3160, %v3159
        %v3364 = vpack.c.b16 %v3162, %v3161
        %v3365 = vpack.c.b16 %v3164, %v3163
        %v3366 = vpack.c.b16 %v3166, %v3165
        %v3367 = vpack.c.b16 %v3168, %v3167
        %v3368 = vpack.c.b16 %v3170, %v3169
        %v3369 = vpack.c.b16 %v3172, %v3171
        %v3370 = vpack.c.b16 %v3174, %v3173
        %v3371 = vpack.c.b16 %v3176, %v3175
        %v3372 = vpack.c.b16 %v3178, %v3177
        %v3373 = vpack.c.b16 %v3180, %v3179
        %v3374 = vpack.c.b16 %v3182, %v3181
        %v3375 = vpack.c.b16 %v3184, %v3183
        %v3376 = vpack.c.b16 %v3186, %v3185
        %v3377 = vpack.c.b16 %v3188, %v3187
        %v3378 = vpack.c.b16 %v3190, %v3189
        %v3379 = vpack.c.b16 %v3192, %v3191
        %v3380 = vpack.c.b16 %v3194, %v3193
        %v3381 = vpack.c.b16 %v3196, %v3195
        %v3382 = vpack.c.b16 %v3198, %v3197
        %v3383 = vpack.c.b16 %v3200, %v3199
        %v3384 = vpack.c.b16 %v3202, %v3201
        %v3385 = vpack.c.b16 %v3204, %v3203
        %v3386 = vpack.c.b16 %v3206, %v3205
        %v3387 = vpack.c.b16 %v3208, %v3207
        %v3388 = vpack.c.b16 %v3210, %v3209
        %v3389 = vpack.c.b16 %v3212, %v3211
        %v3390 = vpack.c.b16 %v3214, %v3213
        %v3391 = vpack.c.b16 %v3216, %v3215
        %v3392 = vpack.c.b16 %v3218, %v3217
        %v3393 = vpack.c.b16 %v3220, %v3219
        %v3394 = vpack.c.b16 %v3222, %v3221
        %v3395 = vpack.c.b16 %v3224, %v3223
        %v3396 = vpack.c.b16 %v3226, %v3225
        %v3397 = vpack.c.b16 %v3228, %v3227
        %v3398 = vpack.c.b16 %v3230, %v3229
        %v3399 = vpack.c.b16 %v3232, %v3231
        %v3400 = vpack.c.b16 %v3234, %v3233
        %v3401 = vpack.c.b16 %v3236, %v3235
        %v3402 = vpack.c.b16 %v3238, %v3237
        %v3403 = vpack.c.b16 %v3240, %v3239
        %v3404 = vpack.c.b16 %v3242, %v3241
        %v3405 = vpack.c.b16 %v3244, %v3243
        %v3406 = vpack.c.b16 %v3246, %v3245
        %v3407 = vpack.c.b16 %v3248, %v3247
        %v3408 = vpack.c.b16 %v3250, %v3249
        %v3409 = vpack.c.b16 %v3252, %v3251
        %v3410 = vpack.c.b16 %v3254, %v3253
        %v3411 = vpack.c.b16 %v3256, %v3255
        %v3412 = vpack.c.b16 %v3258, %v3257
        %v3413 = vpack.c.b16 %v3260, %v3259
        %v3414 = vpack.c.b16 %v3262, %v3261
        %v3415 = vpack.c.b16 %v3264, %v3263
        %v3416 = vpack.c.b16 %v3266, %v3265
        %v3417 = vpack.c.b16 %v3268, %v3267
        %v3418 = vpack.c.b16 %v3270, %v3269
        %v3419 = vpack.c.b16 %v3272, %v3271
        %v3420 = vpack.c.b16 %v3274, %v3273
        %v3421 = vpack.c.b16 %v3276, %v3275
        %v3422 = vpack.c.b16 %v3278, %v3277
        %v3423 = vpack.c.b16 %v3280, %v3279
        %v3424 = vpack.c.b16 %v3282, %v3281
        %v3425 = vpack.c.b16 %v3284, %v3283
        %v3426 = vpack.c.b16 %v3286, %v3285
        %v3427 = vpack.c.b16 %v3288, %v3287
        %v3428 = vpack.c.b16 %v3290, %v3289
        %v3429 = vpack.c.b16 %v3292, %v3291
        %v3430 = vpack.c.b16 %v3294, %v3293
        %v3431 = vpack.c.b16 %v3296, %v3295
        %v3432 = vpack.c.b16 %v3298, %v3297
        %v3433 = vpack.c.b16 %v3300, %v3299
        %v3434 = vpack.c.b16 %v3302, %v3301
        %v3435 = vpack.c.b16 %v3304, %v3303
        %v3436 = vpack.c.b16 %v3306, %v3305
        %v3437 = vpack.c.b16 %v3308, %v3307
        %v3438 = vpack.c.b16 %v3310, %v3309
        %3567 = vmatprep.subr.bf16.mxu0 0
        %3568 = vmatpush1.bf16.msra.mxu0 %v3311
        %3569 = vmatprep.subr.bf16.mxu0 0
        %3570 = vmatpush1.bf16.msra.mxu0 %v3312
        %3571 = vmatprep.subr.bf16.mxu0 0
        %3572 = vmatpush1.bf16.msra.mxu0 %v3313
        %3573 = vmatprep.subr.bf16.mxu0 0
        %3574 = vmatpush1.bf16.msra.mxu0 %v3314
        %3575 = vmatprep.subr.bf16.mxu0 0
        %3576 = vmatpush1.bf16.msra.mxu0 %v3315
        %3577 = vmatprep.subr.bf16.mxu0 0
        %3578 = vmatpush1.bf16.msra.mxu0 %v3316
        %3579 = vmatprep.subr.bf16.mxu0 0
        %3580 = vmatpush1.bf16.msra.mxu0 %v3317
        %3581 = vmatprep.subr.bf16.mxu0 0
        %3582 = vmatpush1.bf16.msra.mxu0 %v3318
        %3583 = vmatprep.subr.bf16.mxu0 0
        %3584 = vmatpush1.bf16.msra.mxu0 %v3319
        %3585 = vmatprep.subr.bf16.mxu0 0
        %3586 = vmatpush1.bf16.msra.mxu0 %v3320
        %3587 = vmatprep.subr.bf16.mxu0 0
        %3588 = vmatpush1.bf16.msra.mxu0 %v3321
        %3589 = vmatprep.subr.bf16.mxu0 0
        %3590 = vmatpush1.bf16.msra.mxu0 %v3322
        %3591 = vmatprep.subr.bf16.mxu0 0
        %3592 = vmatpush1.bf16.msra.mxu0 %v3323
        %3593 = vmatprep.subr.bf16.mxu0 0
        %3594 = vmatpush1.bf16.msra.mxu0 %v3324
        %3595 = vmatprep.subr.bf16.mxu0 0
        %3596 = vmatpush1.bf16.msra.mxu0 %v3325
        %3597 = vmatprep.subr.bf16.mxu0 0
        %3598 = vmatpush1.bf16.msra.mxu0 %v3326
        %3599 = vmatprep.mubr.bf16.mxu0 %v2521
        %3600 = vmatmul.mubr.bf16.gmra.mrb[0].mxu0 %v2520
        %v3601 = vpop.f32.mrb[0].mxu0
        %v3602 = vadd.f32 %v2797, %v3601
        %v3603 = vpop.f32.mrb[0].mxu0
        %v3604 = vpop.f32.mrb[0].mxu0
        %v3605 = vpop.f32.mrb[0].mxu0
        %3606 = vdwg.mxu0
        %3607 = vmatprep.subr.bf16.mxu0 0
        %3608 = vmatpush1.bf16.msra.mxu0 %v3327
        %3609 = vmatprep.subr.bf16.mxu0 0
        %3610 = vmatpush1.bf16.msra.mxu0 %v3328
        %3611 = vmatprep.subr.bf16.mxu0 0
        %3612 = vmatpush1.bf16.msra.mxu0 %v3329
        %3613 = vmatprep.subr.bf16.mxu0 0
        %3614 = vmatpush1.bf16.msra.mxu0 %v3330
        %3615 = vmatprep.subr.bf16.mxu0 0
        %3616 = vmatpush1.bf16.msra.mxu0 %v3331
        %3617 = vmatprep.subr.bf16.mxu0 0
        %3618 = vmatpush1.bf16.msra.mxu0 %v3332
        %3619 = vmatprep.subr.bf16.mxu0 0
        %3620 = vmatpush1.bf16.msra.mxu0 %v3333
        %3621 = vmatprep.subr.bf16.mxu0 0
        %3622 = vmatpush1.bf16.msra.mxu0 %v3334
        %3623 = vmatprep.subr.bf16.mxu0 0
        %3624 = vmatpush1.bf16.msra.mxu0 %v3335
        %3625 = vmatprep.subr.bf16.mxu0 0
        %3626 = vmatpush1.bf16.msra.mxu0 %v3336
        %3627 = vmatprep.subr.bf16.mxu0 0
        %3628 = vmatpush1.bf16.msra.mxu0 %v3337
        %3629 = vmatprep.subr.bf16.mxu0 0
        %3630 = vmatpush1.bf16.msra.mxu0 %v3338
        %3631 = vmatprep.subr.bf16.mxu0 0
        %3632 = vmatpush1.bf16.msra.mxu0 %v3339
        %3633 = vmatprep.subr.bf16.mxu0 0
        %3634 = vmatpush1.bf16.msra.mxu0 %v3340
        %3635 = vmatprep.subr.bf16.mxu0 0
        %3636 = vmatpush1.bf16.msra.mxu0 %v3341
        %3637 = vmatprep.subr.bf16.mxu0 0
        %3638 = vmatpush1.bf16.msra.mxu0 %v3342
        %3639 = vmatprep.mubr.bf16.mxu0 %v2523
        %3640 = vmatmul.mubr.bf16.gmra.mrb[0].mxu0 %v2522
        %v3641 = vpop.f32.mrb[0].mxu0
        %v3642 = vadd.f32 %v3602, %v3641
        %v3643 = vpop.f32.mrb[0].mxu0
        %v3644 = vpop.f32.mrb[0].mxu0
        %v3645 = vpop.f32.mrb[0].mxu0
        %3646 = vdwg.mxu0
        %3647 = vmatprep.subr.bf16.mxu0 0
        %3648 = vmatpush1.bf16.msra.mxu0 %v3343
        %3649 = vmatprep.subr.bf16.mxu0 0
        %3650 = vmatpush1.bf16.msra.mxu0 %v3344
        %3651 = vmatprep.subr.bf16.mxu0 0
        %3652 = vmatpush1.bf16.msra.mxu0 %v3345
        %3653 = vmatprep.subr.bf16.mxu0 0
        %3654 = vmatpush1.bf16.msra.mxu0 %v3346
        %3655 = vmatprep.subr.bf16.mxu0 0
        %3656 = vmatpush1.bf16.msra.mxu0 %v3347
        %3657 = vmatprep.subr.bf16.mxu0 0
        %3658 = vmatpush1.bf16.msra.mxu0 %v3348
        %3659 = vmatprep.subr.bf16.mxu0 0
        %3660 = vmatpush1.bf16.msra.mxu0 %v3349
        %3661 = vmatprep.subr.bf16.mxu0 0
        %3662 = vmatpush1.bf16.msra.mxu0 %v3350
        %3663 = vmatprep.subr.bf16.mxu0 0
        %3664 = vmatpush1.bf16.msra.mxu0 %v3351
        %3665 = vmatprep.subr.bf16.mxu0 0
        %3666 = vmatpush1.bf16.msra.mxu0 %v3352
        %3667 = vmatprep.subr.bf16.mxu0 0
        %3668 = vmatpush1.bf16.msra.mxu0 %v3353
        %3669 = vmatprep.subr.bf16.mxu0 0
        %3670 = vmatpush1.bf16.msra.mxu0 %v3354
        %3671 = vmatprep.subr.bf16.mxu0 0
        %3672 = vmatpush1.bf16.msra.mxu0 %v3355
        %3673 = vmatprep.subr.bf16.mxu0 0
        %3674 = vmatpush1.bf16.msra.mxu0 %v3356
        %3675 = vmatprep.subr.bf16.mxu0 0
        %3676 = vmatpush1.bf16.msra.mxu0 %v3357
        %3677 = vmatprep.subr.bf16.mxu0 0
        %3678 = vmatpush1.bf16.msra.mxu0 %v3358
        %3679 = vmatprep.mubr.bf16.mxu0 %v2525
        %3680 = vmatmul.mubr.bf16.gmra.mrb[0].mxu0 %v2524
        %v3681 = vpop.f32.mrb[0].mxu0
        %v3682 = vadd.f32 %v3642, %v3681
        %v3683 = vpop.f32.mrb[0].mxu0
        %v3684 = vpop.f32.mrb[0].mxu0
        %v3685 = vpop.f32.mrb[0].mxu0
        %3686 = vdwg.mxu0
        %3687 = vmatprep.subr.bf16.mxu0 0
        %3688 = vmatpush1.bf16.msra.mxu0 %v3359
        %3689 = vmatprep.subr.bf16.mxu0 0
        %3690 = vmatpush1.bf16.msra.mxu0 %v3360
        %3691 = vmatprep.subr.bf16.mxu0 0
        %3692 = vmatpush1.bf16.msra.mxu0 %v3361
        %3693 = vmatprep.subr.bf16.mxu0 0
        %3694 = vmatpush1.bf16.msra.mxu0 %v3362
        %3695 = vmatprep.subr.bf16.mxu0 0
        %3696 = vmatpush1.bf16.msra.mxu0 %v3363
        %3697 = vmatprep.subr.bf16.mxu0 0
        %3698 = vmatpush1.bf16.msra.mxu0 %v3364
        %3699 = vmatprep.subr.bf16.mxu0 0
        %3700 = vmatpush1.bf16.msra.mxu0 %v3365
        %3701 = vmatprep.subr.bf16.mxu0 0
        %3702 = vmatpush1.bf16.msra.mxu0 %v3366
        %3703 = vmatprep.subr.bf16.mxu0 0
        %3704 = vmatpush1.bf16.msra.mxu0 %v3367
        %3705 = vmatprep.subr.bf16.mxu0 0
        %3706 = vmatpush1.bf16.msra.mxu0 %v3368
        %3707 = vmatprep.subr.bf16.mxu0 0
        %3708 = vmatpush1.bf16.msra.mxu0 %v3369
        %3709 = vmatprep.subr.bf16.mxu0 0
        %3710 = vmatpush1.bf16.msra.mxu0 %v3370
        %3711 = vmatprep.subr.bf16.mxu0 0
        %3712 = vmatpush1.bf16.msra.mxu0 %v3371
        %3713 = vmatprep.subr.bf16.mxu0 0
        %3714 = vmatpush1.bf16.msra.mxu0 %v3372
        %3715 = vmatprep.subr.bf16.mxu0 0
        %3716 = vmatpush1.bf16.msra.mxu0 %v3373
        %3717 = vmatprep.subr.bf16.mxu0 0
        %3718 = vmatpush1.bf16.msra.mxu0 %v3374
        %3719 = vmatprep.mubr.bf16.mxu0 %v2527
        %3720 = vmatmul.mubr.bf16.gmra.mrb[0].mxu0 %v2526
        %v3721 = vpop.f32.mrb[0].mxu0
        %v3722 = vadd.f32 %v3682, %v3721
        %v3723 = vpop.f32.mrb[0].mxu0
        %v3724 = vpop.f32.mrb[0].mxu0
        %v3725 = vpop.f32.mrb[0].mxu0
        %3726 = vdwg.mxu0
        %3727 = vmatprep.subr.bf16.mxu0 0
        %3728 = vmatpush1.bf16.msra.mxu0 %v3375
        %3729 = vmatprep.subr.bf16.mxu0 0
        %3730 = vmatpush1.bf16.msra.mxu0 %v3376
        %3731 = vmatprep.subr.bf16.mxu0 0
        %3732 = vmatpush1.bf16.msra.mxu0 %v3377
        %3733 = vmatprep.subr.bf16.mxu0 0
        %3734 = vmatpush1.bf16.msra.mxu0 %v3378
        %3735 = vmatprep.subr.bf16.mxu0 0
        %3736 = vmatpush1.bf16.msra.mxu0 %v3379
        %3737 = vmatprep.subr.bf16.mxu0 0
        %3738 = vmatpush1.bf16.msra.mxu0 %v3380
        %3739 = vmatprep.subr.bf16.mxu0 0
        %3740 = vmatpush1.bf16.msra.mxu0 %v3381
        %3741 = vmatprep.subr.bf16.mxu0 0
        %3742 = vmatpush1.bf16.msra.mxu0 %v3382
        %3743 = vmatprep.subr.bf16.mxu0 0
        %3744 = vmatpush1.bf16.msra.mxu0 %v3383
        %3745 = vmatprep.subr.bf16.mxu0 0
        %3746 = vmatpush1.bf16.msra.mxu0 %v3384
        %3747 = vmatprep.subr.bf16.mxu0 0
        %3748 = vmatpush1.bf16.msra.mxu0 %v3385
        %3749 = vmatprep.subr.bf16.mxu0 0
        %3750 = vmatpush1.bf16.msra.mxu0 %v3386
        %3751 = vmatprep.subr.bf16.mxu0 0
        %3752 = vmatpush1.bf16.msra.mxu0 %v3387
        %3753 = vmatprep.subr.bf16.mxu0 0
        %3754 = vmatpush1.bf16.msra.mxu0 %v3388
        %3755 = vmatprep.subr.bf16.mxu0 0
        %3756 = vmatpush1.bf16.msra.mxu0 %v3389
        %3757 = vmatprep.subr.bf16.mxu0 0
        %3758 = vmatpush1.bf16.msra.mxu0 %v3390
        %3759 = vmatprep.mubr.bf16.mxu0 %v2529
        %3760 = vmatmul.mubr.bf16.gmra.mrb[0].mxu0 %v2528
        %v3761 = vpop.f32.mrb[0].mxu0
        %v3762 = vadd.f32 %v3722, %v3761
        %v3763 = vpop.f32.mrb[0].mxu0
        %v3764 = vpop.f32.mrb[0].mxu0
        %v3765 = vpop.f32.mrb[0].mxu0
        %3766 = vdwg.mxu0
        %3767 = vmatprep.subr.bf16.mxu0 0
        %3768 = vmatpush1.bf16.msra.mxu0 %v3391
        %3769 = vmatprep.subr.bf16.mxu0 0
        %3770 = vmatpush1.bf16.msra.mxu0 %v3392
        %3771 = vmatprep.subr.bf16.mxu0 0
        %3772 = vmatpush1.bf16.msra.mxu0 %v3393
        %3773 = vmatprep.subr.bf16.mxu0 0
        %3774 = vmatpush1.bf16.msra.mxu0 %v3394
        %3775 = vmatprep.subr.bf16.mxu0 0
        %3776 = vmatpush1.bf16.msra.mxu0 %v3395
        %3777 = vmatprep.subr.bf16.mxu0 0
        %3778 = vmatpush1.bf16.msra.mxu0 %v3396
        %3779 = vmatprep.subr.bf16.mxu0 0
        %3780 = vmatpush1.bf16.msra.mxu0 %v3397
        %3781 = vmatprep.subr.bf16.mxu0 0
        %3782 = vmatpush1.bf16.msra.mxu0 %v3398
        %3783 = vmatprep.subr.bf16.mxu0 0
        %3784 = vmatpush1.bf16.msra.mxu0 %v3399
        %3785 = vmatprep.subr.bf16.mxu0 0
        %3786 = vmatpush1.bf16.msra.mxu0 %v3400
        %3787 = vmatprep.subr.bf16.mxu0 0
        %3788 = vmatpush1.bf16.msra.mxu0 %v3401
        %3789 = vmatprep.subr.bf16.mxu0 0
        %3790 = vmatpush1.bf16.msra.mxu0 %v3402
        %3791 = vmatprep.subr.bf16.mxu0 0
        %3792 = vmatpush1.bf16.msra.mxu0 %v3403
        %3793 = vmatprep.subr.bf16.mxu0 0
        %3794 = vmatpush1.bf16.msra.mxu0 %v3404
        %3795 = vmatprep.subr.bf16.mxu0 0
        %3796 = vmatpush1.bf16.msra.mxu0 %v3405
        %3797 = vmatprep.subr.bf16.mxu0 0
        %3798 = vmatpush1.bf16.msra.mxu0 %v3406
        %3799 = vmatprep.mubr.bf16.mxu0 %v2531
        %3800 = vmatmul.mubr.bf16.gmra.mrb[0].mxu0 %v2530
        %v3801 = vpop.f32.mrb[0].mxu0
        %v3802 = vadd.f32 %v3762, %v3801
        %v3803 = vpop.f32.mrb[0].mxu0
        %v3804 = vpop.f32.mrb[0].mxu0
        %v3805 = vpop.f32.mrb[0].mxu0
        %3806 = vdwg.mxu0
        %3807 = vmatprep.subr.bf16.mxu0 0
        %3808 = vmatpush1.bf16.msra.mxu0 %v3407
        %3809 = vmatprep.subr.bf16.mxu0 0
        %3810 = vmatpush1.bf16.msra.mxu0 %v3408
        %3811 = vmatprep.subr.bf16.mxu0 0
        %3812 = vmatpush1.bf16.msra.mxu0 %v3409
        %3813 = vmatprep.subr.bf16.mxu0 0
        %3814 = vmatpush1.bf16.msra.mxu0 %v3410
        %3815 = vmatprep.subr.bf16.mxu0 0
        %3816 = vmatpush1.bf16.msra.mxu0 %v3411
        %3817 = vmatprep.subr.bf16.mxu0 0
        %3818 = vmatpush1.bf16.msra.mxu0 %v3412
        %3819 = vmatprep.subr.bf16.mxu0 0
        %3820 = vmatpush1.bf16.msra.mxu0 %v3413
        %3821 = vmatprep.subr.bf16.mxu0 0
        %3822 = vmatpush1.bf16.msra.mxu0 %v3414
        %3823 = vmatprep.subr.bf16.mxu0 0
        %3824 = vmatpush1.bf16.msra.mxu0 %v3415
        %3825 = vmatprep.subr.bf16.mxu0 0
        %3826 = vmatpush1.bf16.msra.mxu0 %v3416
        %3827 = vmatprep.subr.bf16.mxu0 0
        %3828 = vmatpush1.bf16.msra.mxu0 %v3417
        %3829 = vmatprep.subr.bf16.mxu0 0
        %3830 = vmatpush1.bf16.msra.mxu0 %v3418
        %3831 = vmatprep.subr.bf16.mxu0 0
        %3832 = vmatpush1.bf16.msra.mxu0 %v3419
        %3833 = vmatprep.subr.bf16.mxu0 0
        %3834 = vmatpush1.bf16.msra.mxu0 %v3420
        %3835 = vmatprep.subr.bf16.mxu0 0
        %3836 = vmatpush1.bf16.msra.mxu0 %v3421
        %3837 = vmatprep.subr.bf16.mxu0 0
        %3838 = vmatpush1.bf16.msra.mxu0 %v3422
        %3839 = vmatprep.mubr.bf16.mxu0 %v2533
        %3840 = vmatmul.mubr.bf16.gmra.mrb[0].mxu0 %v2532
        %v3841 = vpop.f32.mrb[0].mxu0
        %v3842 = vadd.f32 %v3802, %v3841
        %v3843 = vpop.f32.mrb[0].mxu0
        %v3844 = vpop.f32.mrb[0].mxu0
        %v3845 = vpop.f32.mrb[0].mxu0
        %3846 = vdwg.mxu0
        %3847 = vmatprep.subr.bf16.mxu0 0
        %3848 = vmatpush1.bf16.msra.mxu0 %v3423
        %3849 = vmatprep.subr.bf16.mxu0 0
        %3850 = vmatpush1.bf16.msra.mxu0 %v3424
        %3851 = vmatprep.subr.bf16.mxu0 0
        %3852 = vmatpush1.bf16.msra.mxu0 %v3425
        %3853 = vmatprep.subr.bf16.mxu0 0
        %3854 = vmatpush1.bf16.msra.mxu0 %v3426
        %3855 = vmatprep.subr.bf16.mxu0 0
        %3856 = vmatpush1.bf16.msra.mxu0 %v3427
        %3857 = vmatprep.subr.bf16.mxu0 0
        %3858 = vmatpush1.bf16.msra.mxu0 %v3428
        %3859 = vmatprep.subr.bf16.mxu0 0
        %3860 = vmatpush1.bf16.msra.mxu0 %v3429
        %3861 = vmatprep.subr.bf16.mxu0 0
        %3862 = vmatpush1.bf16.msra.mxu0 %v3430
        %3863 = vmatprep.subr.bf16.mxu0 0
        %3864 = vmatpush1.bf16.msra.mxu0 %v3431
        %3865 = vmatprep.subr.bf16.mxu0 0
        %3866 = vmatpush1.bf16.msra.mxu0 %v3432
        %3867 = vmatprep.subr.bf16.mxu0 0
        %3868 = vmatpush1.bf16.msra.mxu0 %v3433
        %3869 = vmatprep.subr.bf16.mxu0 0
        %3870 = vmatpush1.bf16.msra.mxu0 %v3434
        %3871 = vmatprep.subr.bf16.mxu0 0
        %3872 = vmatpush1.bf16.msra.mxu0 %v3435
        %3873 = vmatprep.subr.bf16.mxu0 0
        %3874 = vmatpush1.bf16.msra.mxu0 %v3436
        %3875 = vmatprep.subr.bf16.mxu0 0
        %3876 = vmatpush1.bf16.msra.mxu0 %v3437
        %3877 = vmatprep.subr.bf16.mxu0 0
        %3878 = vmatpush1.bf16.msra.mxu0 %v3438
        %3879 = vmatprep.mubr.bf16.mxu0 %v2535
        %3880 = vmatmul.mubr.bf16.gmra.mrb[0].mxu0 %v2534
        %v3881 = vpop.f32.mrb[0].mxu0
        %v3882 = vadd.f32 %v3842, %v3881
        %v3883 = vpop.f32.mrb[0].mxu0
        %v3884 = vpop.f32.mrb[0].mxu0
        %v3885 = vpop.f32.mrb[0].mxu0
        %3886 = vdwg.mxu0
        %v3887 = vadd.f32 %v1895, %v3882
        %v3888 = vld [vmem:[%s854] sm:$0x1]
        %v3889 = vld [vmem:[%s857] sm:$0x1]
        %v3890 = vsel %vm1073, %v3887, 0.0
        %3891 = vadd.xlane.f32.xlu0 %v3890
        %v3892 = vpop.xlane.xlu0 %3891
        %v3893 = vmul.f32 %v3892, %v1871
        %v3894 = vsub.f32 %v3887, %v3893
        %v3895 = vmul.f32 %v3894, %v3894
        %v3896 = vsel %vm1073, %v3895, 0.0
        %3897 = vadd.xlane.f32.xlu0 %v3896
        %v3898 = vpop.xlane.xlu0 %3897
        %v3899 = vmul.f32 %v3898, %v1871
        %v3900 = vadd.f32 %v3899, 1e-05
        %v3901 = vrsqrt.pop %v3900
        %v3902 = vmul.f32 %v3894, %v3901
        %v3904 = vlaneseq
        %v3905 = vshrl.u32 %v3904, 7
        %v3906 = vsub.s32 0, %v3905
        %v3907 = vrot.slane %v3888, %v3906
        %v3909 = vmul.f32 %v3902, %v3907
        %v3911 = vlaneseq
        %v3912 = vshrl.u32 %v3911, 7
        %v3913 = vsub.s32 0, %v3912
        %v3914 = vrot.slane %v3889, %v3913
        %v3916 = vadd.f32 %v3909, %v3914
        %3917 = vst.msk [vmem:[#allocation2] sm:$0xff] %vm1073, %v3916
        %p3918 = scmp.eq.s32.totalorder %s40, 1
        // Predicated region
        $region109: #{bb_transformer_forward.1} parent=103 // pred_check
          %p3919 = pneg %p3918
        $region110: #{bb_transformer_forward.1} parent=103 // pred_check_branch
          %3921 = sbr.rel (%p3919) target = $region112
        $region111: #{bb_transformer_forward.1} parent=103 // pred_region
          %v3922 = vld [vmem:[%s17] sm:$0x1]
          %v3923 = vld [vmem:[%s18] sm:$0x1]
          %vm3924 = vcmask 253952
          %v3925 = vsel %vm3924, %v3916, 0.0
          %3926 = vadd.xlane.f32.xlu0 %v3925
          %v3927 = vpop.xlane.xlu0 %3926
          %v3928 = vmul.f32 %v3927, %v1871
          %v3929 = vsub.f32 %v3916, %v3928
          %v3930 = vmul.f32 %v3929, %v3929
          %v3931 = vsel %vm3924, %v3930, 0.0
          %3932 = vadd.xlane.f32.xlu0 %v3931
          %v3933 = vpop.xlane.xlu0 %3932
          %v3934 = vmul.f32 %v3933, %v1871
          %v3935 = vadd.f32 %v3934, 1e-06
          %v3936 = vrsqrt.pop %v3935
          %v3937 = vmul.f32 %v3929, %v3936
          %v3938 = vmul.f32 %v3937, %v3922
          %v3939 = vadd.f32 %v3938, %v3923
          %v3940 = vpack.c.bf16 %v3939, %v3939
          %v3941 = vld [vmem:[%s19] sm:$0xf]
          %v3942 = vld [vmem:[%s19 + $0x4] sm:$0xf]
          %v3943 = vld [vmem:[%s19 + $0x8] sm:$0xf]
          %v3944 = vld [vmem:[%s19 + $0xc] sm:$0xf]
          %v3945 = vld [vmem:[%s20] sm:$0x1]
          %v3950 = vunpack.c.l.b16 %v3941
          %v3951 = vunpack.c.l.b16 %v3942
          %v3952 = vunpack.c.l.b16 %v3943
          %v3953 = vunpack.c.l.b16 %v3944
          %v3954 = vpack.c.b16 %v3951, %v3950
          %v3955 = vpack.c.b16 %v3953, %v3952
          %v3959 = vsel %vm1073, %v3940, 0
          %3961 = vmatprep.subr.bf16.mxu0 0
          %3962 = vmatpush1.bf16.msra.mxu0 %v3954
          %3963 = vmatprep.subr.bf16.mxu0 0
          %3964 = vmatpush1.bf16.msra.mxu0 %v3955
          %3965 = vmatprep.subr.bf16.mxu0 0
          %3966 = vmatpush1.bf16.msra.mxu0 0
          %3967 = vmatprep.subr.bf16.mxu0 0
          %3968 = vmatpush1.bf16.msra.mxu0 0
          %3969 = vmatprep.subr.bf16.mxu0 0
          %3970 = vmatpush1.bf16.msra.mxu0 0
          %3971 = vmatprep.subr.bf16.mxu0 0
          %3972 = vmatpush1.bf16.msra.mxu0 0
          %3973 = vmatprep.subr.bf16.mxu0 0
          %3974 = vmatpush1.bf16.msra.mxu0 0
          %3975 = vmatprep.subr.bf16.mxu0 0
          %3976 = vmatpush1.bf16.msra.mxu0 0
          %3977 = vmatprep.subr.bf16.mxu0 0
          %3978 = vmatpush1.bf16.msra.mxu0 0
          %3979 = vmatprep.subr.bf16.mxu0 0
          %3980 = vmatpush1.bf16.msra.mxu0 0
          %3981 = vmatprep.subr.bf16.mxu0 0
          %3982 = vmatpush1.bf16.msra.mxu0 0
          %3983 = vmatprep.subr.bf16.mxu0 0
          %3984 = vmatpush1.bf16.msra.mxu0 0
          %3985 = vmatprep.subr.bf16.mxu0 0
          %3986 = vmatpush1.bf16.msra.mxu0 0
          %3987 = vmatprep.subr.bf16.mxu0 0
          %3988 = vmatpush1.bf16.msra.mxu0 0
          %3989 = vmatprep.subr.bf16.mxu0 0
          %3990 = vmatpush1.bf16.msra.mxu0 0
          %3991 = vmatprep.subr.bf16.mxu0 0
          %3992 = vmatpush1.bf16.msra.mxu0 0
          %3993 = vmatprep.mubr.bf16.mxu0 0
          %3994 = vmatmul.mubr.bf16.gmra.mrb[0].mxu0 %v3959
          %v3995 = vpop.f32.mrb[0].mxu0
          %v3996 = vadd.f32 %v3945, %v3995
          %v3997 = vpop.f32.mrb[0].mxu0
          %v3998 = vpop.f32.mrb[0].mxu0
          %v3999 = vpop.f32.mrb[0].mxu0
          %4000 = vdwg.mxu0
          %4001 = vst [vmem:[%s821] sm:$0x1] %v3996
        $region112: #{bb_transformer_forward.1} parent=103 // pred_fallthru
          _
        %s4002 = sand.u32 %s566, 1
        %s4003 = scalar_lea.sflag [#allocation4], %s4002
        %s4004 = sand.u32 %s566, 1
        %s4005 = scalar_lea.vmem [#allocation3], %s4004
        // Predicated region
        $region113: #{bb_transformer_forward.1} parent=103 // pred_check
          %p4006 = pneg %p576
        $region114: #{bb_transformer_forward.1} parent=103 // pred_check_branch
          %4008 = sbr.rel (%p4006) target = $region116
        $region115: #{bb_transformer_forward.1} parent=103 // pred_region
          %s4010 = ssub.s32 16, 16
          %4011 = vsyncadd %s4003, %s4010
          %s4012 = smul.addr %s39, 16
          %s4013 = scalar_lea.hbm %s21, %s4012
          %s4015 = sshll.u32 %s4005, 4
          %s4016 = int_to_ptr.vmem [resolvable:$true] %s4015
          %4018 = dma.vmem_to_hbm [thread:$0]  %s4016, 16, %s4013, %s4003
        $region116: #{bb_transformer_forward.1} parent=103 // pred_fallthru
          _
      $region104: #{bb_transformer_forward.1} parent=5 // pred_fallthru
        _
      %p4019 = scmp.le.s32.totalorder 2, %s30
      // Predicated region
      $region117: #{bb_transformer_forward.1} parent=5 // pred_check
        %p4020 = pneg %p4019
      $region118: #{bb_transformer_forward.1} parent=5 // pred_check_branch
        %4022 = sbr.rel (%p4020) target = $region120
      $region119: #{bb_transformer_forward.1} parent=5 // pred_region
        %s4023 = ssub.s32 %s30, 2
        // Predicated region
        $region121: #{bb_transformer_forward.1} parent=119 // pred_check
          %p4024 = pneg %p582
        $region122: #{bb_transformer_forward.1} parent=119 // pred_check_branch
          %4026 = sbr.rel (%p4024) target = $region124
        $region123: #{bb_transformer_forward.1} parent=119 // pred_region
          %s4027 = sand.u32 %s567, 1
          %s4028 = scalar_lea.sflag [#allocation4], %s4027
          %s4029 = sand.u32 %s567, 1
          %s4030 = scalar_lea.vmem [#allocation3], %s4029
          %4031 = dma.done %s4028, 16
        $region124: #{bb_transformer_forward.1} parent=119 // pred_fallthru
          _
      $region120: #{bb_transformer_forward.1} parent=5 // pred_fallthru
        _
    $region6: #{bb_transformer_forward.1} parent=1 // loop_footer
      %s34 = sadd.s32 1, %s30
    $region7: #{bb_transformer_forward.1} parent=1 // loop_footer_branch
      %29 = sbr.rel target = $region3
    $region8: #{bb_transformer_forward.1} parent=1 // loop_exit
      _
    %4032 = vsyncpa [#allocation4], 1
    %s4033 = scalar_lea.sflag [#allocation4], 1
    %4034 = vsyncpa %s4033, 1

</llo_original>
